<compile_context>
chip_gen: v6e
topology: v6e:2x2x1
jax: 0.10.0
libtpu: 0.0.40
codegen_flags: <defaults>
</compile_context>

<pallas_src>
import functools
import math

import jax
import jax.numpy as jnp
import numpy as np
from jax.experimental import pallas as pl
from jax.experimental.pallas import tpu as pltpu


def _exact_gelu(x):
    # PyTorch nn.GELU() default = exact erf formulation.
    return 0.5 * x * (1.0 + jax.lax.erf(x * (1.0 / math.sqrt(2.0))))


def _nilut_kernel(res, hidden_layers, in_f, out_f, x_ref, w_ref, b_ref, o_ref):
    """x_ref: (in_f, tile_n); w_ref: (L, H, H); b_ref: (L, H, 1); o_ref: (out_f, tile_n)."""
    x = x_ref[...].astype(jnp.float32)                                   # (in_f, tile_n)

    # Layer 0: Linear + ReLU.  Slab row 0 holds W0 in its first in_f columns.
    w0 = w_ref[0][:, :in_f]                                              # (H, in_f)
    h = jnp.dot(w0, x, preferred_element_type=jnp.float32) + b_ref[0]    # (H, tile_n)
    h = jnp.maximum(h, 0.0)

    # Hidden layers: Linear + exact GELU (lane-dense (H, tile_n) activations).
    for l in range(1, hidden_layers + 1):
        h = jnp.dot(w_ref[l], h, preferred_element_type=jnp.float32) + b_ref[l]
        h = _exact_gelu(h)

    # Output layer: only the first out_f rows of the padded slab are real.
    lo = hidden_layers + 1
    w_out = w_ref[lo][:out_f, :]                                         # (out_f, H)
    y = jnp.dot(w_out, h, preferred_element_type=jnp.float32) + b_ref[lo][:out_f, :]

    if res:
        y = y + x                                                        # in_f == out_f
    else:
        y = jax.nn.sigmoid(y)

    o_ref[...] = y.astype(o_ref.dtype)


def _pack_params(params, in_f, hidden, out_f):
    """params use PyTorch nn.Linear layout: w (fan_out, fan_in), b (fan_out,).
    Returns zero-padded slabs w_slab (L, H, H) and b_slab (L, H, 1)."""
    H = hidden
    ws, bs = [], []
    w0, b0 = params[0]
    ws.append(jnp.zeros((H, H), jnp.float32).at[:, :in_f].set(w0.astype(jnp.float32)))
    bs.append(b0.astype(jnp.float32))
    for w, b in params[1:-1]:
        ws.append(w.astype(jnp.float32))
        bs.append(b.astype(jnp.float32))
    w_out, b_out = params[-1]
    ws.append(jnp.zeros((H, H), jnp.float32).at[:out_f, :].set(w_out.astype(jnp.float32)))
    bs.append(jnp.zeros((H,), jnp.float32).at[:out_f].set(b_out.astype(jnp.float32)))
    w_slab = jnp.stack(ws)                    # (L, H, H)
    b_slab = jnp.stack(bs)[:, :, None]        # (L, H, 1)
    return w_slab, b_slab


def nilut_forward(intensity, params, *, res=True, tile_n=2048):
    """intensity: (N, in_f). params: [(w, b), ...] in PyTorch layout.
    Returns (output, intensity) exactly like the PyTorch module's forward."""
    N, in_f = intensity.shape
    hidden_layers = len(params) - 2
    H = params[0][0].shape[0]
    out_f = params[-1][0].shape[0]
    L = hidden_layers + 2
    assert in_f <= H and out_f <= H, "hidden_features must dominate in/out features"
    if res:
        assert in_f == out_f, "residual branch requires in_features == out_features"

    # Lane tile over N; pad the last tile instead of asserting divisibility.
    tile = int(min(tile_n, max(128, int(pl.cdiv(N, 128)) * 128)))
    n_pad = int(pl.cdiv(N, tile)) * tile

    x_t = intensity.astype(jnp.float32).T                     # (in_f, N): N lane-dense
    if n_pad != N:
        x_t = jnp.pad(x_t, ((0, 0), (0, n_pad - N)))

    w_slab, b_slab = _pack_params(params, in_f, H, out_f)

    grid = (n_pad // tile,)
    kernel = functools.partial(_nilut_kernel, res, hidden_layers, in_f, out_f)

    flops = 2 * n_pad * (in_f * H + hidden_layers * H * H + H * out_f)
    transcendentals = n_pad * H * hidden_layers                # one erf per hidden activation
    bytes_accessed = (n_pad * (in_f + out_f) + w_slab.size + b_slab.size) * 4

    out_t = pl.pallas_call(
        kernel,
        out_shape=jax.ShapeDtypeStruct((out_f, n_pad), intensity.dtype),
        grid_spec=pltpu.PrefetchScalarGridSpec(
            num_scalar_prefetch=0,
            grid=grid,
            in_specs=[
                pl.BlockSpec((in_f, tile), lambda i: (0, i)),
                pl.BlockSpec((L, H, H), lambda i: (0, 0, 0)),  # grid-invariant weight slab
                pl.BlockSpec((L, H, 1), lambda i: (0, 0, 0)),  # grid-invariant bias slab
            ],
            out_specs=pl.BlockSpec((out_f, tile), lambda i: (0, i)),
        ),
        compiler_params=pltpu.CompilerParams(
            dimension_semantics=("parallel",),
            vmem_limit_bytes=32 * 1024 * 1024,
        ),
        cost_estimate=pl.CostEstimate(
            flops=flops,
            transcendentals=transcendentals,
            bytes_accessed=bytes_accessed,
        ),
    )(x_t, w_slab, b_slab)

    output = out_t[:, :N].T.astype(intensity.dtype)            # back to (N, out_f)
    return output, intensity


def init_nilut_params(key, in_features, hidden_features, hidden_layers, out_features):
    """Deterministic init matching nn.Linear defaults; weights in (fan_out, fan_in)."""
    dims = [(in_features, hidden_features)]
    dims += [(hidden_features, hidden_features)] * hidden_layers
    dims += [(hidden_features, out_features)]
    params = []
    for fan_in, fan_out in dims:
        key, kw, kb = jax.random.split(key, 3)
        bound = 1.0 / math.sqrt(fan_in)
        w = jax.random.uniform(kw, (fan_out, fan_in), jnp.float32, -bound, bound)
        b = jax.random.uniform(kb, (fan_out,), jnp.float32, -bound, bound)
        params.append((w, b))
    return params


def nilut_reference(intensity, params, *, res=True):
    h = intensity @ params[0][0].T + params[0][1]
    h = jnp.maximum(h, 0.0)
    for w, b in params[1:-1]:
        h = _exact_gelu(h @ w.T + b)
    y = h @ params[-1][0].T + params[-1][1]
    if res:
        y = y + intensity
    else:
        y = jax.nn.sigmoid(y)
    return y, intensity


if __name__ == "__main__":
    configs = dict(
        in_features=3,
        hidden_features=32,
        hidden_layers=2,
        out_features=3,
        res=True,
    )
    N = 4096  # RGB points -> 2 grid steps at tile_n=2048 (keeps both v7x TCs busy)

    key = jax.random.PRNGKey(0)
    key, kx = jax.random.split(key)
    intensity = jax.random.uniform(kx, (N, configs["in_features"]), jnp.float32)

    params = init_nilut_params(
        key,
        configs["in_features"],
        configs["hidden_features"],
        configs["hidden_layers"],
        configs["out_features"],
    )

    out, inten = nilut_forward(intensity, params, res=configs["res"], tile_n=2048)
    out = jax.block_until_ready(out)
    inten = jax.block_until_ready(inten)

    ref_out, ref_inten = nilut_reference(intensity, params, res=configs["res"])
    np.testing.assert_allclose(np.asarray(out), np.asarray(ref_out), rtol=1e-5, atol=1e-5)
    np.testing.assert_allclose(np.asarray(inten), np.asarray(ref_inten))

    print("KERNEL_OK")
</pallas_src>

<mosaic_0001>
module attributes {stable_mosaic.version = 11 : i64} {
  func.func @_nilut_kernel(%arg0: i32, %arg1: memref<3x2048xf32, #tpu.memory_space<vmem>>, %arg2: memref<4x32x32xf32, #tpu.memory_space<vmem>>, %arg3: memref<4x32x1xf32, #tpu.memory_space<vmem>>, %arg4: memref<3x2048xf32, #tpu.memory_space<vmem>>) attributes {dimension_semantics = [#tpu.dimension_semantics<parallel>], iteration_bounds = array<i64: 2>, scalar_prefetch = 0 : i64, scratch_operands = 0 : i64, tpu.core_type = #tpu.core_type<tc>, window_params = [{transform_indices = @transform_0, window_bounds = array<i64: 3, 2048>}, {pipeline_mode = #tpu.pipeline_mode<synchronous>, transform_indices = @transform_1, window_bounds = array<i64: 4, 32, 32>}, {pipeline_mode = #tpu.pipeline_mode<synchronous>, transform_indices = @transform_2, window_bounds = array<i64: 4, 32, 1>}, {transform_indices = @transform_3, window_bounds = array<i64: 3, 2048>}]} {
    %c0 = arith.constant 0 : index
    %c0_0 = arith.constant 0 : index
    %0 = vector.load %arg1[%c0, %c0_0] : memref<3x2048xf32, #tpu.memory_space<vmem>>, vector<3x2048xf32>
    %c0_1 = arith.constant 0 : index
    %c0_2 = arith.constant 0 : index
    %c0_3 = arith.constant 0 : index
    %1 = vector.load %arg2[%c0_1, %c0_2, %c0_3] : memref<4x32x32xf32, #tpu.memory_space<vmem>>, vector<1x32x32xf32>
    %2 = vector.shape_cast %1 : vector<1x32x32xf32> to vector<32x32xf32>
    %3 = vector.extract_strided_slice %2 {offsets = [0, 0], sizes = [32, 3], strides = [1, 1]} : vector<32x32xf32> to vector<32x3xf32>
    %cst = arith.constant dense<0.000000e+00> : vector<32x2048xf32>
    %4 = tpu.matmul %3, %0, %cst {dimension_numbers = #tpu.dot_dimension_numbers<[1], [0], [0], [1], [0, 0, 1, 1], [], []>} : vector<32x3xf32>, vector<3x2048xf32>, vector<32x2048xf32> -> vector<32x2048xf32>
    %c0_4 = arith.constant 0 : index
    %c0_5 = arith.constant 0 : index
    %c0_6 = arith.constant 0 : index
    %5 = vector.load %arg3[%c0_4, %c0_5, %c0_6] : memref<4x32x1xf32, #tpu.memory_space<vmem>>, vector<1x32x1xf32>
    %6 = vector.shape_cast %5 : vector<1x32x1xf32> to vector<32x1xf32>
    %7 = vector.broadcast %6 : vector<32x1xf32> to vector<32x2048xf32>
    %8 = arith.addf %4, %7 : vector<32x2048xf32>
    %cst_7 = arith.constant 0.000000e+00 : f32
    %9 = vector.broadcast %cst_7 : f32 to vector<32x2048xf32>
    %10 = arith.maximumf %8, %9 : vector<32x2048xf32>
    %c1 = arith.constant 1 : index
    %c0_8 = arith.constant 0 : index
    %c0_9 = arith.constant 0 : index
    %11 = vector.load %arg2[%c1, %c0_8, %c0_9] : memref<4x32x32xf32, #tpu.memory_space<vmem>>, vector<1x32x32xf32>
    %12 = vector.shape_cast %11 : vector<1x32x32xf32> to vector<32x32xf32>
    %cst_10 = arith.constant dense<0.000000e+00> : vector<32x2048xf32>
    %13 = tpu.matmul %12, %10, %cst_10 {dimension_numbers = #tpu.dot_dimension_numbers<[1], [0], [0], [1], [0, 0, 1, 1], [], []>} : vector<32x32xf32>, vector<32x2048xf32>, vector<32x2048xf32> -> vector<32x2048xf32>
    %c1_11 = arith.constant 1 : index
    %c0_12 = arith.constant 0 : index
    %c0_13 = arith.constant 0 : index
    %14 = vector.load %arg3[%c1_11, %c0_12, %c0_13] : memref<4x32x1xf32, #tpu.memory_space<vmem>>, vector<1x32x1xf32>
    %15 = vector.shape_cast %14 : vector<1x32x1xf32> to vector<32x1xf32>
    %16 = vector.broadcast %15 : vector<32x1xf32> to vector<32x2048xf32>
    %17 = arith.addf %13, %16 : vector<32x2048xf32>
    %cst_14 = arith.constant 5.000000e-01 : f32
    %18 = vector.broadcast %cst_14 : f32 to vector<32x2048xf32>
    %19 = arith.mulf %18, %17 : vector<32x2048xf32>
    %cst_15 = arith.constant 0.707106769 : f32
    %20 = vector.broadcast %cst_15 : f32 to vector<32x2048xf32>
    %21 = arith.mulf %17, %20 : vector<32x2048xf32>
    %22 = math.erf %21 : vector<32x2048xf32>
    %cst_16 = arith.constant 1.000000e+00 : f32
    %23 = vector.broadcast %cst_16 : f32 to vector<32x2048xf32>
    %24 = arith.addf %23, %22 : vector<32x2048xf32>
    %25 = arith.mulf %19, %24 : vector<32x2048xf32>
    %c2 = arith.constant 2 : index
    %c0_17 = arith.constant 0 : index
    %c0_18 = arith.constant 0 : index
    %26 = vector.load %arg2[%c2, %c0_17, %c0_18] : memref<4x32x32xf32, #tpu.memory_space<vmem>>, vector<1x32x32xf32>
    %27 = vector.shape_cast %26 : vector<1x32x32xf32> to vector<32x32xf32>
    %cst_19 = arith.constant dense<0.000000e+00> : vector<32x2048xf32>
    %28 = tpu.matmul %27, %25, %cst_19 {dimension_numbers = #tpu.dot_dimension_numbers<[1], [0], [0], [1], [0, 0, 1, 1], [], []>} : vector<32x32xf32>, vector<32x2048xf32>, vector<32x2048xf32> -> vector<32x2048xf32>
    %c2_20 = arith.constant 2 : index
    %c0_21 = arith.constant 0 : index
    %c0_22 = arith.constant 0 : index
    %29 = vector.load %arg3[%c2_20, %c0_21, %c0_22] : memref<4x32x1xf32, #tpu.memory_space<vmem>>, vector<1x32x1xf32>
    %30 = vector.shape_cast %29 : vector<1x32x1xf32> to vector<32x1xf32>
    %31 = vector.broadcast %30 : vector<32x1xf32> to vector<32x2048xf32>
    %32 = arith.addf %28, %31 : vector<32x2048xf32>
    %cst_23 = arith.constant 5.000000e-01 : f32
    %33 = vector.broadcast %cst_23 : f32 to vector<32x2048xf32>
    %34 = arith.mulf %33, %32 : vector<32x2048xf32>
    %cst_24 = arith.constant 0.707106769 : f32
    %35 = vector.broadcast %cst_24 : f32 to vector<32x2048xf32>
    %36 = arith.mulf %32, %35 : vector<32x2048xf32>
    %37 = math.erf %36 : vector<32x2048xf32>
    %cst_25 = arith.constant 1.000000e+00 : f32
    %38 = vector.broadcast %cst_25 : f32 to vector<32x2048xf32>
    %39 = arith.addf %38, %37 : vector<32x2048xf32>
    %40 = arith.mulf %34, %39 : vector<32x2048xf32>
    %c3 = arith.constant 3 : index
    %c0_26 = arith.constant 0 : index
    %c0_27 = arith.constant 0 : index
    %41 = vector.load %arg2[%c3, %c0_26, %c0_27] : memref<4x32x32xf32, #tpu.memory_space<vmem>>, vector<1x32x32xf32>
    %42 = vector.shape_cast %41 : vector<1x32x32xf32> to vector<32x32xf32>
    %43 = vector.extract_strided_slice %42 {offsets = [0, 0], sizes = [3, 32], strides = [1, 1]} : vector<32x32xf32> to vector<3x32xf32>
    %cst_28 = arith.constant dense<0.000000e+00> : vector<3x2048xf32>
    %44 = tpu.matmul %43, %40, %cst_28 {dimension_numbers = #tpu.dot_dimension_numbers<[1], [0], [0], [1], [0, 0, 1, 1], [], []>} : vector<3x32xf32>, vector<32x2048xf32>, vector<3x2048xf32> -> vector<3x2048xf32>
    %c3_29 = arith.constant 3 : index
    %c0_30 = arith.constant 0 : index
    %c0_31 = arith.constant 0 : index
    %45 = vector.load %arg3[%c3_29, %c0_30, %c0_31] : memref<4x32x1xf32, #tpu.memory_space<vmem>>, vector<1x32x1xf32>
    %46 = vector.shape_cast %45 : vector<1x32x1xf32> to vector<32x1xf32>
    %47 = vector.extract_strided_slice %46 {offsets = [0, 0], sizes = [3, 1], strides = [1, 1]} : vector<32x1xf32> to vector<3x1xf32>
    %48 = vector.broadcast %47 : vector<3x1xf32> to vector<3x2048xf32>
    %49 = arith.addf %44, %48 : vector<3x2048xf32>
    %50 = arith.addf %49, %0 : vector<3x2048xf32>
    %c0_32 = arith.constant 0 : index
    %c0_33 = arith.constant 0 : index
    %51 = vector.load %arg4[%c0_32, %c0_33] : memref<3x2048xf32, #tpu.memory_space<vmem>>, vector<3x2048xf32>
    tpu.vector_store %arg4[%c0_32, %c0_33], %50 {strides = array<i32>} : memref<3x2048xf32, #tpu.memory_space<vmem>>, vector<3x2048xf32>,
    return
  }
  func.func @transform_0(%arg0: i32) -> (i32, i32) {
    %c0_i32 = arith.constant 0 : i32
    %c0_i32_0 = arith.constant 0 : i32
    return %c0_i32, %arg0 : i32, i32
  }
  func.func @transform_1(%arg0: i32) -> (i32, i32, i32) {
    %c0_i32 = arith.constant 0 : i32
    %c0_i32_0 = arith.constant 0 : i32
    %c0_i32_1 = arith.constant 0 : i32
    %c0_i32_2 = arith.constant 0 : i32
    return %c0_i32, %c0_i32_0, %c0_i32_1 : i32, i32, i32
  }
  func.func @transform_2(%arg0: i32) -> (i32, i32, i32) {
    %c0_i32 = arith.constant 0 : i32
    %c0_i32_0 = arith.constant 0 : i32
    %c0_i32_1 = arith.constant 0 : i32
    %c0_i32_2 = arith.constant 0 : i32
    return %c0_i32, %c0_i32_0, %c0_i32_1 : i32, i32, i32
  }
  func.func @transform_3(%arg0: i32) -> (i32, i32) {
    %c0_i32 = arith.constant 0 : i32
    %c0_i32_0 = arith.constant 0 : i32
    return %c0_i32, %arg0 : i32, i32
  }
}

</mosaic_0001>

<llo_original>
// kernel: tpu_custom_call.1
$region0: #{tpu_custom_call.1}
  #allocation0 [shape = 'u32[]', space=smem, size = 0x4, offset = 0x4, fixed_abs, tag = 'smem constant byte address 0x4 - core index']
  #allocation1 [shape = 'u32[144,128]{1,0:T(1,128)}', space=vmem, size = 0x12000, scoped, tag = 'internal scratch']
  %s0 = inlined_call_operand.vmem [shape: f32[3,4096], index: 0, kind: input, shape index: {}]
  %s1 = inlined_call_operand.hbm [shape: f32[4,32,32], index: 1, kind: input, shape index: {}]
  %s2 = inlined_call_operand.vmem [shape: f32[4,32,1], index: 2, kind: input, shape index: {}]
  %s3 = inlined_call_operand.hbm [shape: f32[3,4096], index: 3, kind: output, shape index: {}]
  %s4 = sld [smem:[#allocation0]]
  $region49: #{tpu_custom_call.1} parent=0
    _
  %s6 = ssub.s32 1, %s4
  %s7 = scalar_select 0, %s6, %s4
  $region1: #{tpu_custom_call.1} parent=0
    #allocation2 [shape = 'u8[65536]{0}', space=vmem, size = 0x10000, scoped, tag = 'input window, operand 1, single buffered']
    #allocation3 [shape = 's32[2]{0}', space=sflag, size = 0x8, scoped, tag = 'scoped memory for tpu_custom_call.1']
    #allocation4 [shape = 's32[2]{0}', space=sflag, size = 0x8, scoped, tag = 'scoped memory for tpu_custom_call.1']
    #allocation5 [shape = 'u8[65536]{0}', space=vmem, size = 0x10000, scoped, tag = 'output window, operand 0']
    %8 = vsyncpa [#allocation3], 0
    %9 = vsyncpa [#allocation4], 0
    %s10 = scalar_lea.sflag [#allocation4], 1
    %11 = vsyncpa %s10, 0
    loop: start=0, step=1, limit=4
    $region2: #{tpu_custom_call.1} parent=1 // loop_pre_header
      _
    $region3: #{tpu_custom_call.1} parent=1 // loop_header
      %s13 = sphi 0, %s17
      %p14 = scmp.ge.s32.totalorder %s13, 4
      %s23 = sphi 0, %s25
      %s26 = sphi 0, %s23
      %s27 = sphi 0, %s26
      %s43 = sphi 0, %s27
      %s47 = sphi 0, %s47
      %s49 = sphi 0, %s47
      %s50 = sphi 0, %s49
      %s64 = sphi 0, %s50
      %s68 = sphi 0, %s68
      %s70 = sphi 0, %s68
      %s71 = sphi 0, %s70
      %s85 = sphi 0, %s71
      %s91 = sphi 0, %s93
      %s94 = sphi 0, %s91
      %s95 = sphi 0, %s94
      %s111 = sphi 0, %s95
    $region4: #{tpu_custom_call.1} parent=1 // loop_header_branch
      %16 = sbr.rel (%p14) target = $region8
    $region5: #{tpu_custom_call.1} parent=1 // loop_body
      %s18 = ssub.s32 %s13, 1
      %s19 = ssub.s32 %s13, 2
      %s20 = sadd.s32 %s13, 1
      %s21 = ssub.s32 %s13, %s20
      %p22 = scmp.eq.s32.totalorder %s21, 0
      %s24 = sadd.s32 %s23, 1
      %s25 = scalar_select %p22, %s23, %s24
      %p28 = pneg %p22
      %p29 = scmp.eq.s32.totalorder %s13, 1
      %p30 = por %p28, %p29
      %p31 = scmp.ne.s32.totalorder %s23, %s26
      %p32 = scmp.eq.s32.totalorder %s13, 0
      %p33 = por %p31, %p32
      %p34 = scmp.ne.s32.totalorder %s23, %s26
      %p35 = scmp.eq.s32.totalorder %s18, 1
      %p36 = por %p34, %p35
      %p37 = scmp.ne.s32.totalorder %s26, %s27
      %p38 = scmp.eq.s32.totalorder %s18, 0
      %p39 = por %p37, %p38
      %p40 = scmp.ne.s32.totalorder %s26, %s27
      %p41 = scmp.eq.s32.totalorder %s19, 1
      %p42 = por %p40, %p41
      %p44 = scmp.ne.s32.totalorder %s27, %s43
      %p45 = scmp.eq.s32.totalorder %s19, 0
      %p46 = por %p44, %p45
      %s48 = sadd.s32 %s47, 1
      %p51 = scmp.eq.s32.totalorder %s13, 1
      %p52 = scmp.ne.s32.totalorder %s47, %s49
      %p53 = scmp.eq.s32.totalorder %s13, 0
      %p54 = por %p52, %p53
      %p55 = scmp.ne.s32.totalorder %s47, %s49
      %p56 = scmp.eq.s32.totalorder %s18, 1
      %p57 = por %p55, %p56
      %p58 = scmp.ne.s32.totalorder %s49, %s50
      %p59 = scmp.eq.s32.totalorder %s18, 0
      %p60 = por %p58, %p59
      %p61 = scmp.ne.s32.totalorder %s49, %s50
      %p62 = scmp.eq.s32.totalorder %s19, 1
      %p63 = por %p61, %p62
      %p65 = scmp.ne.s32.totalorder %s50, %s64
      %p66 = scmp.eq.s32.totalorder %s19, 0
      %p67 = por %p65, %p66
      %s69 = sadd.s32 %s68, 1
      %p72 = scmp.eq.s32.totalorder %s13, 1
      %p73 = scmp.ne.s32.totalorder %s68, %s70
      %p74 = scmp.eq.s32.totalorder %s13, 0
      %p75 = por %p73, %p74
      %p76 = scmp.ne.s32.totalorder %s68, %s70
      %p77 = scmp.eq.s32.totalorder %s18, 1
      %p78 = por %p76, %p77
      %p79 = scmp.ne.s32.totalorder %s70, %s71
      %p80 = scmp.eq.s32.totalorder %s18, 0
      %p81 = por %p79, %p80
      %p82 = scmp.ne.s32.totalorder %s70, %s71
      %p83 = scmp.eq.s32.totalorder %s19, 1
      %p84 = por %p82, %p83
      %p86 = scmp.ne.s32.totalorder %s71, %s85
      %p87 = scmp.eq.s32.totalorder %s19, 0
      %p88 = por %p86, %p87
      %s89 = ssub.s32 %s13, %s20
      %p90 = scmp.eq.s32.totalorder %s89, 0
      %s92 = sadd.s32 %s91, 1
      %s93 = scalar_select %p90, %s91, %s92
      %p96 = pneg %p90
      %p97 = scmp.eq.s32.totalorder %s13, 1
      %p98 = por %p96, %p97
      %p99 = scmp.ne.s32.totalorder %s91, %s94
      %p100 = scmp.eq.s32.totalorder %s13, 0
      %p101 = por %p99, %p100
      %p102 = scmp.ne.s32.totalorder %s91, %s94
      %p103 = scmp.eq.s32.totalorder %s18, 1
      %p104 = por %p102, %p103
      %p105 = scmp.ne.s32.totalorder %s94, %s95
      %p106 = scmp.eq.s32.totalorder %s18, 0
      %p107 = por %p105, %p106
      %p108 = scmp.ne.s32.totalorder %s94, %s95
      %p109 = scmp.eq.s32.totalorder %s19, 1
      %p110 = por %p108, %p109
      %p112 = scmp.ne.s32.totalorder %s95, %s111
      %p113 = scmp.eq.s32.totalorder %s19, 0
      %p114 = por %p112, %p113
      %p115 = scmp.le.s32.totalorder 1, %s13
      %p116 = scmp.lt.s32.totalorder %s13, 3
      %p117 = pnand %p115, %p116
      %p118 = pneg %p117
      // Predicated region
      $region9: #{tpu_custom_call.1} parent=5 // pred_check
        _
      $region10: #{tpu_custom_call.1} parent=5 // pred_check_branch
        %120 = sbr.rel (%p117) target = $region12
      $region11: #{tpu_custom_call.1} parent=5 // pred_region
        %s121 = ssub.s32 %s13, 1
        // Predicated region
        $region13: #{tpu_custom_call.1} parent=11 // pred_check
          %p122 = pneg %p60
        $region14: #{tpu_custom_call.1} parent=11 // pred_check_branch
          %124 = sbr.rel (%p122) target = $region16
        $region15: #{tpu_custom_call.1} parent=11 // pred_region
          %s126 = ssub.s32 2048, 2048
          %127 = vsyncadd [#allocation3], %s126
          %s128 = sshll.u32 [#allocation2], 4
          %s129 = int_to_ptr.vmem [resolvable:$true] %s128
          %134 = dma.hbm_to_vmem [thread:$0]  %s1, 2048, %s129, [#allocation3], 128, 128, 8
        $region16: #{tpu_custom_call.1} parent=11 // pred_fallthru
          _
        // Predicated region
        $region17: #{tpu_custom_call.1} parent=11 // pred_check
          %p135 = pneg %p81
        $region18: #{tpu_custom_call.1} parent=11 // pred_check_branch
          %137 = sbr.rel (%p135) target = $region20
        $region19: #{tpu_custom_call.1} parent=11 // pred_region
          _
        $region20: #{tpu_custom_call.1} parent=11 // pred_fallthru
          _
      $region12: #{tpu_custom_call.1} parent=5 // pred_fallthru
        _
      %p138 = scmp.lt.s32.totalorder %s13, 2
      // Predicated region
      $region21: #{tpu_custom_call.1} parent=5 // pred_check
        %p139 = pneg %p138
      $region22: #{tpu_custom_call.1} parent=5 // pred_check_branch
        %141 = sbr.rel (%p139) target = $region24
      $region23: #{tpu_custom_call.1} parent=5 // pred_region
        // Predicated region
        $region25: #{tpu_custom_call.1} parent=23 // pred_check
          %p142 = pneg %p33
        $region26: #{tpu_custom_call.1} parent=23 // pred_check_branch
          %144 = sbr.rel (%p142) target = $region28
        $region27: #{tpu_custom_call.1} parent=23 // pred_region
          %s145 = smul.u32 16, %s13
          %p146 = scmp.lt.s32.totalorder %s145, 31
          %s147 = scalar_select %p146, %s145, 31
          %s148 = smul.addr %s147, 4
          %s149 = scalar_lea.vmem %s0, %s148
          %s150 = smul.u32 16, %s13
        $region28: #{tpu_custom_call.1} parent=23 // pred_fallthru
          _
      $region24: #{tpu_custom_call.1} parent=5 // pred_fallthru
        _
      %p151 = scmp.le.s32.totalorder 1, %s13
      %p152 = scmp.lt.s32.totalorder %s13, 3
      %p153 = pnand %p151, %p152
      %p154 = pneg %p153
      // Predicated region
      $region29: #{tpu_custom_call.1} parent=5 // pred_check
        _
      $region30: #{tpu_custom_call.1} parent=5 // pred_check_branch
        %156 = sbr.rel (%p153) target = $region32
      $region31: #{tpu_custom_call.1} parent=5 // pred_region
        %s157 = ssub.s32 %s13, 1
        // Predicated region
        $region33: #{tpu_custom_call.1} parent=31 // pred_check
          %p158 = pneg %p60
        $region34: #{tpu_custom_call.1} parent=31 // pred_check_branch
          %160 = sbr.rel (%p158) target = $region36
        $region35: #{tpu_custom_call.1} parent=31 // pred_region
          %161 = dma.done [#allocation3], 2048
        $region36: #{tpu_custom_call.1} parent=31 // pred_fallthru
          _
        %s162 = smul.u32 16, %s18
        %p163 = scmp.lt.s32.totalorder %s162, 31
        %s164 = scalar_select %p163, %s162, 31
        %s165 = smul.addr %s164, 4
        %s166 = scalar_lea.vmem %s0, %s165
        %p167 = pneg %p39
        %p168 = pneg %p36
        %p169 = pneg %p60
        %p170 = pneg %p57
        %p171 = pneg %p81
        %p172 = pneg %p78
        %p173 = pneg %p107
        %p174 = pneg %p104
        %s175 = sand.u32 %s94, 1
        %s176 = scalar_lea.sflag [#allocation4], %s175
        %s177 = sand.u32 %s94, 1
        %s178 = smul.addr %s177, 64
        %s179 = scalar_lea.vmem [#allocation5], %s178
        %s180 = smul.u32 16, %s18
        %p181 = scmp.lt.s32.totalorder %s180, 31
        %s182 = scalar_select %p181, %s180, 31
        %s183 = smul.addr %s182, 4
        %s184 = scalar_lea.vmem %s0, %s183
        %s185 = smul.u32 16, %s18
        %s186 = smul.u32 16, %s18
        %v187 = vld [vmem:[%s184] sm:$0x77]
        %v188 = vld [vmem:[%s184 + $0x8] sm:$0x77]
        %v189 = vld [vmem:[%s184 + $0x10] sm:$0x77]
        %v190 = vld [vmem:[%s184 + $0x18] sm:$0x77]
        %v191 = vld [vmem:[%s184 + $0x20] sm:$0x77]
        %v192 = vld [vmem:[%s184 + $0x28] sm:$0x77]
        %v193 = vld [vmem:[%s184 + $0x30] sm:$0x77]
        %v194 = vld [vmem:[%s184 + $0x38] sm:$0x77]
        %v195 = vld [vmem:[#allocation2] sm:$0xff]
        %v196 = vld [vmem:[#allocation2 + $0x8] sm:$0xff]
        %v197 = vld [vmem:[#allocation2 + $0x10] sm:$0xff]
        %v198 = vld [vmem:[#allocation2 + $0x18] sm:$0xff]
        %v199 = vld [vmem:[%s2] sm:$0xff]
        %v200 = vld [vmem:[%s2 + $0x8] sm:$0xff]
        %v201 = vld [vmem:[%s2 + $0x10] sm:$0xff]
        %v202 = vld [vmem:[%s2 + $0x18] sm:$0xff]
        %204 = vset.pattern.permute.xlu0 0
        %205 = vperm.xlu0 %204, %v199
        %v206 = vpop.permute.xlu0 %205
        %209 = vset.pattern.permute.xlu0 0
        %210 = vperm.xlu0 %209, %v200
        %v211 = vpop.permute.xlu0 %210
        %214 = vset.pattern.permute.xlu0 0
        %215 = vperm.xlu0 %214, %v201
        %v216 = vpop.permute.xlu0 %215
        %219 = vset.pattern.permute.xlu0 0
        %220 = vperm.xlu0 %219, %v202
        %v221 = vpop.permute.xlu0 %220
        %v231 = vcombine.high %v187, %v187
        %v232 = vcombine.high %v188, %v188
        %v233 = vcombine.high %v189, %v189
        %v234 = vcombine.high %v190, %v190
        %v235 = vcombine.high %v191, %v191
        %v236 = vcombine.high %v192, %v192
        %v237 = vcombine.high %v193, %v193
        %v238 = vcombine.high %v194, %v194
        %vm239 = vcmask 23552
        %v241 = vsel %vm239, %v195, 0
        %v244 = vsel %vm239, %v196, 0
        %v247 = vsel %vm239, %v197, 0
        %v250 = vsel %vm239, %v198, 0
        %vm252 = vcmask 1042432
        %v253 = vsel %vm252, %v187, 0
        %v255 = vsel %vm252, %v231, 0
        %v257 = vsel %vm252, %v188, 0
        %v259 = vsel %vm252, %v232, 0
        %v261 = vsel %vm252, %v189, 0
        %v263 = vsel %vm252, %v233, 0
        %v265 = vsel %vm252, %v190, 0
        %v267 = vsel %vm252, %v234, 0
        %v269 = vsel %vm252, %v191, 0
        %v271 = vsel %vm252, %v235, 0
        %v273 = vsel %vm252, %v192, 0
        %v275 = vsel %vm252, %v236, 0
        %v277 = vsel %vm252, %v193, 0
        %v279 = vsel %vm252, %v237, 0
        %v281 = vsel %vm252, %v194, 0
        %v283 = vsel %vm252, %v238, 0
        %285 = vmatprep.subr.mxu0 0.0
        %286 = vmatpush1.msra.mxu0 0.0
        %287 = vmatprep.subr.mxu0 0.0
        %288 = vmatpush1.msra.mxu0 0.0
        %289 = vmatprep.subr.mxu0 0.0
        %290 = vmatpush1.msra.mxu0 0.0
        %291 = vmatprep.subr.mxu0 0.0
        %292 = vmatpush1.msra.mxu0 0.0
        %293 = vmatprep.subr.mxu0 0.0
        %294 = vmatpush1.msra.mxu0 0.0
        %295 = vmatprep.subr.mxu0 0.0
        %296 = vmatpush1.msra.mxu0 0.0
        %297 = vmatprep.subr.mxu0 0.0
        %298 = vmatpush1.msra.mxu0 0.0
        %299 = vmatprep.subr.mxu0 0.0
        %300 = vmatpush1.msra.mxu0 0.0
        %301 = vmatprep.subr.mxu0 0.0
        %302 = vmatpush1.msra.mxu0 0.0
        %303 = vmatprep.subr.mxu0 0.0
        %304 = vmatpush1.msra.mxu0 0.0
        %305 = vmatprep.subr.mxu0 0.0
        %306 = vmatpush1.msra.mxu0 0.0
        %307 = vmatprep.subr.mxu0 0.0
        %308 = vmatpush1.msra.mxu0 0.0
        %309 = vmatprep.subr.mxu0 0.0
        %310 = vmatpush1.msra.mxu0 0.0
        %311 = vmatprep.subr.mxu0 0.0
        %312 = vmatpush1.msra.mxu0 0.0
        %313 = vmatprep.subr.mxu0 0.0
        %314 = vmatpush1.msra.mxu0 0.0
        %315 = vmatprep.subr.mxu0 %v255
        %316 = vmatpush1.msra.mxu0 %v253
        %317 = vmatprep.subr.mxu0 0.0
        %318 = vmatpush2.msra.mxu0 0.0
        %319 = vmatprep.subr.mxu0 0.0
        %320 = vmatpush2.msra.mxu0 0.0
        %321 = vmatprep.subr.mxu0 0.0
        %322 = vmatpush2.msra.mxu0 0.0
        %323 = vmatprep.subr.mxu0 0.0
        %324 = vmatpush2.msra.mxu0 0.0
        %325 = vmatprep.subr.mxu0 0.0
        %326 = vmatpush2.msra.mxu0 0.0
        %327 = vmatprep.subr.mxu0 0.0
        %328 = vmatpush2.msra.mxu0 0.0
        %329 = vmatprep.subr.mxu0 0.0
        %330 = vmatpush2.msra.mxu0 0.0
        %331 = vmatprep.subr.mxu0 0.0
        %332 = vmatpush2.msra.mxu0 0.0
        %333 = vmatprep.subr.mxu0 0.0
        %334 = vmatpush2.msra.mxu0 0.0
        %335 = vmatprep.subr.mxu0 0.0
        %336 = vmatpush2.msra.mxu0 0.0
        %337 = vmatprep.subr.mxu0 0.0
        %338 = vmatpush2.msra.mxu0 0.0
        %339 = vmatprep.subr.mxu0 0.0
        %340 = vmatpush2.msra.mxu0 0.0
        %341 = vmatprep.subr.mxu0 0.0
        %342 = vmatpush2.msra.mxu0 0.0
        %343 = vmatprep.subr.mxu0 0.0
        %344 = vmatpush2.msra.mxu0 0.0
        %345 = vmatprep.subr.mxu0 0.0
        %346 = vmatpush2.msra.mxu0 0.0
        %347 = vmatprep.subr.mxu0 0.0
        %348 = vmatpush2.msra.mxu0 0.0
        %349 = vmatprep.mubr.f32.mxu0 0.0
        %350 = vmatmul.mubr.f32.gmra.mxu0 %v241
        %v351 = vpop.f32.mrf.mxu0
        %v352 = vadd.f32 %v206, %v351
        %v353 = vpop.f32.mrf.mxu0
        %v354 = vadd.f32 %v206, %v353
        %355 = vmatprep.mubr.f32.mxu0 0.0
        %356 = vmatmul.mubr.f32.gmra.mxu0 %v244
        %v357 = vpop.f32.mrf.mxu0
        %v358 = vadd.f32 %v211, %v357
        %v359 = vpop.f32.mrf.mxu0
        %v360 = vadd.f32 %v211, %v359
        %361 = vmatprep.mubr.f32.mxu0 0.0
        %362 = vmatmul.mubr.f32.gmra.mxu0 %v247
        %v363 = vpop.f32.mrf.mxu0
        %v364 = vadd.f32 %v216, %v363
        %v365 = vpop.f32.mrf.mxu0
        %v366 = vadd.f32 %v216, %v365
        %367 = vmatprep.mubr.f32.mxu0 0.0
        %368 = vmatmul.mubr.f32.gmra.mxu0 %v250
        %v369 = vpop.f32.mrf.mxu0
        %v370 = vadd.f32 %v221, %v369
        %v371 = vpop.f32.mrf.mxu0
        %v372 = vadd.f32 %v221, %v371
        %373 = vdwg.mxu0
        %374 = vmatprep.subr.mxu0 0.0
        %375 = vmatpush1.msra.mxu0 0.0
        %376 = vmatprep.subr.mxu0 0.0
        %377 = vmatpush1.msra.mxu0 0.0
        %378 = vmatprep.subr.mxu0 0.0
        %379 = vmatpush1.msra.mxu0 0.0
        %380 = vmatprep.subr.mxu0 0.0
        %381 = vmatpush1.msra.mxu0 0.0
        %382 = vmatprep.subr.mxu0 0.0
        %383 = vmatpush1.msra.mxu0 0.0
        %384 = vmatprep.subr.mxu0 0.0
        %385 = vmatpush1.msra.mxu0 0.0
        %386 = vmatprep.subr.mxu0 0.0
        %387 = vmatpush1.msra.mxu0 0.0
        %388 = vmatprep.subr.mxu0 0.0
        %389 = vmatpush1.msra.mxu0 0.0
        %390 = vmatprep.subr.mxu0 0.0
        %391 = vmatpush1.msra.mxu0 0.0
        %392 = vmatprep.subr.mxu0 0.0
        %393 = vmatpush1.msra.mxu0 0.0
        %394 = vmatprep.subr.mxu0 0.0
        %395 = vmatpush1.msra.mxu0 0.0
        %396 = vmatprep.subr.mxu0 0.0
        %397 = vmatpush1.msra.mxu0 0.0
        %398 = vmatprep.subr.mxu0 0.0
        %399 = vmatpush1.msra.mxu0 0.0
        %400 = vmatprep.subr.mxu0 0.0
        %401 = vmatpush1.msra.mxu0 0.0
        %402 = vmatprep.subr.mxu0 0.0
        %403 = vmatpush1.msra.mxu0 0.0
        %404 = vmatprep.subr.mxu0 %v259
        %405 = vmatpush1.msra.mxu0 %v257
        %406 = vmatprep.subr.mxu0 0.0
        %407 = vmatpush2.msra.mxu0 0.0
        %408 = vmatprep.subr.mxu0 0.0
        %409 = vmatpush2.msra.mxu0 0.0
        %410 = vmatprep.subr.mxu0 0.0
        %411 = vmatpush2.msra.mxu0 0.0
        %412 = vmatprep.subr.mxu0 0.0
        %413 = vmatpush2.msra.mxu0 0.0
        %414 = vmatprep.subr.mxu0 0.0
        %415 = vmatpush2.msra.mxu0 0.0
        %416 = vmatprep.subr.mxu0 0.0
        %417 = vmatpush2.msra.mxu0 0.0
        %418 = vmatprep.subr.mxu0 0.0
        %419 = vmatpush2.msra.mxu0 0.0
        %420 = vmatprep.subr.mxu0 0.0
        %421 = vmatpush2.msra.mxu0 0.0
        %422 = vmatprep.subr.mxu0 0.0
        %423 = vmatpush2.msra.mxu0 0.0
        %424 = vmatprep.subr.mxu0 0.0
        %425 = vmatpush2.msra.mxu0 0.0
        %426 = vmatprep.subr.mxu0 0.0
        %427 = vmatpush2.msra.mxu0 0.0
        %428 = vmatprep.subr.mxu0 0.0
        %429 = vmatpush2.msra.mxu0 0.0
        %430 = vmatprep.subr.mxu0 0.0
        %431 = vmatpush2.msra.mxu0 0.0
        %432 = vmatprep.subr.mxu0 0.0
        %433 = vmatpush2.msra.mxu0 0.0
        %434 = vmatprep.subr.mxu0 0.0
        %435 = vmatpush2.msra.mxu0 0.0
        %436 = vmatprep.subr.mxu0 0.0
        %437 = vmatpush2.msra.mxu0 0.0
        %438 = vmatprep.mubr.f32.mxu0 0.0
        %439 = vmatmul.mubr.f32.gmra.mxu0 %v241
        %v440 = vpop.f32.mrf.mxu0
        %v441 = vadd.f32 %v206, %v440
        %v442 = vpop.f32.mrf.mxu0
        %v443 = vadd.f32 %v206, %v442
        %444 = vmatprep.mubr.f32.mxu0 0.0
        %445 = vmatmul.mubr.f32.gmra.mxu0 %v244
        %v446 = vpop.f32.mrf.mxu0
        %v447 = vadd.f32 %v211, %v446
        %v448 = vpop.f32.mrf.mxu0
        %v449 = vadd.f32 %v211, %v448
        %450 = vmatprep.mubr.f32.mxu0 0.0
        %451 = vmatmul.mubr.f32.gmra.mxu0 %v247
        %v452 = vpop.f32.mrf.mxu0
        %v453 = vadd.f32 %v216, %v452
        %v454 = vpop.f32.mrf.mxu0
        %v455 = vadd.f32 %v216, %v454
        %456 = vmatprep.mubr.f32.mxu0 0.0
        %457 = vmatmul.mubr.f32.gmra.mxu0 %v250
        %v458 = vpop.f32.mrf.mxu0
        %v459 = vadd.f32 %v221, %v458
        %v460 = vpop.f32.mrf.mxu0
        %v461 = vadd.f32 %v221, %v460
        %462 = vdwg.mxu0
        %463 = vmatprep.subr.mxu0 0.0
        %464 = vmatpush1.msra.mxu0 0.0
        %465 = vmatprep.subr.mxu0 0.0
        %466 = vmatpush1.msra.mxu0 0.0
        %467 = vmatprep.subr.mxu0 0.0
        %468 = vmatpush1.msra.mxu0 0.0
        %469 = vmatprep.subr.mxu0 0.0
        %470 = vmatpush1.msra.mxu0 0.0
        %471 = vmatprep.subr.mxu0 0.0
        %472 = vmatpush1.msra.mxu0 0.0
        %473 = vmatprep.subr.mxu0 0.0
        %474 = vmatpush1.msra.mxu0 0.0
        %475 = vmatprep.subr.mxu0 0.0
        %476 = vmatpush1.msra.mxu0 0.0
        %477 = vmatprep.subr.mxu0 0.0
        %478 = vmatpush1.msra.mxu0 0.0
        %479 = vmatprep.subr.mxu0 0.0
        %480 = vmatpush1.msra.mxu0 0.0
        %481 = vmatprep.subr.mxu0 0.0
        %482 = vmatpush1.msra.mxu0 0.0
        %483 = vmatprep.subr.mxu0 0.0
        %484 = vmatpush1.msra.mxu0 0.0
        %485 = vmatprep.subr.mxu0 0.0
        %486 = vmatpush1.msra.mxu0 0.0
        %487 = vmatprep.subr.mxu0 0.0
        %488 = vmatpush1.msra.mxu0 0.0
        %489 = vmatprep.subr.mxu0 0.0
        %490 = vmatpush1.msra.mxu0 0.0
        %491 = vmatprep.subr.mxu0 0.0
        %492 = vmatpush1.msra.mxu0 0.0
        %493 = vmatprep.subr.mxu0 %v263
        %494 = vmatpush1.msra.mxu0 %v261
        %495 = vmatprep.subr.mxu0 0.0
        %496 = vmatpush2.msra.mxu0 0.0
        %497 = vmatprep.subr.mxu0 0.0
        %498 = vmatpush2.msra.mxu0 0.0
        %499 = vmatprep.subr.mxu0 0.0
        %500 = vmatpush2.msra.mxu0 0.0
        %501 = vmatprep.subr.mxu0 0.0
        %502 = vmatpush2.msra.mxu0 0.0
        %503 = vmatprep.subr.mxu0 0.0
        %504 = vmatpush2.msra.mxu0 0.0
        %505 = vmatprep.subr.mxu0 0.0
        %506 = vmatpush2.msra.mxu0 0.0
        %507 = vmatprep.subr.mxu0 0.0
        %508 = vmatpush2.msra.mxu0 0.0
        %509 = vmatprep.subr.mxu0 0.0
        %510 = vmatpush2.msra.mxu0 0.0
        %511 = vmatprep.subr.mxu0 0.0
        %512 = vmatpush2.msra.mxu0 0.0
        %513 = vmatprep.subr.mxu0 0.0
        %514 = vmatpush2.msra.mxu0 0.0
        %515 = vmatprep.subr.mxu0 0.0
        %516 = vmatpush2.msra.mxu0 0.0
        %517 = vmatprep.subr.mxu0 0.0
        %518 = vmatpush2.msra.mxu0 0.0
        %519 = vmatprep.subr.mxu0 0.0
        %520 = vmatpush2.msra.mxu0 0.0
        %521 = vmatprep.subr.mxu0 0.0
        %522 = vmatpush2.msra.mxu0 0.0
        %523 = vmatprep.subr.mxu0 0.0
        %524 = vmatpush2.msra.mxu0 0.0
        %525 = vmatprep.subr.mxu0 0.0
        %526 = vmatpush2.msra.mxu0 0.0
        %527 = vmatprep.mubr.f32.mxu0 0.0
        %528 = vmatmul.mubr.f32.gmra.mxu0 %v241
        %v529 = vpop.f32.mrf.mxu0
        %v530 = vadd.f32 %v206, %v529
        %v531 = vpop.f32.mrf.mxu0
        %v532 = vadd.f32 %v206, %v531
        %533 = vmatprep.mubr.f32.mxu0 0.0
        %534 = vmatmul.mubr.f32.gmra.mxu0 %v244
        %v535 = vpop.f32.mrf.mxu0
        %v536 = vadd.f32 %v211, %v535
        %v537 = vpop.f32.mrf.mxu0
        %v538 = vadd.f32 %v211, %v537
        %539 = vmatprep.mubr.f32.mxu0 0.0
        %540 = vmatmul.mubr.f32.gmra.mxu0 %v247
        %v541 = vpop.f32.mrf.mxu0
        %v542 = vadd.f32 %v216, %v541
        %v543 = vpop.f32.mrf.mxu0
        %v544 = vadd.f32 %v216, %v543
        %545 = vmatprep.mubr.f32.mxu0 0.0
        %546 = vmatmul.mubr.f32.gmra.mxu0 %v250
        %v547 = vpop.f32.mrf.mxu0
        %v548 = vadd.f32 %v221, %v547
        %v549 = vpop.f32.mrf.mxu0
        %v550 = vadd.f32 %v221, %v549
        %551 = vdwg.mxu0
        %552 = vmatprep.subr.mxu0 0.0
        %553 = vmatpush1.msra.mxu0 0.0
        %554 = vmatprep.subr.mxu0 0.0
        %555 = vmatpush1.msra.mxu0 0.0
        %556 = vmatprep.subr.mxu0 0.0
        %557 = vmatpush1.msra.mxu0 0.0
        %558 = vmatprep.subr.mxu0 0.0
        %559 = vmatpush1.msra.mxu0 0.0
        %560 = vmatprep.subr.mxu0 0.0
        %561 = vmatpush1.msra.mxu0 0.0
        %562 = vmatprep.subr.mxu0 0.0
        %563 = vmatpush1.msra.mxu0 0.0
        %564 = vmatprep.subr.mxu0 0.0
        %565 = vmatpush1.msra.mxu0 0.0
        %566 = vmatprep.subr.mxu0 0.0
        %567 = vmatpush1.msra.mxu0 0.0
        %568 = vmatprep.subr.mxu0 0.0
        %569 = vmatpush1.msra.mxu0 0.0
        %570 = vmatprep.subr.mxu0 0.0
        %571 = vmatpush1.msra.mxu0 0.0
        %572 = vmatprep.subr.mxu0 0.0
        %573 = vmatpush1.msra.mxu0 0.0
        %574 = vmatprep.subr.mxu0 0.0
        %575 = vmatpush1.msra.mxu0 0.0
        %576 = vmatprep.subr.mxu0 0.0
        %577 = vmatpush1.msra.mxu0 0.0
        %578 = vmatprep.subr.mxu0 0.0
        %579 = vmatpush1.msra.mxu0 0.0
        %580 = vmatprep.subr.mxu0 0.0
        %581 = vmatpush1.msra.mxu0 0.0
        %582 = vmatprep.subr.mxu0 %v267
        %583 = vmatpush1.msra.mxu0 %v265
        %584 = vmatprep.subr.mxu0 0.0
        %585 = vmatpush2.msra.mxu0 0.0
        %586 = vmatprep.subr.mxu0 0.0
        %587 = vmatpush2.msra.mxu0 0.0
        %588 = vmatprep.subr.mxu0 0.0
        %589 = vmatpush2.msra.mxu0 0.0
        %590 = vmatprep.subr.mxu0 0.0
        %591 = vmatpush2.msra.mxu0 0.0
        %592 = vmatprep.subr.mxu0 0.0
        %593 = vmatpush2.msra.mxu0 0.0
        %594 = vmatprep.subr.mxu0 0.0
        %595 = vmatpush2.msra.mxu0 0.0
        %596 = vmatprep.subr.mxu0 0.0
        %597 = vmatpush2.msra.mxu0 0.0
        %598 = vmatprep.subr.mxu0 0.0
        %599 = vmatpush2.msra.mxu0 0.0
        %600 = vmatprep.subr.mxu0 0.0
        %601 = vmatpush2.msra.mxu0 0.0
        %602 = vmatprep.subr.mxu0 0.0
        %603 = vmatpush2.msra.mxu0 0.0
        %604 = vmatprep.subr.mxu0 0.0
        %605 = vmatpush2.msra.mxu0 0.0
        %606 = vmatprep.subr.mxu0 0.0
        %607 = vmatpush2.msra.mxu0 0.0
        %608 = vmatprep.subr.mxu0 0.0
        %609 = vmatpush2.msra.mxu0 0.0
        %610 = vmatprep.subr.mxu0 0.0
        %611 = vmatpush2.msra.mxu0 0.0
        %612 = vmatprep.subr.mxu0 0.0
        %613 = vmatpush2.msra.mxu0 0.0
        %614 = vmatprep.subr.mxu0 0.0
        %615 = vmatpush2.msra.mxu0 0.0
        %616 = vmatprep.mubr.f32.mxu0 0.0
        %617 = vmatmul.mubr.f32.gmra.mxu0 %v241
        %v618 = vpop.f32.mrf.mxu0
        %v619 = vadd.f32 %v206, %v618
        %v620 = vpop.f32.mrf.mxu0
        %v621 = vadd.f32 %v206, %v620
        %622 = vmatprep.mubr.f32.mxu0 0.0
        %623 = vmatmul.mubr.f32.gmra.mxu0 %v244
        %v624 = vpop.f32.mrf.mxu0
        %v625 = vadd.f32 %v211, %v624
        %v626 = vpop.f32.mrf.mxu0
        %v627 = vadd.f32 %v211, %v626
        %628 = vmatprep.mubr.f32.mxu0 0.0
        %629 = vmatmul.mubr.f32.gmra.mxu0 %v247
        %v630 = vpop.f32.mrf.mxu0
        %v631 = vadd.f32 %v216, %v630
        %v632 = vpop.f32.mrf.mxu0
        %v633 = vadd.f32 %v216, %v632
        %634 = vmatprep.mubr.f32.mxu0 0.0
        %635 = vmatmul.mubr.f32.gmra.mxu0 %v250
        %v636 = vpop.f32.mrf.mxu0
        %v637 = vadd.f32 %v221, %v636
        %v638 = vpop.f32.mrf.mxu0
        %v639 = vadd.f32 %v221, %v638
        %640 = vdwg.mxu0
        %641 = vmatprep.subr.mxu0 0.0
        %642 = vmatpush1.msra.mxu0 0.0
        %643 = vmatprep.subr.mxu0 0.0
        %644 = vmatpush1.msra.mxu0 0.0
        %645 = vmatprep.subr.mxu0 0.0
        %646 = vmatpush1.msra.mxu0 0.0
        %647 = vmatprep.subr.mxu0 0.0
        %648 = vmatpush1.msra.mxu0 0.0
        %649 = vmatprep.subr.mxu0 0.0
        %650 = vmatpush1.msra.mxu0 0.0
        %651 = vmatprep.subr.mxu0 0.0
        %652 = vmatpush1.msra.mxu0 0.0
        %653 = vmatprep.subr.mxu0 0.0
        %654 = vmatpush1.msra.mxu0 0.0
        %655 = vmatprep.subr.mxu0 0.0
        %656 = vmatpush1.msra.mxu0 0.0
        %657 = vmatprep.subr.mxu0 0.0
        %658 = vmatpush1.msra.mxu0 0.0
        %659 = vmatprep.subr.mxu0 0.0
        %660 = vmatpush1.msra.mxu0 0.0
        %661 = vmatprep.subr.mxu0 0.0
        %662 = vmatpush1.msra.mxu0 0.0
        %663 = vmatprep.subr.mxu0 0.0
        %664 = vmatpush1.msra.mxu0 0.0
        %665 = vmatprep.subr.mxu0 0.0
        %666 = vmatpush1.msra.mxu0 0.0
        %667 = vmatprep.subr.mxu0 0.0
        %668 = vmatpush1.msra.mxu0 0.0
        %669 = vmatprep.subr.mxu0 0.0
        %670 = vmatpush1.msra.mxu0 0.0
        %671 = vmatprep.subr.mxu0 %v271
        %672 = vmatpush1.msra.mxu0 %v269
        %673 = vmatprep.subr.mxu0 0.0
        %674 = vmatpush2.msra.mxu0 0.0
        %675 = vmatprep.subr.mxu0 0.0
        %676 = vmatpush2.msra.mxu0 0.0
        %677 = vmatprep.subr.mxu0 0.0
        %678 = vmatpush2.msra.mxu0 0.0
        %679 = vmatprep.subr.mxu0 0.0
        %680 = vmatpush2.msra.mxu0 0.0
        %681 = vmatprep.subr.mxu0 0.0
        %682 = vmatpush2.msra.mxu0 0.0
        %683 = vmatprep.subr.mxu0 0.0
        %684 = vmatpush2.msra.mxu0 0.0
        %685 = vmatprep.subr.mxu0 0.0
        %686 = vmatpush2.msra.mxu0 0.0
        %687 = vmatprep.subr.mxu0 0.0
        %688 = vmatpush2.msra.mxu0 0.0
        %689 = vmatprep.subr.mxu0 0.0
        %690 = vmatpush2.msra.mxu0 0.0
        %691 = vmatprep.subr.mxu0 0.0
        %692 = vmatpush2.msra.mxu0 0.0
        %693 = vmatprep.subr.mxu0 0.0
        %694 = vmatpush2.msra.mxu0 0.0
        %695 = vmatprep.subr.mxu0 0.0
        %696 = vmatpush2.msra.mxu0 0.0
        %697 = vmatprep.subr.mxu0 0.0
        %698 = vmatpush2.msra.mxu0 0.0
        %699 = vmatprep.subr.mxu0 0.0
        %700 = vmatpush2.msra.mxu0 0.0
        %701 = vmatprep.subr.mxu0 0.0
        %702 = vmatpush2.msra.mxu0 0.0
        %703 = vmatprep.subr.mxu0 0.0
        %704 = vmatpush2.msra.mxu0 0.0
        %705 = vmatprep.mubr.f32.mxu0 0.0
        %706 = vmatmul.mubr.f32.gmra.mxu0 %v241
        %v707 = vpop.f32.mrf.mxu0
        %v708 = vadd.f32 %v206, %v707
        %v709 = vpop.f32.mrf.mxu0
        %v710 = vadd.f32 %v206, %v709
        %711 = vmatprep.mubr.f32.mxu0 0.0
        %712 = vmatmul.mubr.f32.gmra.mxu0 %v244
        %v713 = vpop.f32.mrf.mxu0
        %v714 = vadd.f32 %v211, %v713
        %v715 = vpop.f32.mrf.mxu0
        %v716 = vadd.f32 %v211, %v715
        %717 = vmatprep.mubr.f32.mxu0 0.0
        %718 = vmatmul.mubr.f32.gmra.mxu0 %v247
        %v719 = vpop.f32.mrf.mxu0
        %v720 = vadd.f32 %v216, %v719
        %v721 = vpop.f32.mrf.mxu0
        %v722 = vadd.f32 %v216, %v721
        %723 = vmatprep.mubr.f32.mxu0 0.0
        %724 = vmatmul.mubr.f32.gmra.mxu0 %v250
        %v725 = vpop.f32.mrf.mxu0
        %v726 = vadd.f32 %v221, %v725
        %v727 = vpop.f32.mrf.mxu0
        %v728 = vadd.f32 %v221, %v727
        %729 = vdwg.mxu0
        %730 = vmatprep.subr.mxu0 0.0
        %731 = vmatpush1.msra.mxu0 0.0
        %732 = vmatprep.subr.mxu0 0.0
        %733 = vmatpush1.msra.mxu0 0.0
        %734 = vmatprep.subr.mxu0 0.0
        %735 = vmatpush1.msra.mxu0 0.0
        %736 = vmatprep.subr.mxu0 0.0
        %737 = vmatpush1.msra.mxu0 0.0
        %738 = vmatprep.subr.mxu0 0.0
        %739 = vmatpush1.msra.mxu0 0.0
        %740 = vmatprep.subr.mxu0 0.0
        %741 = vmatpush1.msra.mxu0 0.0
        %742 = vmatprep.subr.mxu0 0.0
        %743 = vmatpush1.msra.mxu0 0.0
        %744 = vmatprep.subr.mxu0 0.0
        %745 = vmatpush1.msra.mxu0 0.0
        %746 = vmatprep.subr.mxu0 0.0
        %747 = vmatpush1.msra.mxu0 0.0
        %748 = vmatprep.subr.mxu0 0.0
        %749 = vmatpush1.msra.mxu0 0.0
        %750 = vmatprep.subr.mxu0 0.0
        %751 = vmatpush1.msra.mxu0 0.0
        %752 = vmatprep.subr.mxu0 0.0
        %753 = vmatpush1.msra.mxu0 0.0
        %754 = vmatprep.subr.mxu0 0.0
        %755 = vmatpush1.msra.mxu0 0.0
        %756 = vmatprep.subr.mxu0 0.0
        %757 = vmatpush1.msra.mxu0 0.0
        %758 = vmatprep.subr.mxu0 0.0
        %759 = vmatpush1.msra.mxu0 0.0
        %760 = vmatprep.subr.mxu0 %v275
        %761 = vmatpush1.msra.mxu0 %v273
        %762 = vmatprep.subr.mxu0 0.0
        %763 = vmatpush2.msra.mxu0 0.0
        %764 = vmatprep.subr.mxu0 0.0
        %765 = vmatpush2.msra.mxu0 0.0
        %766 = vmatprep.subr.mxu0 0.0
        %767 = vmatpush2.msra.mxu0 0.0
        %768 = vmatprep.subr.mxu0 0.0
        %769 = vmatpush2.msra.mxu0 0.0
        %770 = vmatprep.subr.mxu0 0.0
        %771 = vmatpush2.msra.mxu0 0.0
        %772 = vmatprep.subr.mxu0 0.0
        %773 = vmatpush2.msra.mxu0 0.0
        %774 = vmatprep.subr.mxu0 0.0
        %775 = vmatpush2.msra.mxu0 0.0
        %776 = vmatprep.subr.mxu0 0.0
        %777 = vmatpush2.msra.mxu0 0.0
        %778 = vmatprep.subr.mxu0 0.0
        %779 = vmatpush2.msra.mxu0 0.0
        %780 = vmatprep.subr.mxu0 0.0
        %781 = vmatpush2.msra.mxu0 0.0
        %782 = vmatprep.subr.mxu0 0.0
        %783 = vmatpush2.msra.mxu0 0.0
        %784 = vmatprep.subr.mxu0 0.0
        %785 = vmatpush2.msra.mxu0 0.0
        %786 = vmatprep.subr.mxu0 0.0
        %787 = vmatpush2.msra.mxu0 0.0
        %788 = vmatprep.subr.mxu0 0.0
        %789 = vmatpush2.msra.mxu0 0.0
        %790 = vmatprep.subr.mxu0 0.0
        %791 = vmatpush2.msra.mxu0 0.0
        %792 = vmatprep.subr.mxu0 0.0
        %793 = vmatpush2.msra.mxu0 0.0
        %794 = vmatprep.mubr.f32.mxu0 0.0
        %795 = vmatmul.mubr.f32.gmra.mxu0 %v241
        %v796 = vpop.f32.mrf.mxu0
        %v797 = vadd.f32 %v206, %v796
        %v798 = vpop.f32.mrf.mxu0
        %v799 = vadd.f32 %v206, %v798
        %800 = vmatprep.mubr.f32.mxu0 0.0
        %801 = vmatmul.mubr.f32.gmra.mxu0 %v244
        %v802 = vpop.f32.mrf.mxu0
        %v803 = vadd.f32 %v211, %v802
        %v804 = vpop.f32.mrf.mxu0
        %v805 = vadd.f32 %v211, %v804
        %806 = vmatprep.mubr.f32.mxu0 0.0
        %807 = vmatmul.mubr.f32.gmra.mxu0 %v247
        %v808 = vpop.f32.mrf.mxu0
        %v809 = vadd.f32 %v216, %v808
        %v810 = vpop.f32.mrf.mxu0
        %v811 = vadd.f32 %v216, %v810
        %812 = vmatprep.mubr.f32.mxu0 0.0
        %813 = vmatmul.mubr.f32.gmra.mxu0 %v250
        %v814 = vpop.f32.mrf.mxu0
        %v815 = vadd.f32 %v221, %v814
        %v816 = vpop.f32.mrf.mxu0
        %v817 = vadd.f32 %v221, %v816
        %818 = vdwg.mxu0
        %819 = vmatprep.subr.mxu0 0.0
        %820 = vmatpush1.msra.mxu0 0.0
        %821 = vmatprep.subr.mxu0 0.0
        %822 = vmatpush1.msra.mxu0 0.0
        %823 = vmatprep.subr.mxu0 0.0
        %824 = vmatpush1.msra.mxu0 0.0
        %825 = vmatprep.subr.mxu0 0.0
        %826 = vmatpush1.msra.mxu0 0.0
        %827 = vmatprep.subr.mxu0 0.0
        %828 = vmatpush1.msra.mxu0 0.0
        %829 = vmatprep.subr.mxu0 0.0
        %830 = vmatpush1.msra.mxu0 0.0
        %831 = vmatprep.subr.mxu0 0.0
        %832 = vmatpush1.msra.mxu0 0.0
        %833 = vmatprep.subr.mxu0 0.0
        %834 = vmatpush1.msra.mxu0 0.0
        %835 = vmatprep.subr.mxu0 0.0
        %836 = vmatpush1.msra.mxu0 0.0
        %837 = vmatprep.subr.mxu0 0.0
        %838 = vmatpush1.msra.mxu0 0.0
        %839 = vmatprep.subr.mxu0 0.0
        %840 = vmatpush1.msra.mxu0 0.0
        %841 = vmatprep.subr.mxu0 0.0
        %842 = vmatpush1.msra.mxu0 0.0
        %843 = vmatprep.subr.mxu0 0.0
        %844 = vmatpush1.msra.mxu0 0.0
        %845 = vmatprep.subr.mxu0 0.0
        %846 = vmatpush1.msra.mxu0 0.0
        %847 = vmatprep.subr.mxu0 0.0
        %848 = vmatpush1.msra.mxu0 0.0
        %849 = vmatprep.subr.mxu0 %v279
        %850 = vmatpush1.msra.mxu0 %v277
        %851 = vmatprep.subr.mxu0 0.0
        %852 = vmatpush2.msra.mxu0 0.0
        %853 = vmatprep.subr.mxu0 0.0
        %854 = vmatpush2.msra.mxu0 0.0
        %855 = vmatprep.subr.mxu0 0.0
        %856 = vmatpush2.msra.mxu0 0.0
        %857 = vmatprep.subr.mxu0 0.0
        %858 = vmatpush2.msra.mxu0 0.0
        %859 = vmatprep.subr.mxu0 0.0
        %860 = vmatpush2.msra.mxu0 0.0
        %861 = vmatprep.subr.mxu0 0.0
        %862 = vmatpush2.msra.mxu0 0.0
        %863 = vmatprep.subr.mxu0 0.0
        %864 = vmatpush2.msra.mxu0 0.0
        %865 = vmatprep.subr.mxu0 0.0
        %866 = vmatpush2.msra.mxu0 0.0
        %867 = vmatprep.subr.mxu0 0.0
        %868 = vmatpush2.msra.mxu0 0.0
        %869 = vmatprep.subr.mxu0 0.0
        %870 = vmatpush2.msra.mxu0 0.0
        %871 = vmatprep.subr.mxu0 0.0
        %872 = vmatpush2.msra.mxu0 0.0
        %873 = vmatprep.subr.mxu0 0.0
        %874 = vmatpush2.msra.mxu0 0.0
        %875 = vmatprep.subr.mxu0 0.0
        %876 = vmatpush2.msra.mxu0 0.0
        %877 = vmatprep.subr.mxu0 0.0
        %878 = vmatpush2.msra.mxu0 0.0
        %879 = vmatprep.subr.mxu0 0.0
        %880 = vmatpush2.msra.mxu0 0.0
        %881 = vmatprep.subr.mxu0 0.0
        %882 = vmatpush2.msra.mxu0 0.0
        %883 = vmatprep.mubr.f32.mxu0 0.0
        %884 = vmatmul.mubr.f32.gmra.mxu0 %v241
        %v885 = vpop.f32.mrf.mxu0
        %v886 = vadd.f32 %v206, %v885
        %v887 = vpop.f32.mrf.mxu0
        %v888 = vadd.f32 %v206, %v887
        %889 = vmatprep.mubr.f32.mxu0 0.0
        %890 = vmatmul.mubr.f32.gmra.mxu0 %v244
        %v891 = vpop.f32.mrf.mxu0
        %v892 = vadd.f32 %v211, %v891
        %v893 = vpop.f32.mrf.mxu0
        %v894 = vadd.f32 %v211, %v893
        %895 = vmatprep.mubr.f32.mxu0 0.0
        %896 = vmatmul.mubr.f32.gmra.mxu0 %v247
        %v897 = vpop.f32.mrf.mxu0
        %v898 = vadd.f32 %v216, %v897
        %v899 = vpop.f32.mrf.mxu0
        %v900 = vadd.f32 %v216, %v899
        %901 = vmatprep.mubr.f32.mxu0 0.0
        %902 = vmatmul.mubr.f32.gmra.mxu0 %v250
        %v903 = vpop.f32.mrf.mxu0
        %v904 = vadd.f32 %v221, %v903
        %v905 = vpop.f32.mrf.mxu0
        %v906 = vadd.f32 %v221, %v905
        %907 = vdwg.mxu0
        %908 = vmatprep.subr.mxu0 0.0
        %909 = vmatpush1.msra.mxu0 0.0
        %910 = vmatprep.subr.mxu0 0.0
        %911 = vmatpush1.msra.mxu0 0.0
        %912 = vmatprep.subr.mxu0 0.0
        %913 = vmatpush1.msra.mxu0 0.0
        %914 = vmatprep.subr.mxu0 0.0
        %915 = vmatpush1.msra.mxu0 0.0
        %916 = vmatprep.subr.mxu0 0.0
        %917 = vmatpush1.msra.mxu0 0.0
        %918 = vmatprep.subr.mxu0 0.0
        %919 = vmatpush1.msra.mxu0 0.0
        %920 = vmatprep.subr.mxu0 0.0
        %921 = vmatpush1.msra.mxu0 0.0
        %922 = vmatprep.subr.mxu0 0.0
        %923 = vmatpush1.msra.mxu0 0.0
        %924 = vmatprep.subr.mxu0 0.0
        %925 = vmatpush1.msra.mxu0 0.0
        %926 = vmatprep.subr.mxu0 0.0
        %927 = vmatpush1.msra.mxu0 0.0
        %928 = vmatprep.subr.mxu0 0.0
        %929 = vmatpush1.msra.mxu0 0.0
        %930 = vmatprep.subr.mxu0 0.0
        %931 = vmatpush1.msra.mxu0 0.0
        %932 = vmatprep.subr.mxu0 0.0
        %933 = vmatpush1.msra.mxu0 0.0
        %934 = vmatprep.subr.mxu0 0.0
        %935 = vmatpush1.msra.mxu0 0.0
        %936 = vmatprep.subr.mxu0 0.0
        %937 = vmatpush1.msra.mxu0 0.0
        %938 = vmatprep.subr.mxu0 %v283
        %939 = vmatpush1.msra.mxu0 %v281
        %940 = vmatprep.subr.mxu0 0.0
        %941 = vmatpush2.msra.mxu0 0.0
        %942 = vmatprep.subr.mxu0 0.0
        %943 = vmatpush2.msra.mxu0 0.0
        %944 = vmatprep.subr.mxu0 0.0
        %945 = vmatpush2.msra.mxu0 0.0
        %946 = vmatprep.subr.mxu0 0.0
        %947 = vmatpush2.msra.mxu0 0.0
        %948 = vmatprep.subr.mxu0 0.0
        %949 = vmatpush2.msra.mxu0 0.0
        %950 = vmatprep.subr.mxu0 0.0
        %951 = vmatpush2.msra.mxu0 0.0
        %952 = vmatprep.subr.mxu0 0.0
        %953 = vmatpush2.msra.mxu0 0.0
        %954 = vmatprep.subr.mxu0 0.0
        %955 = vmatpush2.msra.mxu0 0.0
        %956 = vmatprep.subr.mxu0 0.0
        %957 = vmatpush2.msra.mxu0 0.0
        %958 = vmatprep.subr.mxu0 0.0
        %959 = vmatpush2.msra.mxu0 0.0
        %960 = vmatprep.subr.mxu0 0.0
        %961 = vmatpush2.msra.mxu0 0.0
        %962 = vmatprep.subr.mxu0 0.0
        %963 = vmatpush2.msra.mxu0 0.0
        %964 = vmatprep.subr.mxu0 0.0
        %965 = vmatpush2.msra.mxu0 0.0
        %966 = vmatprep.subr.mxu0 0.0
        %967 = vmatpush2.msra.mxu0 0.0
        %968 = vmatprep.subr.mxu0 0.0
        %969 = vmatpush2.msra.mxu0 0.0
        %970 = vmatprep.subr.mxu0 0.0
        %971 = vmatpush2.msra.mxu0 0.0
        %972 = vmatprep.mubr.f32.mxu0 0.0
        %973 = vmatmul.mubr.f32.gmra.mxu0 %v241
        %v974 = vpop.f32.mrf.mxu0
        %v975 = vadd.f32 %v206, %v974
        %v976 = vpop.f32.mrf.mxu0
        %v977 = vadd.f32 %v206, %v976
        %978 = vmatprep.mubr.f32.mxu0 0.0
        %979 = vmatmul.mubr.f32.gmra.mxu0 %v244
        %v980 = vpop.f32.mrf.mxu0
        %v981 = vadd.f32 %v211, %v980
        %v982 = vpop.f32.mrf.mxu0
        %v983 = vadd.f32 %v211, %v982
        %984 = vmatprep.mubr.f32.mxu0 0.0
        %985 = vmatmul.mubr.f32.gmra.mxu0 %v247
        %v986 = vpop.f32.mrf.mxu0
        %v987 = vadd.f32 %v216, %v986
        %v988 = vpop.f32.mrf.mxu0
        %v989 = vadd.f32 %v216, %v988
        %990 = vmatprep.mubr.f32.mxu0 0.0
        %991 = vmatmul.mubr.f32.gmra.mxu0 %v250
        %v992 = vpop.f32.mrf.mxu0
        %v993 = vadd.f32 %v221, %v992
        %v994 = vpop.f32.mrf.mxu0
        %v995 = vadd.f32 %v221, %v994
        %996 = vdwg.mxu0
        %v997 = vmax.f32 %v352, 0.0
        %v998 = vmax.f32 %v354, 0.0
        %v999 = vmax.f32 %v441, 0.0
        %v1000 = vmax.f32 %v443, 0.0
        %v1001 = vmax.f32 %v530, 0.0
        %v1002 = vmax.f32 %v532, 0.0
        %v1003 = vmax.f32 %v619, 0.0
        %v1004 = vmax.f32 %v621, 0.0
        %v1005 = vmax.f32 %v708, 0.0
        %v1006 = vmax.f32 %v710, 0.0
        %v1007 = vmax.f32 %v797, 0.0
        %v1008 = vmax.f32 %v799, 0.0
        %v1009 = vmax.f32 %v886, 0.0
        %v1010 = vmax.f32 %v888, 0.0
        %v1011 = vmax.f32 %v975, 0.0
        %v1012 = vmax.f32 %v977, 0.0
        %v1013 = vmax.f32 %v358, 0.0
        %v1014 = vmax.f32 %v360, 0.0
        %v1015 = vmax.f32 %v447, 0.0
        %v1016 = vmax.f32 %v449, 0.0
        %v1017 = vmax.f32 %v536, 0.0
        %v1018 = vmax.f32 %v538, 0.0
        %v1019 = vmax.f32 %v625, 0.0
        %v1020 = vmax.f32 %v627, 0.0
        %v1021 = vmax.f32 %v714, 0.0
        %v1022 = vmax.f32 %v716, 0.0
        %v1023 = vmax.f32 %v803, 0.0
        %v1024 = vmax.f32 %v805, 0.0
        %v1025 = vmax.f32 %v892, 0.0
        %v1026 = vmax.f32 %v894, 0.0
        %v1027 = vmax.f32 %v981, 0.0
        %v1028 = vmax.f32 %v983, 0.0
        %v1029 = vmax.f32 %v364, 0.0
        %v1030 = vmax.f32 %v366, 0.0
        %v1031 = vmax.f32 %v453, 0.0
        %v1032 = vmax.f32 %v455, 0.0
        %v1033 = vmax.f32 %v542, 0.0
        %v1034 = vmax.f32 %v544, 0.0
        %v1035 = vmax.f32 %v631, 0.0
        %v1036 = vmax.f32 %v633, 0.0
        %v1037 = vmax.f32 %v720, 0.0
        %v1038 = vmax.f32 %v722, 0.0
        %v1039 = vmax.f32 %v809, 0.0
        %v1040 = vmax.f32 %v811, 0.0
        %v1041 = vmax.f32 %v898, 0.0
        %v1042 = vmax.f32 %v900, 0.0
        %v1043 = vmax.f32 %v987, 0.0
        %v1044 = vmax.f32 %v989, 0.0
        %v1045 = vmax.f32 %v370, 0.0
        %v1046 = vmax.f32 %v372, 0.0
        %v1047 = vmax.f32 %v459, 0.0
        %v1048 = vmax.f32 %v461, 0.0
        %v1049 = vmax.f32 %v548, 0.0
        %v1050 = vmax.f32 %v550, 0.0
        %v1051 = vmax.f32 %v637, 0.0
        %v1052 = vmax.f32 %v639, 0.0
        %v1053 = vmax.f32 %v726, 0.0
        %v1054 = vmax.f32 %v728, 0.0
        %v1055 = vmax.f32 %v815, 0.0
        %v1056 = vmax.f32 %v817, 0.0
        %v1057 = vmax.f32 %v904, 0.0
        %v1058 = vmax.f32 %v906, 0.0
        %v1059 = vmax.f32 %v993, 0.0
        %v1060 = vmax.f32 %v995, 0.0
        %s1061 = scalar_lea.vmem [#allocation2], 32
        %v1062 = vld [vmem:[%s1061] sm:$0xff]
        %v1063 = vld [vmem:[%s1061 + $0x8] sm:$0xff]
        %v1064 = vld [vmem:[%s1061 + $0x10] sm:$0xff]
        %v1065 = vld [vmem:[%s1061 + $0x18] sm:$0xff]
        %s1066 = scalar_lea.vmem %s2, 32
        %v1067 = vld [vmem:[%s1066] sm:$0xff]
        %v1068 = vld [vmem:[%s1066 + $0x8] sm:$0xff]
        %v1069 = vld [vmem:[%s1066 + $0x10] sm:$0xff]
        %v1070 = vld [vmem:[%s1066 + $0x18] sm:$0xff]
        %1072 = vset.pattern.permute.xlu0 0
        %1073 = vperm.xlu0 %1072, %v1067
        %v1074 = vpop.permute.xlu0 %1073
        %1077 = vset.pattern.permute.xlu0 0
        %1078 = vperm.xlu0 %1077, %v1068
        %v1079 = vpop.permute.xlu0 %1078
        %1082 = vset.pattern.permute.xlu0 0
        %1083 = vperm.xlu0 %1082, %v1069
        %v1084 = vpop.permute.xlu0 %1083
        %1087 = vset.pattern.permute.xlu0 0
        %1088 = vperm.xlu0 %1087, %v1070
        %v1089 = vpop.permute.xlu0 %1088
        %vm1091 = vcmask 261120
        %v1093 = vsel %vm1091, %v1062, 0
        %v1096 = vsel %vm1091, %v1063, 0
        %v1099 = vsel %vm1091, %v1064, 0
        %v1102 = vsel %vm1091, %v1065, 0
        %1104 = vmatprep.subr.mxu0 0.0
        %1105 = vmatpush1.msra.mxu0 0.0
        %1106 = vmatprep.subr.mxu0 0.0
        %1107 = vmatpush1.msra.mxu0 0.0
        %1108 = vmatprep.subr.mxu0 0.0
        %1109 = vmatpush1.msra.mxu0 0.0
        %1110 = vmatprep.subr.mxu0 0.0
        %1111 = vmatpush1.msra.mxu0 0.0
        %1112 = vmatprep.subr.mxu0 0.0
        %1113 = vmatpush1.msra.mxu0 0.0
        %1114 = vmatprep.subr.mxu0 0.0
        %1115 = vmatpush1.msra.mxu0 0.0
        %1116 = vmatprep.subr.mxu0 0.0
        %1117 = vmatpush1.msra.mxu0 0.0
        %1118 = vmatprep.subr.mxu0 0.0
        %1119 = vmatpush1.msra.mxu0 0.0
        %1120 = vmatprep.subr.mxu0 0.0
        %1121 = vmatpush1.msra.mxu0 0.0
        %1122 = vmatprep.subr.mxu0 0.0
        %1123 = vmatpush1.msra.mxu0 0.0
        %1124 = vmatprep.subr.mxu0 0.0
        %1125 = vmatpush1.msra.mxu0 0.0
        %1126 = vmatprep.subr.mxu0 0.0
        %1127 = vmatpush1.msra.mxu0 0.0
        %1128 = vmatprep.subr.mxu0 %v1046
        %1129 = vmatpush1.msra.mxu0 %v1045
        %1130 = vmatprep.subr.mxu0 %v1030
        %1131 = vmatpush1.msra.mxu0 %v1029
        %1132 = vmatprep.subr.mxu0 %v1014
        %1133 = vmatpush1.msra.mxu0 %v1013
        %1134 = vmatprep.subr.mxu0 %v998
        %1135 = vmatpush1.msra.mxu0 %v997
        %1136 = vmatprep.subr.mxu0 0.0
        %1137 = vmatpush2.msra.mxu0 0.0
        %1138 = vmatprep.subr.mxu0 0.0
        %1139 = vmatpush2.msra.mxu0 0.0
        %1140 = vmatprep.subr.mxu0 0.0
        %1141 = vmatpush2.msra.mxu0 0.0
        %1142 = vmatprep.subr.mxu0 0.0
        %1143 = vmatpush2.msra.mxu0 0.0
        %1144 = vmatprep.subr.mxu0 0.0
        %1145 = vmatpush2.msra.mxu0 0.0
        %1146 = vmatprep.subr.mxu0 0.0
        %1147 = vmatpush2.msra.mxu0 0.0
        %1148 = vmatprep.subr.mxu0 0.0
        %1149 = vmatpush2.msra.mxu0 0.0
        %1150 = vmatprep.subr.mxu0 0.0
        %1151 = vmatpush2.msra.mxu0 0.0
        %1152 = vmatprep.subr.mxu0 0.0
        %1153 = vmatpush2.msra.mxu0 0.0
        %1154 = vmatprep.subr.mxu0 0.0
        %1155 = vmatpush2.msra.mxu0 0.0
        %1156 = vmatprep.subr.mxu0 0.0
        %1157 = vmatpush2.msra.mxu0 0.0
        %1158 = vmatprep.subr.mxu0 0.0
        %1159 = vmatpush2.msra.mxu0 0.0
        %1160 = vmatprep.subr.mxu0 0.0
        %1161 = vmatpush2.msra.mxu0 0.0
        %1162 = vmatprep.subr.mxu0 0.0
        %1163 = vmatpush2.msra.mxu0 0.0
        %1164 = vmatprep.subr.mxu0 0.0
        %1165 = vmatpush2.msra.mxu0 0.0
        %1166 = vmatprep.subr.mxu0 0.0
        %1167 = vmatpush2.msra.mxu0 0.0
        %1168 = vmatprep.mubr.f32.mxu0 0.0
        %1169 = vmatmul.mubr.f32.gmra.mxu0 %v1093
        %v1170 = vpop.f32.mrf.mxu0
        %v1171 = vadd.f32 %v1074, %v1170
        %v1172 = vpop.f32.mrf.mxu0
        %v1173 = vadd.f32 %v1074, %v1172
        %1174 = vmatprep.mubr.f32.mxu0 0.0
        %1175 = vmatmul.mubr.f32.gmra.mxu0 %v1096
        %v1176 = vpop.f32.mrf.mxu0
        %v1177 = vadd.f32 %v1079, %v1176
        %v1178 = vpop.f32.mrf.mxu0
        %v1179 = vadd.f32 %v1079, %v1178
        %1180 = vmatprep.mubr.f32.mxu0 0.0
        %1181 = vmatmul.mubr.f32.gmra.mxu0 %v1099
        %v1182 = vpop.f32.mrf.mxu0
        %v1183 = vadd.f32 %v1084, %v1182
        %v1184 = vpop.f32.mrf.mxu0
        %v1185 = vadd.f32 %v1084, %v1184
        %1186 = vmatprep.mubr.f32.mxu0 0.0
        %1187 = vmatmul.mubr.f32.gmra.mxu0 %v1102
        %v1188 = vpop.f32.mrf.mxu0
        %v1189 = vadd.f32 %v1089, %v1188
        %v1190 = vpop.f32.mrf.mxu0
        %v1191 = vadd.f32 %v1089, %v1190
        %1192 = vdwg.mxu0
        %1193 = vmatprep.subr.mxu0 0.0
        %1194 = vmatpush1.msra.mxu0 0.0
        %1195 = vmatprep.subr.mxu0 0.0
        %1196 = vmatpush1.msra.mxu0 0.0
        %1197 = vmatprep.subr.mxu0 0.0
        %1198 = vmatpush1.msra.mxu0 0.0
        %1199 = vmatprep.subr.mxu0 0.0
        %1200 = vmatpush1.msra.mxu0 0.0
        %1201 = vmatprep.subr.mxu0 0.0
        %1202 = vmatpush1.msra.mxu0 0.0
        %1203 = vmatprep.subr.mxu0 0.0
        %1204 = vmatpush1.msra.mxu0 0.0
        %1205 = vmatprep.subr.mxu0 0.0
        %1206 = vmatpush1.msra.mxu0 0.0
        %1207 = vmatprep.subr.mxu0 0.0
        %1208 = vmatpush1.msra.mxu0 0.0
        %1209 = vmatprep.subr.mxu0 0.0
        %1210 = vmatpush1.msra.mxu0 0.0
        %1211 = vmatprep.subr.mxu0 0.0
        %1212 = vmatpush1.msra.mxu0 0.0
        %1213 = vmatprep.subr.mxu0 0.0
        %1214 = vmatpush1.msra.mxu0 0.0
        %1215 = vmatprep.subr.mxu0 0.0
        %1216 = vmatpush1.msra.mxu0 0.0
        %1217 = vmatprep.subr.mxu0 %v1048
        %1218 = vmatpush1.msra.mxu0 %v1047
        %1219 = vmatprep.subr.mxu0 %v1032
        %1220 = vmatpush1.msra.mxu0 %v1031
        %1221 = vmatprep.subr.mxu0 %v1016
        %1222 = vmatpush1.msra.mxu0 %v1015
        %1223 = vmatprep.subr.mxu0 %v1000
        %1224 = vmatpush1.msra.mxu0 %v999
        %1225 = vmatprep.subr.mxu0 0.0
        %1226 = vmatpush2.msra.mxu0 0.0
        %1227 = vmatprep.subr.mxu0 0.0
        %1228 = vmatpush2.msra.mxu0 0.0
        %1229 = vmatprep.subr.mxu0 0.0
        %1230 = vmatpush2.msra.mxu0 0.0
        %1231 = vmatprep.subr.mxu0 0.0
        %1232 = vmatpush2.msra.mxu0 0.0
        %1233 = vmatprep.subr.mxu0 0.0
        %1234 = vmatpush2.msra.mxu0 0.0
        %1235 = vmatprep.subr.mxu0 0.0
        %1236 = vmatpush2.msra.mxu0 0.0
        %1237 = vmatprep.subr.mxu0 0.0
        %1238 = vmatpush2.msra.mxu0 0.0
        %1239 = vmatprep.subr.mxu0 0.0
        %1240 = vmatpush2.msra.mxu0 0.0
        %1241 = vmatprep.subr.mxu0 0.0
        %1242 = vmatpush2.msra.mxu0 0.0
        %1243 = vmatprep.subr.mxu0 0.0
        %1244 = vmatpush2.msra.mxu0 0.0
        %1245 = vmatprep.subr.mxu0 0.0
        %1246 = vmatpush2.msra.mxu0 0.0
        %1247 = vmatprep.subr.mxu0 0.0
        %1248 = vmatpush2.msra.mxu0 0.0
        %1249 = vmatprep.subr.mxu0 0.0
        %1250 = vmatpush2.msra.mxu0 0.0
        %1251 = vmatprep.subr.mxu0 0.0
        %1252 = vmatpush2.msra.mxu0 0.0
        %1253 = vmatprep.subr.mxu0 0.0
        %1254 = vmatpush2.msra.mxu0 0.0
        %1255 = vmatprep.subr.mxu0 0.0
        %1256 = vmatpush2.msra.mxu0 0.0
        %1257 = vmatprep.mubr.f32.mxu0 0.0
        %1258 = vmatmul.mubr.f32.gmra.mxu0 %v1093
        %v1259 = vpop.f32.mrf.mxu0
        %v1260 = vadd.f32 %v1074, %v1259
        %v1261 = vpop.f32.mrf.mxu0
        %v1262 = vadd.f32 %v1074, %v1261
        %1263 = vmatprep.mubr.f32.mxu0 0.0
        %1264 = vmatmul.mubr.f32.gmra.mxu0 %v1096
        %v1265 = vpop.f32.mrf.mxu0
        %v1266 = vadd.f32 %v1079, %v1265
        %v1267 = vpop.f32.mrf.mxu0
        %v1268 = vadd.f32 %v1079, %v1267
        %1269 = vmatprep.mubr.f32.mxu0 0.0
        %1270 = vmatmul.mubr.f32.gmra.mxu0 %v1099
        %v1271 = vpop.f32.mrf.mxu0
        %v1272 = vadd.f32 %v1084, %v1271
        %v1273 = vpop.f32.mrf.mxu0
        %v1274 = vadd.f32 %v1084, %v1273
        %1275 = vmatprep.mubr.f32.mxu0 0.0
        %1276 = vmatmul.mubr.f32.gmra.mxu0 %v1102
        %v1277 = vpop.f32.mrf.mxu0
        %v1278 = vadd.f32 %v1089, %v1277
        %v1279 = vpop.f32.mrf.mxu0
        %v1280 = vadd.f32 %v1089, %v1279
        %1281 = vdwg.mxu0
        %1282 = vmatprep.subr.mxu0 0.0
        %1283 = vmatpush1.msra.mxu0 0.0
        %1284 = vmatprep.subr.mxu0 0.0
        %1285 = vmatpush1.msra.mxu0 0.0
        %1286 = vmatprep.subr.mxu0 0.0
        %1287 = vmatpush1.msra.mxu0 0.0
        %1288 = vmatprep.subr.mxu0 0.0
        %1289 = vmatpush1.msra.mxu0 0.0
        %1290 = vmatprep.subr.mxu0 0.0
        %1291 = vmatpush1.msra.mxu0 0.0
        %1292 = vmatprep.subr.mxu0 0.0
        %1293 = vmatpush1.msra.mxu0 0.0
        %1294 = vmatprep.subr.mxu0 0.0
        %1295 = vmatpush1.msra.mxu0 0.0
        %1296 = vmatprep.subr.mxu0 0.0
        %1297 = vmatpush1.msra.mxu0 0.0
        %1298 = vmatprep.subr.mxu0 0.0
        %1299 = vmatpush1.msra.mxu0 0.0
        %1300 = vmatprep.subr.mxu0 0.0
        %1301 = vmatpush1.msra.mxu0 0.0
        %1302 = vmatprep.subr.mxu0 0.0
        %1303 = vmatpush1.msra.mxu0 0.0
        %1304 = vmatprep.subr.mxu0 0.0
        %1305 = vmatpush1.msra.mxu0 0.0
        %1306 = vmatprep.subr.mxu0 %v1050
        %1307 = vmatpush1.msra.mxu0 %v1049
        %1308 = vmatprep.subr.mxu0 %v1034
        %1309 = vmatpush1.msra.mxu0 %v1033
        %1310 = vmatprep.subr.mxu0 %v1018
        %1311 = vmatpush1.msra.mxu0 %v1017
        %1312 = vmatprep.subr.mxu0 %v1002
        %1313 = vmatpush1.msra.mxu0 %v1001
        %1314 = vmatprep.subr.mxu0 0.0
        %1315 = vmatpush2.msra.mxu0 0.0
        %1316 = vmatprep.subr.mxu0 0.0
        %1317 = vmatpush2.msra.mxu0 0.0
        %1318 = vmatprep.subr.mxu0 0.0
        %1319 = vmatpush2.msra.mxu0 0.0
        %1320 = vmatprep.subr.mxu0 0.0
        %1321 = vmatpush2.msra.mxu0 0.0
        %1322 = vmatprep.subr.mxu0 0.0
        %1323 = vmatpush2.msra.mxu0 0.0
        %1324 = vmatprep.subr.mxu0 0.0
        %1325 = vmatpush2.msra.mxu0 0.0
        %1326 = vmatprep.subr.mxu0 0.0
        %1327 = vmatpush2.msra.mxu0 0.0
        %1328 = vmatprep.subr.mxu0 0.0
        %1329 = vmatpush2.msra.mxu0 0.0
        %1330 = vmatprep.subr.mxu0 0.0
        %1331 = vmatpush2.msra.mxu0 0.0
        %1332 = vmatprep.subr.mxu0 0.0
        %1333 = vmatpush2.msra.mxu0 0.0
        %1334 = vmatprep.subr.mxu0 0.0
        %1335 = vmatpush2.msra.mxu0 0.0
        %1336 = vmatprep.subr.mxu0 0.0
        %1337 = vmatpush2.msra.mxu0 0.0
        %1338 = vmatprep.subr.mxu0 0.0
        %1339 = vmatpush2.msra.mxu0 0.0
        %1340 = vmatprep.subr.mxu0 0.0
        %1341 = vmatpush2.msra.mxu0 0.0
        %1342 = vmatprep.subr.mxu0 0.0
        %1343 = vmatpush2.msra.mxu0 0.0
        %1344 = vmatprep.subr.mxu0 0.0
        %1345 = vmatpush2.msra.mxu0 0.0
        %1346 = vmatprep.mubr.f32.mxu0 0.0
        %1347 = vmatmul.mubr.f32.gmra.mxu0 %v1093
        %v1348 = vpop.f32.mrf.mxu0
        %v1349 = vadd.f32 %v1074, %v1348
        %v1350 = vpop.f32.mrf.mxu0
        %v1351 = vadd.f32 %v1074, %v1350
        %1352 = vmatprep.mubr.f32.mxu0 0.0
        %1353 = vmatmul.mubr.f32.gmra.mxu0 %v1096
        %v1354 = vpop.f32.mrf.mxu0
        %v1355 = vadd.f32 %v1079, %v1354
        %v1356 = vpop.f32.mrf.mxu0
        %v1357 = vadd.f32 %v1079, %v1356
        %1358 = vmatprep.mubr.f32.mxu0 0.0
        %1359 = vmatmul.mubr.f32.gmra.mxu0 %v1099
        %v1360 = vpop.f32.mrf.mxu0
        %v1361 = vadd.f32 %v1084, %v1360
        %v1362 = vpop.f32.mrf.mxu0
        %v1363 = vadd.f32 %v1084, %v1362
        %1364 = vmatprep.mubr.f32.mxu0 0.0
        %1365 = vmatmul.mubr.f32.gmra.mxu0 %v1102
        %v1366 = vpop.f32.mrf.mxu0
        %v1367 = vadd.f32 %v1089, %v1366
        %v1368 = vpop.f32.mrf.mxu0
        %v1369 = vadd.f32 %v1089, %v1368
        %1370 = vdwg.mxu0
        %1371 = vmatprep.subr.mxu0 0.0
        %1372 = vmatpush1.msra.mxu0 0.0
        %1373 = vmatprep.subr.mxu0 0.0
        %1374 = vmatpush1.msra.mxu0 0.0
        %1375 = vmatprep.subr.mxu0 0.0
        %1376 = vmatpush1.msra.mxu0 0.0
        %1377 = vmatprep.subr.mxu0 0.0
        %1378 = vmatpush1.msra.mxu0 0.0
        %1379 = vmatprep.subr.mxu0 0.0
        %1380 = vmatpush1.msra.mxu0 0.0
        %1381 = vmatprep.subr.mxu0 0.0
        %1382 = vmatpush1.msra.mxu0 0.0
        %1383 = vmatprep.subr.mxu0 0.0
        %1384 = vmatpush1.msra.mxu0 0.0
        %1385 = vmatprep.subr.mxu0 0.0
        %1386 = vmatpush1.msra.mxu0 0.0
        %1387 = vmatprep.subr.mxu0 0.0
        %1388 = vmatpush1.msra.mxu0 0.0
        %1389 = vmatprep.subr.mxu0 0.0
        %1390 = vmatpush1.msra.mxu0 0.0
        %1391 = vmatprep.subr.mxu0 0.0
        %1392 = vmatpush1.msra.mxu0 0.0
        %1393 = vmatprep.subr.mxu0 0.0
        %1394 = vmatpush1.msra.mxu0 0.0
        %1395 = vmatprep.subr.mxu0 %v1052
        %1396 = vmatpush1.msra.mxu0 %v1051
        %1397 = vmatprep.subr.mxu0 %v1036
        %1398 = vmatpush1.msra.mxu0 %v1035
        %1399 = vmatprep.subr.mxu0 %v1020
        %1400 = vmatpush1.msra.mxu0 %v1019
        %1401 = vmatprep.subr.mxu0 %v1004
        %1402 = vmatpush1.msra.mxu0 %v1003
        %1403 = vmatprep.subr.mxu0 0.0
        %1404 = vmatpush2.msra.mxu0 0.0
        %1405 = vmatprep.subr.mxu0 0.0
        %1406 = vmatpush2.msra.mxu0 0.0
        %1407 = vmatprep.subr.mxu0 0.0
        %1408 = vmatpush2.msra.mxu0 0.0
        %1409 = vmatprep.subr.mxu0 0.0
        %1410 = vmatpush2.msra.mxu0 0.0
        %1411 = vmatprep.subr.mxu0 0.0
        %1412 = vmatpush2.msra.mxu0 0.0
        %1413 = vmatprep.subr.mxu0 0.0
        %1414 = vmatpush2.msra.mxu0 0.0
        %1415 = vmatprep.subr.mxu0 0.0
        %1416 = vmatpush2.msra.mxu0 0.0
        %1417 = vmatprep.subr.mxu0 0.0
        %1418 = vmatpush2.msra.mxu0 0.0
        %1419 = vmatprep.subr.mxu0 0.0
        %1420 = vmatpush2.msra.mxu0 0.0
        %1421 = vmatprep.subr.mxu0 0.0
        %1422 = vmatpush2.msra.mxu0 0.0
        %1423 = vmatprep.subr.mxu0 0.0
        %1424 = vmatpush2.msra.mxu0 0.0
        %1425 = vmatprep.subr.mxu0 0.0
        %1426 = vmatpush2.msra.mxu0 0.0
        %1427 = vmatprep.subr.mxu0 0.0
        %1428 = vmatpush2.msra.mxu0 0.0
        %1429 = vmatprep.subr.mxu0 0.0
        %1430 = vmatpush2.msra.mxu0 0.0
        %1431 = vmatprep.subr.mxu0 0.0
        %1432 = vmatpush2.msra.mxu0 0.0
        %1433 = vmatprep.subr.mxu0 0.0
        %1434 = vmatpush2.msra.mxu0 0.0
        %1435 = vmatprep.mubr.f32.mxu0 0.0
        %1436 = vmatmul.mubr.f32.gmra.mxu0 %v1093
        %v1437 = vpop.f32.mrf.mxu0
        %v1438 = vadd.f32 %v1074, %v1437
        %v1439 = vpop.f32.mrf.mxu0
        %v1440 = vadd.f32 %v1074, %v1439
        %1441 = vmatprep.mubr.f32.mxu0 0.0
        %1442 = vmatmul.mubr.f32.gmra.mxu0 %v1096
        %v1443 = vpop.f32.mrf.mxu0
        %v1444 = vadd.f32 %v1079, %v1443
        %v1445 = vpop.f32.mrf.mxu0
        %v1446 = vadd.f32 %v1079, %v1445
        %1447 = vmatprep.mubr.f32.mxu0 0.0
        %1448 = vmatmul.mubr.f32.gmra.mxu0 %v1099
        %v1449 = vpop.f32.mrf.mxu0
        %v1450 = vadd.f32 %v1084, %v1449
        %v1451 = vpop.f32.mrf.mxu0
        %v1452 = vadd.f32 %v1084, %v1451
        %1453 = vmatprep.mubr.f32.mxu0 0.0
        %1454 = vmatmul.mubr.f32.gmra.mxu0 %v1102
        %v1455 = vpop.f32.mrf.mxu0
        %v1456 = vadd.f32 %v1089, %v1455
        %v1457 = vpop.f32.mrf.mxu0
        %v1458 = vadd.f32 %v1089, %v1457
        %1459 = vdwg.mxu0
        %1460 = vmatprep.subr.mxu0 0.0
        %1461 = vmatpush1.msra.mxu0 0.0
        %1462 = vmatprep.subr.mxu0 0.0
        %1463 = vmatpush1.msra.mxu0 0.0
        %1464 = vmatprep.subr.mxu0 0.0
        %1465 = vmatpush1.msra.mxu0 0.0
        %1466 = vmatprep.subr.mxu0 0.0
        %1467 = vmatpush1.msra.mxu0 0.0
        %1468 = vmatprep.subr.mxu0 0.0
        %1469 = vmatpush1.msra.mxu0 0.0
        %1470 = vmatprep.subr.mxu0 0.0
        %1471 = vmatpush1.msra.mxu0 0.0
        %1472 = vmatprep.subr.mxu0 0.0
        %1473 = vmatpush1.msra.mxu0 0.0
        %1474 = vmatprep.subr.mxu0 0.0
        %1475 = vmatpush1.msra.mxu0 0.0
        %1476 = vmatprep.subr.mxu0 0.0
        %1477 = vmatpush1.msra.mxu0 0.0
        %1478 = vmatprep.subr.mxu0 0.0
        %1479 = vmatpush1.msra.mxu0 0.0
        %1480 = vmatprep.subr.mxu0 0.0
        %1481 = vmatpush1.msra.mxu0 0.0
        %1482 = vmatprep.subr.mxu0 0.0
        %1483 = vmatpush1.msra.mxu0 0.0
        %1484 = vmatprep.subr.mxu0 %v1054
        %1485 = vmatpush1.msra.mxu0 %v1053
        %1486 = vmatprep.subr.mxu0 %v1038
        %1487 = vmatpush1.msra.mxu0 %v1037
        %1488 = vmatprep.subr.mxu0 %v1022
        %1489 = vmatpush1.msra.mxu0 %v1021
        %1490 = vmatprep.subr.mxu0 %v1006
        %1491 = vmatpush1.msra.mxu0 %v1005
        %1492 = vmatprep.subr.mxu0 0.0
        %1493 = vmatpush2.msra.mxu0 0.0
        %1494 = vmatprep.subr.mxu0 0.0
        %1495 = vmatpush2.msra.mxu0 0.0
        %1496 = vmatprep.subr.mxu0 0.0
        %1497 = vmatpush2.msra.mxu0 0.0
        %1498 = vmatprep.subr.mxu0 0.0
        %1499 = vmatpush2.msra.mxu0 0.0
        %1500 = vmatprep.subr.mxu0 0.0
        %1501 = vmatpush2.msra.mxu0 0.0
        %1502 = vmatprep.subr.mxu0 0.0
        %1503 = vmatpush2.msra.mxu0 0.0
        %1504 = vmatprep.subr.mxu0 0.0
        %1505 = vmatpush2.msra.mxu0 0.0
        %1506 = vmatprep.subr.mxu0 0.0
        %1507 = vmatpush2.msra.mxu0 0.0
        %1508 = vmatprep.subr.mxu0 0.0
        %1509 = vmatpush2.msra.mxu0 0.0
        %1510 = vmatprep.subr.mxu0 0.0
        %1511 = vmatpush2.msra.mxu0 0.0
        %1512 = vmatprep.subr.mxu0 0.0
        %1513 = vmatpush2.msra.mxu0 0.0
        %1514 = vmatprep.subr.mxu0 0.0
        %1515 = vmatpush2.msra.mxu0 0.0
        %1516 = vmatprep.subr.mxu0 0.0
        %1517 = vmatpush2.msra.mxu0 0.0
        %1518 = vmatprep.subr.mxu0 0.0
        %1519 = vmatpush2.msra.mxu0 0.0
        %1520 = vmatprep.subr.mxu0 0.0
        %1521 = vmatpush2.msra.mxu0 0.0
        %1522 = vmatprep.subr.mxu0 0.0
        %1523 = vmatpush2.msra.mxu0 0.0
        %1524 = vmatprep.mubr.f32.mxu0 0.0
        %1525 = vmatmul.mubr.f32.gmra.mxu0 %v1093
        %v1526 = vpop.f32.mrf.mxu0
        %v1527 = vadd.f32 %v1074, %v1526
        %v1528 = vpop.f32.mrf.mxu0
        %v1529 = vadd.f32 %v1074, %v1528
        %1530 = vmatprep.mubr.f32.mxu0 0.0
        %1531 = vmatmul.mubr.f32.gmra.mxu0 %v1096
        %v1532 = vpop.f32.mrf.mxu0
        %v1533 = vadd.f32 %v1079, %v1532
        %v1534 = vpop.f32.mrf.mxu0
        %v1535 = vadd.f32 %v1079, %v1534
        %1536 = vmatprep.mubr.f32.mxu0 0.0
        %1537 = vmatmul.mubr.f32.gmra.mxu0 %v1099
        %v1538 = vpop.f32.mrf.mxu0
        %v1539 = vadd.f32 %v1084, %v1538
        %v1540 = vpop.f32.mrf.mxu0
        %v1541 = vadd.f32 %v1084, %v1540
        %1542 = vmatprep.mubr.f32.mxu0 0.0
        %1543 = vmatmul.mubr.f32.gmra.mxu0 %v1102
        %v1544 = vpop.f32.mrf.mxu0
        %v1545 = vadd.f32 %v1089, %v1544
        %v1546 = vpop.f32.mrf.mxu0
        %v1547 = vadd.f32 %v1089, %v1546
        %1548 = vdwg.mxu0
        %1549 = vmatprep.subr.mxu0 0.0
        %1550 = vmatpush1.msra.mxu0 0.0
        %1551 = vmatprep.subr.mxu0 0.0
        %1552 = vmatpush1.msra.mxu0 0.0
        %1553 = vmatprep.subr.mxu0 0.0
        %1554 = vmatpush1.msra.mxu0 0.0
        %1555 = vmatprep.subr.mxu0 0.0
        %1556 = vmatpush1.msra.mxu0 0.0
        %1557 = vmatprep.subr.mxu0 0.0
        %1558 = vmatpush1.msra.mxu0 0.0
        %1559 = vmatprep.subr.mxu0 0.0
        %1560 = vmatpush1.msra.mxu0 0.0
        %1561 = vmatprep.subr.mxu0 0.0
        %1562 = vmatpush1.msra.mxu0 0.0
        %1563 = vmatprep.subr.mxu0 0.0
        %1564 = vmatpush1.msra.mxu0 0.0
        %1565 = vmatprep.subr.mxu0 0.0
        %1566 = vmatpush1.msra.mxu0 0.0
        %1567 = vmatprep.subr.mxu0 0.0
        %1568 = vmatpush1.msra.mxu0 0.0
        %1569 = vmatprep.subr.mxu0 0.0
        %1570 = vmatpush1.msra.mxu0 0.0
        %1571 = vmatprep.subr.mxu0 0.0
        %1572 = vmatpush1.msra.mxu0 0.0
        %1573 = vmatprep.subr.mxu0 %v1056
        %1574 = vmatpush1.msra.mxu0 %v1055
        %1575 = vmatprep.subr.mxu0 %v1040
        %1576 = vmatpush1.msra.mxu0 %v1039
        %1577 = vmatprep.subr.mxu0 %v1024
        %1578 = vmatpush1.msra.mxu0 %v1023
        %1579 = vmatprep.subr.mxu0 %v1008
        %1580 = vmatpush1.msra.mxu0 %v1007
        %1581 = vmatprep.subr.mxu0 0.0
        %1582 = vmatpush2.msra.mxu0 0.0
        %1583 = vmatprep.subr.mxu0 0.0
        %1584 = vmatpush2.msra.mxu0 0.0
        %1585 = vmatprep.subr.mxu0 0.0
        %1586 = vmatpush2.msra.mxu0 0.0
        %1587 = vmatprep.subr.mxu0 0.0
        %1588 = vmatpush2.msra.mxu0 0.0
        %1589 = vmatprep.subr.mxu0 0.0
        %1590 = vmatpush2.msra.mxu0 0.0
        %1591 = vmatprep.subr.mxu0 0.0
        %1592 = vmatpush2.msra.mxu0 0.0
        %1593 = vmatprep.subr.mxu0 0.0
        %1594 = vmatpush2.msra.mxu0 0.0
        %1595 = vmatprep.subr.mxu0 0.0
        %1596 = vmatpush2.msra.mxu0 0.0
        %1597 = vmatprep.subr.mxu0 0.0
        %1598 = vmatpush2.msra.mxu0 0.0
        %1599 = vmatprep.subr.mxu0 0.0
        %1600 = vmatpush2.msra.mxu0 0.0
        %1601 = vmatprep.subr.mxu0 0.0
        %1602 = vmatpush2.msra.mxu0 0.0
        %1603 = vmatprep.subr.mxu0 0.0
        %1604 = vmatpush2.msra.mxu0 0.0
        %1605 = vmatprep.subr.mxu0 0.0
        %1606 = vmatpush2.msra.mxu0 0.0
        %1607 = vmatprep.subr.mxu0 0.0
        %1608 = vmatpush2.msra.mxu0 0.0
        %1609 = vmatprep.subr.mxu0 0.0
        %1610 = vmatpush2.msra.mxu0 0.0
        %1611 = vmatprep.subr.mxu0 0.0
        %1612 = vmatpush2.msra.mxu0 0.0
        %1613 = vmatprep.mubr.f32.mxu0 0.0
        %1614 = vmatmul.mubr.f32.gmra.mxu0 %v1093
        %v1615 = vpop.f32.mrf.mxu0
        %v1616 = vadd.f32 %v1074, %v1615
        %v1617 = vpop.f32.mrf.mxu0
        %v1618 = vadd.f32 %v1074, %v1617
        %1619 = vmatprep.mubr.f32.mxu0 0.0
        %1620 = vmatmul.mubr.f32.gmra.mxu0 %v1096
        %v1621 = vpop.f32.mrf.mxu0
        %v1622 = vadd.f32 %v1079, %v1621
        %v1623 = vpop.f32.mrf.mxu0
        %v1624 = vadd.f32 %v1079, %v1623
        %1625 = vmatprep.mubr.f32.mxu0 0.0
        %1626 = vmatmul.mubr.f32.gmra.mxu0 %v1099
        %v1627 = vpop.f32.mrf.mxu0
        %v1628 = vadd.f32 %v1084, %v1627
        %v1629 = vpop.f32.mrf.mxu0
        %v1630 = vadd.f32 %v1084, %v1629
        %1631 = vmatprep.mubr.f32.mxu0 0.0
        %1632 = vmatmul.mubr.f32.gmra.mxu0 %v1102
        %v1633 = vpop.f32.mrf.mxu0
        %v1634 = vadd.f32 %v1089, %v1633
        %v1635 = vpop.f32.mrf.mxu0
        %v1636 = vadd.f32 %v1089, %v1635
        %1637 = vdwg.mxu0
        %1638 = vmatprep.subr.mxu0 0.0
        %1639 = vmatpush1.msra.mxu0 0.0
        %1640 = vmatprep.subr.mxu0 0.0
        %1641 = vmatpush1.msra.mxu0 0.0
        %1642 = vmatprep.subr.mxu0 0.0
        %1643 = vmatpush1.msra.mxu0 0.0
        %1644 = vmatprep.subr.mxu0 0.0
        %1645 = vmatpush1.msra.mxu0 0.0
        %1646 = vmatprep.subr.mxu0 0.0
        %1647 = vmatpush1.msra.mxu0 0.0
        %1648 = vmatprep.subr.mxu0 0.0
        %1649 = vmatpush1.msra.mxu0 0.0
        %1650 = vmatprep.subr.mxu0 0.0
        %1651 = vmatpush1.msra.mxu0 0.0
        %1652 = vmatprep.subr.mxu0 0.0
        %1653 = vmatpush1.msra.mxu0 0.0
        %1654 = vmatprep.subr.mxu0 0.0
        %1655 = vmatpush1.msra.mxu0 0.0
        %1656 = vmatprep.subr.mxu0 0.0
        %1657 = vmatpush1.msra.mxu0 0.0
        %1658 = vmatprep.subr.mxu0 0.0
        %1659 = vmatpush1.msra.mxu0 0.0
        %1660 = vmatprep.subr.mxu0 0.0
        %1661 = vmatpush1.msra.mxu0 0.0
        %1662 = vmatprep.subr.mxu0 %v1058
        %1663 = vmatpush1.msra.mxu0 %v1057
        %1664 = vmatprep.subr.mxu0 %v1042
        %1665 = vmatpush1.msra.mxu0 %v1041
        %1666 = vmatprep.subr.mxu0 %v1026
        %1667 = vmatpush1.msra.mxu0 %v1025
        %1668 = vmatprep.subr.mxu0 %v1010
        %1669 = vmatpush1.msra.mxu0 %v1009
        %1670 = vmatprep.subr.mxu0 0.0
        %1671 = vmatpush2.msra.mxu0 0.0
        %1672 = vmatprep.subr.mxu0 0.0
        %1673 = vmatpush2.msra.mxu0 0.0
        %1674 = vmatprep.subr.mxu0 0.0
        %1675 = vmatpush2.msra.mxu0 0.0
        %1676 = vmatprep.subr.mxu0 0.0
        %1677 = vmatpush2.msra.mxu0 0.0
        %1678 = vmatprep.subr.mxu0 0.0
        %1679 = vmatpush2.msra.mxu0 0.0
        %1680 = vmatprep.subr.mxu0 0.0
        %1681 = vmatpush2.msra.mxu0 0.0
        %1682 = vmatprep.subr.mxu0 0.0
        %1683 = vmatpush2.msra.mxu0 0.0
        %1684 = vmatprep.subr.mxu0 0.0
        %1685 = vmatpush2.msra.mxu0 0.0
        %1686 = vmatprep.subr.mxu0 0.0
        %1687 = vmatpush2.msra.mxu0 0.0
        %1688 = vmatprep.subr.mxu0 0.0
        %1689 = vmatpush2.msra.mxu0 0.0
        %1690 = vmatprep.subr.mxu0 0.0
        %1691 = vmatpush2.msra.mxu0 0.0
        %1692 = vmatprep.subr.mxu0 0.0
        %1693 = vmatpush2.msra.mxu0 0.0
        %1694 = vmatprep.subr.mxu0 0.0
        %1695 = vmatpush2.msra.mxu0 0.0
        %1696 = vmatprep.subr.mxu0 0.0
        %1697 = vmatpush2.msra.mxu0 0.0
        %1698 = vmatprep.subr.mxu0 0.0
        %1699 = vmatpush2.msra.mxu0 0.0
        %1700 = vmatprep.subr.mxu0 0.0
        %1701 = vmatpush2.msra.mxu0 0.0
        %1702 = vmatprep.mubr.f32.mxu0 0.0
        %1703 = vmatmul.mubr.f32.gmra.mxu0 %v1093
        %v1704 = vpop.f32.mrf.mxu0
        %v1705 = vadd.f32 %v1074, %v1704
        %v1706 = vpop.f32.mrf.mxu0
        %v1707 = vadd.f32 %v1074, %v1706
        %1708 = vmatprep.mubr.f32.mxu0 0.0
        %1709 = vmatmul.mubr.f32.gmra.mxu0 %v1096
        %v1710 = vpop.f32.mrf.mxu0
        %v1711 = vadd.f32 %v1079, %v1710
        %v1712 = vpop.f32.mrf.mxu0
        %v1713 = vadd.f32 %v1079, %v1712
        %1714 = vmatprep.mubr.f32.mxu0 0.0
        %1715 = vmatmul.mubr.f32.gmra.mxu0 %v1099
        %v1716 = vpop.f32.mrf.mxu0
        %v1717 = vadd.f32 %v1084, %v1716
        %v1718 = vpop.f32.mrf.mxu0
        %v1719 = vadd.f32 %v1084, %v1718
        %1720 = vmatprep.mubr.f32.mxu0 0.0
        %1721 = vmatmul.mubr.f32.gmra.mxu0 %v1102
        %v1722 = vpop.f32.mrf.mxu0
        %v1723 = vadd.f32 %v1089, %v1722
        %v1724 = vpop.f32.mrf.mxu0
        %v1725 = vadd.f32 %v1089, %v1724
        %1726 = vdwg.mxu0
        %1727 = vmatprep.subr.mxu0 0.0
        %1728 = vmatpush1.msra.mxu0 0.0
        %1729 = vmatprep.subr.mxu0 0.0
        %1730 = vmatpush1.msra.mxu0 0.0
        %1731 = vmatprep.subr.mxu0 0.0
        %1732 = vmatpush1.msra.mxu0 0.0
        %1733 = vmatprep.subr.mxu0 0.0
        %1734 = vmatpush1.msra.mxu0 0.0
        %1735 = vmatprep.subr.mxu0 0.0
        %1736 = vmatpush1.msra.mxu0 0.0
        %1737 = vmatprep.subr.mxu0 0.0
        %1738 = vmatpush1.msra.mxu0 0.0
        %1739 = vmatprep.subr.mxu0 0.0
        %1740 = vmatpush1.msra.mxu0 0.0
        %1741 = vmatprep.subr.mxu0 0.0
        %1742 = vmatpush1.msra.mxu0 0.0
        %1743 = vmatprep.subr.mxu0 0.0
        %1744 = vmatpush1.msra.mxu0 0.0
        %1745 = vmatprep.subr.mxu0 0.0
        %1746 = vmatpush1.msra.mxu0 0.0
        %1747 = vmatprep.subr.mxu0 0.0
        %1748 = vmatpush1.msra.mxu0 0.0
        %1749 = vmatprep.subr.mxu0 0.0
        %1750 = vmatpush1.msra.mxu0 0.0
        %1751 = vmatprep.subr.mxu0 %v1060
        %1752 = vmatpush1.msra.mxu0 %v1059
        %1753 = vmatprep.subr.mxu0 %v1044
        %1754 = vmatpush1.msra.mxu0 %v1043
        %1755 = vmatprep.subr.mxu0 %v1028
        %1756 = vmatpush1.msra.mxu0 %v1027
        %1757 = vmatprep.subr.mxu0 %v1012
        %1758 = vmatpush1.msra.mxu0 %v1011
        %1759 = vmatprep.subr.mxu0 0.0
        %1760 = vmatpush2.msra.mxu0 0.0
        %1761 = vmatprep.subr.mxu0 0.0
        %1762 = vmatpush2.msra.mxu0 0.0
        %1763 = vmatprep.subr.mxu0 0.0
        %1764 = vmatpush2.msra.mxu0 0.0
        %1765 = vmatprep.subr.mxu0 0.0
        %1766 = vmatpush2.msra.mxu0 0.0
        %1767 = vmatprep.subr.mxu0 0.0
        %1768 = vmatpush2.msra.mxu0 0.0
        %1769 = vmatprep.subr.mxu0 0.0
        %1770 = vmatpush2.msra.mxu0 0.0
        %1771 = vmatprep.subr.mxu0 0.0
        %1772 = vmatpush2.msra.mxu0 0.0
        %1773 = vmatprep.subr.mxu0 0.0
        %1774 = vmatpush2.msra.mxu0 0.0
        %1775 = vmatprep.subr.mxu0 0.0
        %1776 = vmatpush2.msra.mxu0 0.0
        %1777 = vmatprep.subr.mxu0 0.0
        %1778 = vmatpush2.msra.mxu0 0.0
        %1779 = vmatprep.subr.mxu0 0.0
        %1780 = vmatpush2.msra.mxu0 0.0
        %1781 = vmatprep.subr.mxu0 0.0
        %1782 = vmatpush2.msra.mxu0 0.0
        %1783 = vmatprep.subr.mxu0 0.0
        %1784 = vmatpush2.msra.mxu0 0.0
        %1785 = vmatprep.subr.mxu0 0.0
        %1786 = vmatpush2.msra.mxu0 0.0
        %1787 = vmatprep.subr.mxu0 0.0
        %1788 = vmatpush2.msra.mxu0 0.0
        %1789 = vmatprep.subr.mxu0 0.0
        %1790 = vmatpush2.msra.mxu0 0.0
        %1791 = vmatprep.mubr.f32.mxu0 0.0
        %1792 = vmatmul.mubr.f32.gmra.mxu0 %v1093
        %v1793 = vpop.f32.mrf.mxu0
        %v1794 = vadd.f32 %v1074, %v1793
        %v1795 = vpop.f32.mrf.mxu0
        %v1796 = vadd.f32 %v1074, %v1795
        %1797 = vmatprep.mubr.f32.mxu0 0.0
        %1798 = vmatmul.mubr.f32.gmra.mxu0 %v1096
        %v1799 = vpop.f32.mrf.mxu0
        %v1800 = vadd.f32 %v1079, %v1799
        %v1801 = vpop.f32.mrf.mxu0
        %v1802 = vadd.f32 %v1079, %v1801
        %1803 = vmatprep.mubr.f32.mxu0 0.0
        %1804 = vmatmul.mubr.f32.gmra.mxu0 %v1099
        %v1805 = vpop.f32.mrf.mxu0
        %v1806 = vadd.f32 %v1084, %v1805
        %v1807 = vpop.f32.mrf.mxu0
        %v1808 = vadd.f32 %v1084, %v1807
        %1809 = vmatprep.mubr.f32.mxu0 0.0
        %1810 = vmatmul.mubr.f32.gmra.mxu0 %v1102
        %v1811 = vpop.f32.mrf.mxu0
        %v1812 = vadd.f32 %v1089, %v1811
        %v1813 = vpop.f32.mrf.mxu0
        %v1814 = vadd.f32 %v1089, %v1813
        %1815 = vdwg.mxu0
        %v1816 = vmul.f32 %v1171, 0.5
        %v1817 = vmul.f32 %v1173, 0.5
        %v1818 = vmul.f32 %v1260, 0.5
        %v1819 = vmul.f32 %v1262, 0.5
        %v1820 = vmul.f32 %v1349, 0.5
        %v1821 = vmul.f32 %v1351, 0.5
        %v1822 = vmul.f32 %v1438, 0.5
        %v1823 = vmul.f32 %v1440, 0.5
        %v1824 = vmul.f32 %v1527, 0.5
        %v1825 = vmul.f32 %v1529, 0.5
        %v1826 = vmul.f32 %v1616, 0.5
        %v1827 = vmul.f32 %v1618, 0.5
        %v1828 = vmul.f32 %v1705, 0.5
        %v1829 = vmul.f32 %v1707, 0.5
        %v1830 = vmul.f32 %v1794, 0.5
        %v1831 = vmul.f32 %v1796, 0.5
        %v1832 = vmul.f32 %v1177, 0.5
        %v1833 = vmul.f32 %v1179, 0.5
        %v1834 = vmul.f32 %v1266, 0.5
        %v1835 = vmul.f32 %v1268, 0.5
        %v1836 = vmul.f32 %v1355, 0.5
        %v1837 = vmul.f32 %v1357, 0.5
        %v1838 = vmul.f32 %v1444, 0.5
        %v1839 = vmul.f32 %v1446, 0.5
        %v1840 = vmul.f32 %v1533, 0.5
        %v1841 = vmul.f32 %v1535, 0.5
        %v1842 = vmul.f32 %v1622, 0.5
        %v1843 = vmul.f32 %v1624, 0.5
        %v1844 = vmul.f32 %v1711, 0.5
        %v1845 = vmul.f32 %v1713, 0.5
        %v1846 = vmul.f32 %v1800, 0.5
        %v1847 = vmul.f32 %v1802, 0.5
        %v1848 = vmul.f32 %v1183, 0.5
        %v1849 = vmul.f32 %v1185, 0.5
        %v1850 = vmul.f32 %v1272, 0.5
        %v1851 = vmul.f32 %v1274, 0.5
        %v1852 = vmul.f32 %v1361, 0.5
        %v1853 = vmul.f32 %v1363, 0.5
        %v1854 = vmul.f32 %v1450, 0.5
        %v1855 = vmul.f32 %v1452, 0.5
        %v1856 = vmul.f32 %v1539, 0.5
        %v1857 = vmul.f32 %v1541, 0.5
        %v1858 = vmul.f32 %v1628, 0.5
        %v1859 = vmul.f32 %v1630, 0.5
        %v1860 = vmul.f32 %v1717, 0.5
        %v1861 = vmul.f32 %v1719, 0.5
        %v1862 = vmul.f32 %v1806, 0.5
        %v1863 = vmul.f32 %v1808, 0.5
        %v1864 = vmul.f32 %v1189, 0.5
        %v1865 = vmul.f32 %v1191, 0.5
        %v1866 = vmul.f32 %v1278, 0.5
        %v1867 = vmul.f32 %v1280, 0.5
        %v1868 = vmul.f32 %v1367, 0.5
        %v1869 = vmul.f32 %v1369, 0.5
        %v1870 = vmul.f32 %v1456, 0.5
        %v1871 = vmul.f32 %v1458, 0.5
        %v1872 = vmul.f32 %v1545, 0.5
        %v1873 = vmul.f32 %v1547, 0.5
        %v1874 = vmul.f32 %v1634, 0.5
        %v1875 = vmul.f32 %v1636, 0.5
        %v1876 = vmul.f32 %v1723, 0.5
        %v1877 = vmul.f32 %v1725, 0.5
        %v1878 = vmul.f32 %v1812, 0.5
        %v1879 = vmul.f32 %v1814, 0.5
        %v1880 = vmul.f32 %v1171, 0.70710677
        %v1881 = vmul.f32 %v1173, 0.70710677
        %v1882 = vmul.f32 %v1260, 0.70710677
        %v1883 = vmul.f32 %v1262, 0.70710677
        %v1884 = vmul.f32 %v1349, 0.70710677
        %v1885 = vmul.f32 %v1351, 0.70710677
        %v1886 = vmul.f32 %v1438, 0.70710677
        %v1887 = vmul.f32 %v1440, 0.70710677
        %v1888 = vmul.f32 %v1527, 0.70710677
        %v1889 = vmul.f32 %v1529, 0.70710677
        %v1890 = vmul.f32 %v1616, 0.70710677
        %v1891 = vmul.f32 %v1618, 0.70710677
        %v1892 = vmul.f32 %v1705, 0.70710677
        %v1893 = vmul.f32 %v1707, 0.70710677
        %v1894 = vmul.f32 %v1794, 0.70710677
        %v1895 = vmul.f32 %v1796, 0.70710677
        %v1896 = vmul.f32 %v1177, 0.70710677
        %v1897 = vmul.f32 %v1179, 0.70710677
        %v1898 = vmul.f32 %v1266, 0.70710677
        %v1899 = vmul.f32 %v1268, 0.70710677
        %v1900 = vmul.f32 %v1355, 0.70710677
        %v1901 = vmul.f32 %v1357, 0.70710677
        %v1902 = vmul.f32 %v1444, 0.70710677
        %v1903 = vmul.f32 %v1446, 0.70710677
        %v1904 = vmul.f32 %v1533, 0.70710677
        %v1905 = vmul.f32 %v1535, 0.70710677
        %v1906 = vmul.f32 %v1622, 0.70710677
        %v1907 = vmul.f32 %v1624, 0.70710677
        %v1908 = vmul.f32 %v1711, 0.70710677
        %v1909 = vmul.f32 %v1713, 0.70710677
        %v1910 = vmul.f32 %v1800, 0.70710677
        %v1911 = vmul.f32 %v1802, 0.70710677
        %v1912 = vmul.f32 %v1183, 0.70710677
        %v1913 = vmul.f32 %v1185, 0.70710677
        %v1914 = vmul.f32 %v1272, 0.70710677
        %v1915 = vmul.f32 %v1274, 0.70710677
        %v1916 = vmul.f32 %v1361, 0.70710677
        %v1917 = vmul.f32 %v1363, 0.70710677
        %v1918 = vmul.f32 %v1450, 0.70710677
        %v1919 = vmul.f32 %v1452, 0.70710677
        %v1920 = vmul.f32 %v1539, 0.70710677
        %v1921 = vmul.f32 %v1541, 0.70710677
        %v1922 = vmul.f32 %v1628, 0.70710677
        %v1923 = vmul.f32 %v1630, 0.70710677
        %v1924 = vmul.f32 %v1717, 0.70710677
        %v1925 = vmul.f32 %v1719, 0.70710677
        %v1926 = vmul.f32 %v1806, 0.70710677
        %v1927 = vmul.f32 %v1808, 0.70710677
        %v1928 = vmul.f32 %v1189, 0.70710677
        %v1929 = vmul.f32 %v1191, 0.70710677
        %v1930 = vmul.f32 %v1278, 0.70710677
        %v1931 = vmul.f32 %v1280, 0.70710677
        %v1932 = vmul.f32 %v1367, 0.70710677
        %v1933 = vmul.f32 %v1369, 0.70710677
        %v1934 = vmul.f32 %v1456, 0.70710677
        %v1935 = vmul.f32 %v1458, 0.70710677
        %v1936 = vmul.f32 %v1545, 0.70710677
        %v1937 = vmul.f32 %v1547, 0.70710677
        %v1938 = vmul.f32 %v1634, 0.70710677
        %v1939 = vmul.f32 %v1636, 0.70710677
        %v1940 = vmul.f32 %v1723, 0.70710677
        %v1941 = vmul.f32 %v1725, 0.70710677
        %v1942 = vmul.f32 %v1812, 0.70710677
        %v1943 = vmul.f32 %v1814, 0.70710677
        %v1944 = verf.f32.pop %v1880
        %v1945 = verf.f32.pop %v1881
        %v1946 = verf.f32.pop %v1882
        %v1947 = verf.f32.pop %v1883
        %v1948 = verf.f32.pop %v1884
        %v1949 = verf.f32.pop %v1885
        %v1950 = verf.f32.pop %v1886
        %v1951 = verf.f32.pop %v1887
        %v1952 = verf.f32.pop %v1888
        %v1953 = verf.f32.pop %v1889
        %v1954 = verf.f32.pop %v1890
        %v1955 = verf.f32.pop %v1891
        %v1956 = verf.f32.pop %v1892
        %v1957 = verf.f32.pop %v1893
        %v1958 = verf.f32.pop %v1894
        %v1959 = verf.f32.pop %v1895
        %v1960 = verf.f32.pop %v1896
        %v1961 = verf.f32.pop %v1897
        %v1962 = verf.f32.pop %v1898
        %v1963 = verf.f32.pop %v1899
        %v1964 = verf.f32.pop %v1900
        %v1965 = verf.f32.pop %v1901
        %v1966 = verf.f32.pop %v1902
        %v1967 = verf.f32.pop %v1903
        %v1968 = verf.f32.pop %v1904
        %v1969 = verf.f32.pop %v1905
        %v1970 = verf.f32.pop %v1906
        %v1971 = verf.f32.pop %v1907
        %v1972 = verf.f32.pop %v1908
        %v1973 = verf.f32.pop %v1909
        %v1974 = verf.f32.pop %v1910
        %v1975 = verf.f32.pop %v1911
        %v1976 = verf.f32.pop %v1912
        %v1977 = verf.f32.pop %v1913
        %v1978 = verf.f32.pop %v1914
        %v1979 = verf.f32.pop %v1915
        %v1980 = verf.f32.pop %v1916
        %v1981 = verf.f32.pop %v1917
        %v1982 = verf.f32.pop %v1918
        %v1983 = verf.f32.pop %v1919
        %v1984 = verf.f32.pop %v1920
        %v1985 = verf.f32.pop %v1921
        %v1986 = verf.f32.pop %v1922
        %v1987 = verf.f32.pop %v1923
        %v1988 = verf.f32.pop %v1924
        %v1989 = verf.f32.pop %v1925
        %v1990 = verf.f32.pop %v1926
        %v1991 = verf.f32.pop %v1927
        %v1992 = verf.f32.pop %v1928
        %v1993 = verf.f32.pop %v1929
        %v1994 = verf.f32.pop %v1930
        %v1995 = verf.f32.pop %v1931
        %v1996 = verf.f32.pop %v1932
        %v1997 = verf.f32.pop %v1933
        %v1998 = verf.f32.pop %v1934
        %v1999 = verf.f32.pop %v1935
        %v2000 = verf.f32.pop %v1936
        %v2001 = verf.f32.pop %v1937
        %v2002 = verf.f32.pop %v1938
        %v2003 = verf.f32.pop %v1939
        %v2004 = verf.f32.pop %v1940
        %v2005 = verf.f32.pop %v1941
        %v2006 = verf.f32.pop %v1942
        %v2007 = verf.f32.pop %v1943
        %v2008 = vadd.f32 %v1944, 1.0
        %v2009 = vadd.f32 %v1945, 1.0
        %v2010 = vadd.f32 %v1946, 1.0
        %v2011 = vadd.f32 %v1947, 1.0
        %v2012 = vadd.f32 %v1948, 1.0
        %v2013 = vadd.f32 %v1949, 1.0
        %v2014 = vadd.f32 %v1950, 1.0
        %v2015 = vadd.f32 %v1951, 1.0
        %v2016 = vadd.f32 %v1952, 1.0
        %v2017 = vadd.f32 %v1953, 1.0
        %v2018 = vadd.f32 %v1954, 1.0
        %v2019 = vadd.f32 %v1955, 1.0
        %v2020 = vadd.f32 %v1956, 1.0
        %v2021 = vadd.f32 %v1957, 1.0
        %v2022 = vadd.f32 %v1958, 1.0
        %v2023 = vadd.f32 %v1959, 1.0
        %v2024 = vadd.f32 %v1960, 1.0
        %v2025 = vadd.f32 %v1961, 1.0
        %v2026 = vadd.f32 %v1962, 1.0
        %v2027 = vadd.f32 %v1963, 1.0
        %v2028 = vadd.f32 %v1964, 1.0
        %v2029 = vadd.f32 %v1965, 1.0
        %v2030 = vadd.f32 %v1966, 1.0
        %v2031 = vadd.f32 %v1967, 1.0
        %v2032 = vadd.f32 %v1968, 1.0
        %v2033 = vadd.f32 %v1969, 1.0
        %v2034 = vadd.f32 %v1970, 1.0
        %v2035 = vadd.f32 %v1971, 1.0
        %v2036 = vadd.f32 %v1972, 1.0
        %v2037 = vadd.f32 %v1973, 1.0
        %v2038 = vadd.f32 %v1974, 1.0
        %v2039 = vadd.f32 %v1975, 1.0
        %v2040 = vadd.f32 %v1976, 1.0
        %v2041 = vadd.f32 %v1977, 1.0
        %v2042 = vadd.f32 %v1978, 1.0
        %v2043 = vadd.f32 %v1979, 1.0
        %v2044 = vadd.f32 %v1980, 1.0
        %v2045 = vadd.f32 %v1981, 1.0
        %v2046 = vadd.f32 %v1982, 1.0
        %v2047 = vadd.f32 %v1983, 1.0
        %v2048 = vadd.f32 %v1984, 1.0
        %v2049 = vadd.f32 %v1985, 1.0
        %v2050 = vadd.f32 %v1986, 1.0
        %v2051 = vadd.f32 %v1987, 1.0
        %v2052 = vadd.f32 %v1988, 1.0
        %v2053 = vadd.f32 %v1989, 1.0
        %v2054 = vadd.f32 %v1990, 1.0
        %v2055 = vadd.f32 %v1991, 1.0
        %v2056 = vadd.f32 %v1992, 1.0
        %v2057 = vadd.f32 %v1993, 1.0
        %v2058 = vadd.f32 %v1994, 1.0
        %v2059 = vadd.f32 %v1995, 1.0
        %v2060 = vadd.f32 %v1996, 1.0
        %v2061 = vadd.f32 %v1997, 1.0
        %v2062 = vadd.f32 %v1998, 1.0
        %v2063 = vadd.f32 %v1999, 1.0
        %v2064 = vadd.f32 %v2000, 1.0
        %v2065 = vadd.f32 %v2001, 1.0
        %v2066 = vadd.f32 %v2002, 1.0
        %v2067 = vadd.f32 %v2003, 1.0
        %v2068 = vadd.f32 %v2004, 1.0
        %v2069 = vadd.f32 %v2005, 1.0
        %v2070 = vadd.f32 %v2006, 1.0
        %v2071 = vadd.f32 %v2007, 1.0
        %v2072 = vmul.f32 %v1816, %v2008
        %v2073 = vmul.f32 %v1817, %v2009
        %v2074 = vmul.f32 %v1818, %v2010
        %v2075 = vmul.f32 %v1819, %v2011
        %v2076 = vmul.f32 %v1820, %v2012
        %v2077 = vmul.f32 %v1821, %v2013
        %v2078 = vmul.f32 %v1822, %v2014
        %v2079 = vmul.f32 %v1823, %v2015
        %v2080 = vmul.f32 %v1824, %v2016
        %v2081 = vmul.f32 %v1825, %v2017
        %v2082 = vmul.f32 %v1826, %v2018
        %v2083 = vmul.f32 %v1827, %v2019
        %v2084 = vmul.f32 %v1828, %v2020
        %v2085 = vmul.f32 %v1829, %v2021
        %v2086 = vmul.f32 %v1830, %v2022
        %v2087 = vmul.f32 %v1831, %v2023
        %v2088 = vmul.f32 %v1832, %v2024
        %v2089 = vmul.f32 %v1833, %v2025
        %v2090 = vmul.f32 %v1834, %v2026
        %v2091 = vmul.f32 %v1835, %v2027
        %v2092 = vmul.f32 %v1836, %v2028
        %v2093 = vmul.f32 %v1837, %v2029
        %v2094 = vmul.f32 %v1838, %v2030
        %v2095 = vmul.f32 %v1839, %v2031
        %v2096 = vmul.f32 %v1840, %v2032
        %v2097 = vmul.f32 %v1841, %v2033
        %v2098 = vmul.f32 %v1842, %v2034
        %v2099 = vmul.f32 %v1843, %v2035
        %v2100 = vmul.f32 %v1844, %v2036
        %v2101 = vmul.f32 %v1845, %v2037
        %v2102 = vmul.f32 %v1846, %v2038
        %v2103 = vmul.f32 %v1847, %v2039
        %v2104 = vmul.f32 %v1848, %v2040
        %v2105 = vmul.f32 %v1849, %v2041
        %v2106 = vmul.f32 %v1850, %v2042
        %v2107 = vmul.f32 %v1851, %v2043
        %v2108 = vmul.f32 %v1852, %v2044
        %v2109 = vmul.f32 %v1853, %v2045
        %v2110 = vmul.f32 %v1854, %v2046
        %v2111 = vmul.f32 %v1855, %v2047
        %v2112 = vmul.f32 %v1856, %v2048
        %v2113 = vmul.f32 %v1857, %v2049
        %v2114 = vmul.f32 %v1858, %v2050
        %v2115 = vmul.f32 %v1859, %v2051
        %v2116 = vmul.f32 %v1860, %v2052
        %v2117 = vmul.f32 %v1861, %v2053
        %v2118 = vmul.f32 %v1862, %v2054
        %v2119 = vmul.f32 %v1863, %v2055
        %v2120 = vmul.f32 %v1864, %v2056
        %v2121 = vmul.f32 %v1865, %v2057
        %v2122 = vmul.f32 %v1866, %v2058
        %v2123 = vmul.f32 %v1867, %v2059
        %v2124 = vmul.f32 %v1868, %v2060
        %v2125 = vmul.f32 %v1869, %v2061
        %v2126 = vmul.f32 %v1870, %v2062
        %v2127 = vmul.f32 %v1871, %v2063
        %v2128 = vmul.f32 %v1872, %v2064
        %v2129 = vmul.f32 %v1873, %v2065
        %v2130 = vmul.f32 %v1874, %v2066
        %v2131 = vmul.f32 %v1875, %v2067
        %v2132 = vmul.f32 %v1876, %v2068
        %v2133 = vmul.f32 %v1877, %v2069
        %v2134 = vmul.f32 %v1878, %v2070
        %v2135 = vmul.f32 %v1879, %v2071
        %s2136 = scalar_lea.vmem [#allocation2], 64
        %v2137 = vld [vmem:[%s2136] sm:$0xff]
        %v2138 = vld [vmem:[%s2136 + $0x8] sm:$0xff]
        %v2139 = vld [vmem:[%s2136 + $0x10] sm:$0xff]
        %v2140 = vld [vmem:[%s2136 + $0x18] sm:$0xff]
        %s2141 = scalar_lea.vmem %s2, 64
        %v2142 = vld [vmem:[%s2141] sm:$0xff]
        %v2143 = vld [vmem:[%s2141 + $0x8] sm:$0xff]
        %v2144 = vld [vmem:[%s2141 + $0x10] sm:$0xff]
        %v2145 = vld [vmem:[%s2141 + $0x18] sm:$0xff]
        %2147 = vset.pattern.permute.xlu0 0
        %2148 = vperm.xlu0 %2147, %v2142
        %v2149 = vpop.permute.xlu0 %2148
        %2152 = vset.pattern.permute.xlu0 0
        %2153 = vperm.xlu0 %2152, %v2143
        %v2154 = vpop.permute.xlu0 %2153
        %2157 = vset.pattern.permute.xlu0 0
        %2158 = vperm.xlu0 %2157, %v2144
        %v2159 = vpop.permute.xlu0 %2158
        %2162 = vset.pattern.permute.xlu0 0
        %2163 = vperm.xlu0 %2162, %v2145
        %v2164 = vpop.permute.xlu0 %2163
        %v2167 = vsel %vm1091, %v2137, 0
        %v2170 = vsel %vm1091, %v2138, 0
        %v2173 = vsel %vm1091, %v2139, 0
        %v2176 = vsel %vm1091, %v2140, 0
        %2178 = vmatprep.subr.mxu0 0.0
        %2179 = vmatpush1.msra.mxu0 0.0
        %2180 = vmatprep.subr.mxu0 0.0
        %2181 = vmatpush1.msra.mxu0 0.0
        %2182 = vmatprep.subr.mxu0 0.0
        %2183 = vmatpush1.msra.mxu0 0.0
        %2184 = vmatprep.subr.mxu0 0.0
        %2185 = vmatpush1.msra.mxu0 0.0
        %2186 = vmatprep.subr.mxu0 0.0
        %2187 = vmatpush1.msra.mxu0 0.0
        %2188 = vmatprep.subr.mxu0 0.0
        %2189 = vmatpush1.msra.mxu0 0.0
        %2190 = vmatprep.subr.mxu0 0.0
        %2191 = vmatpush1.msra.mxu0 0.0
        %2192 = vmatprep.subr.mxu0 0.0
        %2193 = vmatpush1.msra.mxu0 0.0
        %2194 = vmatprep.subr.mxu0 0.0
        %2195 = vmatpush1.msra.mxu0 0.0
        %2196 = vmatprep.subr.mxu0 0.0
        %2197 = vmatpush1.msra.mxu0 0.0
        %2198 = vmatprep.subr.mxu0 0.0
        %2199 = vmatpush1.msra.mxu0 0.0
        %2200 = vmatprep.subr.mxu0 0.0
        %2201 = vmatpush1.msra.mxu0 0.0
        %2202 = vmatprep.subr.mxu0 %v2121
        %2203 = vmatpush1.msra.mxu0 %v2120
        %2204 = vmatprep.subr.mxu0 %v2105
        %2205 = vmatpush1.msra.mxu0 %v2104
        %2206 = vmatprep.subr.mxu0 %v2089
        %2207 = vmatpush1.msra.mxu0 %v2088
        %2208 = vmatprep.subr.mxu0 %v2073
        %2209 = vmatpush1.msra.mxu0 %v2072
        %2210 = vmatprep.subr.mxu0 0.0
        %2211 = vmatpush2.msra.mxu0 0.0
        %2212 = vmatprep.subr.mxu0 0.0
        %2213 = vmatpush2.msra.mxu0 0.0
        %2214 = vmatprep.subr.mxu0 0.0
        %2215 = vmatpush2.msra.mxu0 0.0
        %2216 = vmatprep.subr.mxu0 0.0
        %2217 = vmatpush2.msra.mxu0 0.0
        %2218 = vmatprep.subr.mxu0 0.0
        %2219 = vmatpush2.msra.mxu0 0.0
        %2220 = vmatprep.subr.mxu0 0.0
        %2221 = vmatpush2.msra.mxu0 0.0
        %2222 = vmatprep.subr.mxu0 0.0
        %2223 = vmatpush2.msra.mxu0 0.0
        %2224 = vmatprep.subr.mxu0 0.0
        %2225 = vmatpush2.msra.mxu0 0.0
        %2226 = vmatprep.subr.mxu0 0.0
        %2227 = vmatpush2.msra.mxu0 0.0
        %2228 = vmatprep.subr.mxu0 0.0
        %2229 = vmatpush2.msra.mxu0 0.0
        %2230 = vmatprep.subr.mxu0 0.0
        %2231 = vmatpush2.msra.mxu0 0.0
        %2232 = vmatprep.subr.mxu0 0.0
        %2233 = vmatpush2.msra.mxu0 0.0
        %2234 = vmatprep.subr.mxu0 0.0
        %2235 = vmatpush2.msra.mxu0 0.0
        %2236 = vmatprep.subr.mxu0 0.0
        %2237 = vmatpush2.msra.mxu0 0.0
        %2238 = vmatprep.subr.mxu0 0.0
        %2239 = vmatpush2.msra.mxu0 0.0
        %2240 = vmatprep.subr.mxu0 0.0
        %2241 = vmatpush2.msra.mxu0 0.0
        %2242 = vmatprep.mubr.f32.mxu0 0.0
        %2243 = vmatmul.mubr.f32.gmra.mxu0 %v2167
        %v2244 = vpop.f32.mrf.mxu0
        %v2245 = vadd.f32 %v2149, %v2244
        %v2246 = vpop.f32.mrf.mxu0
        %v2247 = vadd.f32 %v2149, %v2246
        %2248 = vmatprep.mubr.f32.mxu0 0.0
        %2249 = vmatmul.mubr.f32.gmra.mxu0 %v2170
        %v2250 = vpop.f32.mrf.mxu0
        %v2251 = vadd.f32 %v2154, %v2250
        %v2252 = vpop.f32.mrf.mxu0
        %v2253 = vadd.f32 %v2154, %v2252
        %2254 = vmatprep.mubr.f32.mxu0 0.0
        %2255 = vmatmul.mubr.f32.gmra.mxu0 %v2173
        %v2256 = vpop.f32.mrf.mxu0
        %v2257 = vadd.f32 %v2159, %v2256
        %v2258 = vpop.f32.mrf.mxu0
        %v2259 = vadd.f32 %v2159, %v2258
        %2260 = vmatprep.mubr.f32.mxu0 0.0
        %2261 = vmatmul.mubr.f32.gmra.mxu0 %v2176
        %v2262 = vpop.f32.mrf.mxu0
        %v2263 = vadd.f32 %v2164, %v2262
        %v2264 = vpop.f32.mrf.mxu0
        %v2265 = vadd.f32 %v2164, %v2264
        %2266 = vdwg.mxu0
        %2267 = vmatprep.subr.mxu0 0.0
        %2268 = vmatpush1.msra.mxu0 0.0
        %2269 = vmatprep.subr.mxu0 0.0
        %2270 = vmatpush1.msra.mxu0 0.0
        %2271 = vmatprep.subr.mxu0 0.0
        %2272 = vmatpush1.msra.mxu0 0.0
        %2273 = vmatprep.subr.mxu0 0.0
        %2274 = vmatpush1.msra.mxu0 0.0
        %2275 = vmatprep.subr.mxu0 0.0
        %2276 = vmatpush1.msra.mxu0 0.0
        %2277 = vmatprep.subr.mxu0 0.0
        %2278 = vmatpush1.msra.mxu0 0.0
        %2279 = vmatprep.subr.mxu0 0.0
        %2280 = vmatpush1.msra.mxu0 0.0
        %2281 = vmatprep.subr.mxu0 0.0
        %2282 = vmatpush1.msra.mxu0 0.0
        %2283 = vmatprep.subr.mxu0 0.0
        %2284 = vmatpush1.msra.mxu0 0.0
        %2285 = vmatprep.subr.mxu0 0.0
        %2286 = vmatpush1.msra.mxu0 0.0
        %2287 = vmatprep.subr.mxu0 0.0
        %2288 = vmatpush1.msra.mxu0 0.0
        %2289 = vmatprep.subr.mxu0 0.0
        %2290 = vmatpush1.msra.mxu0 0.0
        %2291 = vmatprep.subr.mxu0 %v2123
        %2292 = vmatpush1.msra.mxu0 %v2122
        %2293 = vmatprep.subr.mxu0 %v2107
        %2294 = vmatpush1.msra.mxu0 %v2106
        %2295 = vmatprep.subr.mxu0 %v2091
        %2296 = vmatpush1.msra.mxu0 %v2090
        %2297 = vmatprep.subr.mxu0 %v2075
        %2298 = vmatpush1.msra.mxu0 %v2074
        %2299 = vmatprep.subr.mxu0 0.0
        %2300 = vmatpush2.msra.mxu0 0.0
        %2301 = vmatprep.subr.mxu0 0.0
        %2302 = vmatpush2.msra.mxu0 0.0
        %2303 = vmatprep.subr.mxu0 0.0
        %2304 = vmatpush2.msra.mxu0 0.0
        %2305 = vmatprep.subr.mxu0 0.0
        %2306 = vmatpush2.msra.mxu0 0.0
        %2307 = vmatprep.subr.mxu0 0.0
        %2308 = vmatpush2.msra.mxu0 0.0
        %2309 = vmatprep.subr.mxu0 0.0
        %2310 = vmatpush2.msra.mxu0 0.0
        %2311 = vmatprep.subr.mxu0 0.0
        %2312 = vmatpush2.msra.mxu0 0.0
        %2313 = vmatprep.subr.mxu0 0.0
        %2314 = vmatpush2.msra.mxu0 0.0
        %2315 = vmatprep.subr.mxu0 0.0
        %2316 = vmatpush2.msra.mxu0 0.0
        %2317 = vmatprep.subr.mxu0 0.0
        %2318 = vmatpush2.msra.mxu0 0.0
        %2319 = vmatprep.subr.mxu0 0.0
        %2320 = vmatpush2.msra.mxu0 0.0
        %2321 = vmatprep.subr.mxu0 0.0
        %2322 = vmatpush2.msra.mxu0 0.0
        %2323 = vmatprep.subr.mxu0 0.0
        %2324 = vmatpush2.msra.mxu0 0.0
        %2325 = vmatprep.subr.mxu0 0.0
        %2326 = vmatpush2.msra.mxu0 0.0
        %2327 = vmatprep.subr.mxu0 0.0
        %2328 = vmatpush2.msra.mxu0 0.0
        %2329 = vmatprep.subr.mxu0 0.0
        %2330 = vmatpush2.msra.mxu0 0.0
        %2331 = vmatprep.mubr.f32.mxu0 0.0
        %2332 = vmatmul.mubr.f32.gmra.mxu0 %v2167
        %v2333 = vpop.f32.mrf.mxu0
        %v2334 = vadd.f32 %v2149, %v2333
        %v2335 = vpop.f32.mrf.mxu0
        %v2336 = vadd.f32 %v2149, %v2335
        %2337 = vmatprep.mubr.f32.mxu0 0.0
        %2338 = vmatmul.mubr.f32.gmra.mxu0 %v2170
        %v2339 = vpop.f32.mrf.mxu0
        %v2340 = vadd.f32 %v2154, %v2339
        %v2341 = vpop.f32.mrf.mxu0
        %v2342 = vadd.f32 %v2154, %v2341
        %2343 = vmatprep.mubr.f32.mxu0 0.0
        %2344 = vmatmul.mubr.f32.gmra.mxu0 %v2173
        %v2345 = vpop.f32.mrf.mxu0
        %v2346 = vadd.f32 %v2159, %v2345
        %v2347 = vpop.f32.mrf.mxu0
        %v2348 = vadd.f32 %v2159, %v2347
        %2349 = vmatprep.mubr.f32.mxu0 0.0
        %2350 = vmatmul.mubr.f32.gmra.mxu0 %v2176
        %v2351 = vpop.f32.mrf.mxu0
        %v2352 = vadd.f32 %v2164, %v2351
        %v2353 = vpop.f32.mrf.mxu0
        %v2354 = vadd.f32 %v2164, %v2353
        %2355 = vdwg.mxu0
        %2356 = vmatprep.subr.mxu0 0.0
        %2357 = vmatpush1.msra.mxu0 0.0
        %2358 = vmatprep.subr.mxu0 0.0
        %2359 = vmatpush1.msra.mxu0 0.0
        %2360 = vmatprep.subr.mxu0 0.0
        %2361 = vmatpush1.msra.mxu0 0.0
        %2362 = vmatprep.subr.mxu0 0.0
        %2363 = vmatpush1.msra.mxu0 0.0
        %2364 = vmatprep.subr.mxu0 0.0
        %2365 = vmatpush1.msra.mxu0 0.0
        %2366 = vmatprep.subr.mxu0 0.0
        %2367 = vmatpush1.msra.mxu0 0.0
        %2368 = vmatprep.subr.mxu0 0.0
        %2369 = vmatpush1.msra.mxu0 0.0
        %2370 = vmatprep.subr.mxu0 0.0
        %2371 = vmatpush1.msra.mxu0 0.0
        %2372 = vmatprep.subr.mxu0 0.0
        %2373 = vmatpush1.msra.mxu0 0.0
        %2374 = vmatprep.subr.mxu0 0.0
        %2375 = vmatpush1.msra.mxu0 0.0
        %2376 = vmatprep.subr.mxu0 0.0
        %2377 = vmatpush1.msra.mxu0 0.0
        %2378 = vmatprep.subr.mxu0 0.0
        %2379 = vmatpush1.msra.mxu0 0.0
        %2380 = vmatprep.subr.mxu0 %v2125
        %2381 = vmatpush1.msra.mxu0 %v2124
        %2382 = vmatprep.subr.mxu0 %v2109
        %2383 = vmatpush1.msra.mxu0 %v2108
        %2384 = vmatprep.subr.mxu0 %v2093
        %2385 = vmatpush1.msra.mxu0 %v2092
        %2386 = vmatprep.subr.mxu0 %v2077
        %2387 = vmatpush1.msra.mxu0 %v2076
        %2388 = vmatprep.subr.mxu0 0.0
        %2389 = vmatpush2.msra.mxu0 0.0
        %2390 = vmatprep.subr.mxu0 0.0
        %2391 = vmatpush2.msra.mxu0 0.0
        %2392 = vmatprep.subr.mxu0 0.0
        %2393 = vmatpush2.msra.mxu0 0.0
        %2394 = vmatprep.subr.mxu0 0.0
        %2395 = vmatpush2.msra.mxu0 0.0
        %2396 = vmatprep.subr.mxu0 0.0
        %2397 = vmatpush2.msra.mxu0 0.0
        %2398 = vmatprep.subr.mxu0 0.0
        %2399 = vmatpush2.msra.mxu0 0.0
        %2400 = vmatprep.subr.mxu0 0.0
        %2401 = vmatpush2.msra.mxu0 0.0
        %2402 = vmatprep.subr.mxu0 0.0
        %2403 = vmatpush2.msra.mxu0 0.0
        %2404 = vmatprep.subr.mxu0 0.0
        %2405 = vmatpush2.msra.mxu0 0.0
        %2406 = vmatprep.subr.mxu0 0.0
        %2407 = vmatpush2.msra.mxu0 0.0
        %2408 = vmatprep.subr.mxu0 0.0
        %2409 = vmatpush2.msra.mxu0 0.0
        %2410 = vmatprep.subr.mxu0 0.0
        %2411 = vmatpush2.msra.mxu0 0.0
        %2412 = vmatprep.subr.mxu0 0.0
        %2413 = vmatpush2.msra.mxu0 0.0
        %2414 = vmatprep.subr.mxu0 0.0
        %2415 = vmatpush2.msra.mxu0 0.0
        %2416 = vmatprep.subr.mxu0 0.0
        %2417 = vmatpush2.msra.mxu0 0.0
        %2418 = vmatprep.subr.mxu0 0.0
        %2419 = vmatpush2.msra.mxu0 0.0
        %2420 = vmatprep.mubr.f32.mxu0 0.0
        %2421 = vmatmul.mubr.f32.gmra.mxu0 %v2167
        %v2422 = vpop.f32.mrf.mxu0
        %v2423 = vadd.f32 %v2149, %v2422
        %v2424 = vpop.f32.mrf.mxu0
        %v2425 = vadd.f32 %v2149, %v2424
        %2426 = vmatprep.mubr.f32.mxu0 0.0
        %2427 = vmatmul.mubr.f32.gmra.mxu0 %v2170
        %v2428 = vpop.f32.mrf.mxu0
        %v2429 = vadd.f32 %v2154, %v2428
        %v2430 = vpop.f32.mrf.mxu0
        %v2431 = vadd.f32 %v2154, %v2430
        %2432 = vmatprep.mubr.f32.mxu0 0.0
        %2433 = vmatmul.mubr.f32.gmra.mxu0 %v2173
        %v2434 = vpop.f32.mrf.mxu0
        %v2435 = vadd.f32 %v2159, %v2434
        %v2436 = vpop.f32.mrf.mxu0
        %v2437 = vadd.f32 %v2159, %v2436
        %2438 = vmatprep.mubr.f32.mxu0 0.0
        %2439 = vmatmul.mubr.f32.gmra.mxu0 %v2176
        %v2440 = vpop.f32.mrf.mxu0
        %v2441 = vadd.f32 %v2164, %v2440
        %v2442 = vpop.f32.mrf.mxu0
        %v2443 = vadd.f32 %v2164, %v2442
        %2444 = vdwg.mxu0
        %2445 = vmatprep.subr.mxu0 0.0
        %2446 = vmatpush1.msra.mxu0 0.0
        %2447 = vmatprep.subr.mxu0 0.0
        %2448 = vmatpush1.msra.mxu0 0.0
        %2449 = vmatprep.subr.mxu0 0.0
        %2450 = vmatpush1.msra.mxu0 0.0
        %2451 = vmatprep.subr.mxu0 0.0
        %2452 = vmatpush1.msra.mxu0 0.0
        %2453 = vmatprep.subr.mxu0 0.0
        %2454 = vmatpush1.msra.mxu0 0.0
        %2455 = vmatprep.subr.mxu0 0.0
        %2456 = vmatpush1.msra.mxu0 0.0
        %2457 = vmatprep.subr.mxu0 0.0
        %2458 = vmatpush1.msra.mxu0 0.0
        %2459 = vmatprep.subr.mxu0 0.0
        %2460 = vmatpush1.msra.mxu0 0.0
        %2461 = vmatprep.subr.mxu0 0.0
        %2462 = vmatpush1.msra.mxu0 0.0
        %2463 = vmatprep.subr.mxu0 0.0
        %2464 = vmatpush1.msra.mxu0 0.0
        %2465 = vmatprep.subr.mxu0 0.0
        %2466 = vmatpush1.msra.mxu0 0.0
        %2467 = vmatprep.subr.mxu0 0.0
        %2468 = vmatpush1.msra.mxu0 0.0
        %2469 = vmatprep.subr.mxu0 %v2127
        %2470 = vmatpush1.msra.mxu0 %v2126
        %2471 = vmatprep.subr.mxu0 %v2111
        %2472 = vmatpush1.msra.mxu0 %v2110
        %2473 = vmatprep.subr.mxu0 %v2095
        %2474 = vmatpush1.msra.mxu0 %v2094
        %2475 = vmatprep.subr.mxu0 %v2079
        %2476 = vmatpush1.msra.mxu0 %v2078
        %2477 = vmatprep.subr.mxu0 0.0
        %2478 = vmatpush2.msra.mxu0 0.0
        %2479 = vmatprep.subr.mxu0 0.0
        %2480 = vmatpush2.msra.mxu0 0.0
        %2481 = vmatprep.subr.mxu0 0.0
        %2482 = vmatpush2.msra.mxu0 0.0
        %2483 = vmatprep.subr.mxu0 0.0
        %2484 = vmatpush2.msra.mxu0 0.0
        %2485 = vmatprep.subr.mxu0 0.0
        %2486 = vmatpush2.msra.mxu0 0.0
        %2487 = vmatprep.subr.mxu0 0.0
        %2488 = vmatpush2.msra.mxu0 0.0
        %2489 = vmatprep.subr.mxu0 0.0
        %2490 = vmatpush2.msra.mxu0 0.0
        %2491 = vmatprep.subr.mxu0 0.0
        %2492 = vmatpush2.msra.mxu0 0.0
        %2493 = vmatprep.subr.mxu0 0.0
        %2494 = vmatpush2.msra.mxu0 0.0
        %2495 = vmatprep.subr.mxu0 0.0
        %2496 = vmatpush2.msra.mxu0 0.0
        %2497 = vmatprep.subr.mxu0 0.0
        %2498 = vmatpush2.msra.mxu0 0.0
        %2499 = vmatprep.subr.mxu0 0.0
        %2500 = vmatpush2.msra.mxu0 0.0
        %2501 = vmatprep.subr.mxu0 0.0
        %2502 = vmatpush2.msra.mxu0 0.0
        %2503 = vmatprep.subr.mxu0 0.0
        %2504 = vmatpush2.msra.mxu0 0.0
        %2505 = vmatprep.subr.mxu0 0.0
        %2506 = vmatpush2.msra.mxu0 0.0
        %2507 = vmatprep.subr.mxu0 0.0
        %2508 = vmatpush2.msra.mxu0 0.0
        %2509 = vmatprep.mubr.f32.mxu0 0.0
        %2510 = vmatmul.mubr.f32.gmra.mxu0 %v2167
        %v2511 = vpop.f32.mrf.mxu0
        %v2512 = vadd.f32 %v2149, %v2511
        %v2513 = vpop.f32.mrf.mxu0
        %v2514 = vadd.f32 %v2149, %v2513
        %2515 = vmatprep.mubr.f32.mxu0 0.0
        %2516 = vmatmul.mubr.f32.gmra.mxu0 %v2170
        %v2517 = vpop.f32.mrf.mxu0
        %v2518 = vadd.f32 %v2154, %v2517
        %v2519 = vpop.f32.mrf.mxu0
        %v2520 = vadd.f32 %v2154, %v2519
        %2521 = vmatprep.mubr.f32.mxu0 0.0
        %2522 = vmatmul.mubr.f32.gmra.mxu0 %v2173
        %v2523 = vpop.f32.mrf.mxu0
        %v2524 = vadd.f32 %v2159, %v2523
        %v2525 = vpop.f32.mrf.mxu0
        %v2526 = vadd.f32 %v2159, %v2525
        %2527 = vmatprep.mubr.f32.mxu0 0.0
        %2528 = vmatmul.mubr.f32.gmra.mxu0 %v2176
        %v2529 = vpop.f32.mrf.mxu0
        %v2530 = vadd.f32 %v2164, %v2529
        %v2531 = vpop.f32.mrf.mxu0
        %v2532 = vadd.f32 %v2164, %v2531
        %2533 = vdwg.mxu0
        %2534 = vmatprep.subr.mxu0 0.0
        %2535 = vmatpush1.msra.mxu0 0.0
        %2536 = vmatprep.subr.mxu0 0.0
        %2537 = vmatpush1.msra.mxu0 0.0
        %2538 = vmatprep.subr.mxu0 0.0
        %2539 = vmatpush1.msra.mxu0 0.0
        %2540 = vmatprep.subr.mxu0 0.0
        %2541 = vmatpush1.msra.mxu0 0.0
        %2542 = vmatprep.subr.mxu0 0.0
        %2543 = vmatpush1.msra.mxu0 0.0
        %2544 = vmatprep.subr.mxu0 0.0
        %2545 = vmatpush1.msra.mxu0 0.0
        %2546 = vmatprep.subr.mxu0 0.0
        %2547 = vmatpush1.msra.mxu0 0.0
        %2548 = vmatprep.subr.mxu0 0.0
        %2549 = vmatpush1.msra.mxu0 0.0
        %2550 = vmatprep.subr.mxu0 0.0
        %2551 = vmatpush1.msra.mxu0 0.0
        %2552 = vmatprep.subr.mxu0 0.0
        %2553 = vmatpush1.msra.mxu0 0.0
        %2554 = vmatprep.subr.mxu0 0.0
        %2555 = vmatpush1.msra.mxu0 0.0
        %2556 = vmatprep.subr.mxu0 0.0
        %2557 = vmatpush1.msra.mxu0 0.0
        %2558 = vmatprep.subr.mxu0 %v2129
        %2559 = vmatpush1.msra.mxu0 %v2128
        %2560 = vmatprep.subr.mxu0 %v2113
        %2561 = vmatpush1.msra.mxu0 %v2112
        %2562 = vmatprep.subr.mxu0 %v2097
        %2563 = vmatpush1.msra.mxu0 %v2096
        %2564 = vmatprep.subr.mxu0 %v2081
        %2565 = vmatpush1.msra.mxu0 %v2080
        %2566 = vmatprep.subr.mxu0 0.0
        %2567 = vmatpush2.msra.mxu0 0.0
        %2568 = vmatprep.subr.mxu0 0.0
        %2569 = vmatpush2.msra.mxu0 0.0
        %2570 = vmatprep.subr.mxu0 0.0
        %2571 = vmatpush2.msra.mxu0 0.0
        %2572 = vmatprep.subr.mxu0 0.0
        %2573 = vmatpush2.msra.mxu0 0.0
        %2574 = vmatprep.subr.mxu0 0.0
        %2575 = vmatpush2.msra.mxu0 0.0
        %2576 = vmatprep.subr.mxu0 0.0
        %2577 = vmatpush2.msra.mxu0 0.0
        %2578 = vmatprep.subr.mxu0 0.0
        %2579 = vmatpush2.msra.mxu0 0.0
        %2580 = vmatprep.subr.mxu0 0.0
        %2581 = vmatpush2.msra.mxu0 0.0
        %2582 = vmatprep.subr.mxu0 0.0
        %2583 = vmatpush2.msra.mxu0 0.0
        %2584 = vmatprep.subr.mxu0 0.0
        %2585 = vmatpush2.msra.mxu0 0.0
        %2586 = vmatprep.subr.mxu0 0.0
        %2587 = vmatpush2.msra.mxu0 0.0
        %2588 = vmatprep.subr.mxu0 0.0
        %2589 = vmatpush2.msra.mxu0 0.0
        %2590 = vmatprep.subr.mxu0 0.0
        %2591 = vmatpush2.msra.mxu0 0.0
        %2592 = vmatprep.subr.mxu0 0.0
        %2593 = vmatpush2.msra.mxu0 0.0
        %2594 = vmatprep.subr.mxu0 0.0
        %2595 = vmatpush2.msra.mxu0 0.0
        %2596 = vmatprep.subr.mxu0 0.0
        %2597 = vmatpush2.msra.mxu0 0.0
        %2598 = vmatprep.mubr.f32.mxu0 0.0
        %2599 = vmatmul.mubr.f32.gmra.mxu0 %v2167
        %v2600 = vpop.f32.mrf.mxu0
        %v2601 = vadd.f32 %v2149, %v2600
        %v2602 = vpop.f32.mrf.mxu0
        %v2603 = vadd.f32 %v2149, %v2602
        %2604 = vmatprep.mubr.f32.mxu0 0.0
        %2605 = vmatmul.mubr.f32.gmra.mxu0 %v2170
        %v2606 = vpop.f32.mrf.mxu0
        %v2607 = vadd.f32 %v2154, %v2606
        %v2608 = vpop.f32.mrf.mxu0
        %v2609 = vadd.f32 %v2154, %v2608
        %2610 = vmatprep.mubr.f32.mxu0 0.0
        %2611 = vmatmul.mubr.f32.gmra.mxu0 %v2173
        %v2612 = vpop.f32.mrf.mxu0
        %v2613 = vadd.f32 %v2159, %v2612
        %v2614 = vpop.f32.mrf.mxu0
        %v2615 = vadd.f32 %v2159, %v2614
        %2616 = vmatprep.mubr.f32.mxu0 0.0
        %2617 = vmatmul.mubr.f32.gmra.mxu0 %v2176
        %v2618 = vpop.f32.mrf.mxu0
        %v2619 = vadd.f32 %v2164, %v2618
        %v2620 = vpop.f32.mrf.mxu0
        %v2621 = vadd.f32 %v2164, %v2620
        %2622 = vdwg.mxu0
        %2623 = vmatprep.subr.mxu0 0.0
        %2624 = vmatpush1.msra.mxu0 0.0
        %2625 = vmatprep.subr.mxu0 0.0
        %2626 = vmatpush1.msra.mxu0 0.0
        %2627 = vmatprep.subr.mxu0 0.0
        %2628 = vmatpush1.msra.mxu0 0.0
        %2629 = vmatprep.subr.mxu0 0.0
        %2630 = vmatpush1.msra.mxu0 0.0
        %2631 = vmatprep.subr.mxu0 0.0
        %2632 = vmatpush1.msra.mxu0 0.0
        %2633 = vmatprep.subr.mxu0 0.0
        %2634 = vmatpush1.msra.mxu0 0.0
        %2635 = vmatprep.subr.mxu0 0.0
        %2636 = vmatpush1.msra.mxu0 0.0
        %2637 = vmatprep.subr.mxu0 0.0
        %2638 = vmatpush1.msra.mxu0 0.0
        %2639 = vmatprep.subr.mxu0 0.0
        %2640 = vmatpush1.msra.mxu0 0.0
        %2641 = vmatprep.subr.mxu0 0.0
        %2642 = vmatpush1.msra.mxu0 0.0
        %2643 = vmatprep.subr.mxu0 0.0
        %2644 = vmatpush1.msra.mxu0 0.0
        %2645 = vmatprep.subr.mxu0 0.0
        %2646 = vmatpush1.msra.mxu0 0.0
        %2647 = vmatprep.subr.mxu0 %v2131
        %2648 = vmatpush1.msra.mxu0 %v2130
        %2649 = vmatprep.subr.mxu0 %v2115
        %2650 = vmatpush1.msra.mxu0 %v2114
        %2651 = vmatprep.subr.mxu0 %v2099
        %2652 = vmatpush1.msra.mxu0 %v2098
        %2653 = vmatprep.subr.mxu0 %v2083
        %2654 = vmatpush1.msra.mxu0 %v2082
        %2655 = vmatprep.subr.mxu0 0.0
        %2656 = vmatpush2.msra.mxu0 0.0
        %2657 = vmatprep.subr.mxu0 0.0
        %2658 = vmatpush2.msra.mxu0 0.0
        %2659 = vmatprep.subr.mxu0 0.0
        %2660 = vmatpush2.msra.mxu0 0.0
        %2661 = vmatprep.subr.mxu0 0.0
        %2662 = vmatpush2.msra.mxu0 0.0
        %2663 = vmatprep.subr.mxu0 0.0
        %2664 = vmatpush2.msra.mxu0 0.0
        %2665 = vmatprep.subr.mxu0 0.0
        %2666 = vmatpush2.msra.mxu0 0.0
        %2667 = vmatprep.subr.mxu0 0.0
        %2668 = vmatpush2.msra.mxu0 0.0
        %2669 = vmatprep.subr.mxu0 0.0
        %2670 = vmatpush2.msra.mxu0 0.0
        %2671 = vmatprep.subr.mxu0 0.0
        %2672 = vmatpush2.msra.mxu0 0.0
        %2673 = vmatprep.subr.mxu0 0.0
        %2674 = vmatpush2.msra.mxu0 0.0
        %2675 = vmatprep.subr.mxu0 0.0
        %2676 = vmatpush2.msra.mxu0 0.0
        %2677 = vmatprep.subr.mxu0 0.0
        %2678 = vmatpush2.msra.mxu0 0.0
        %2679 = vmatprep.subr.mxu0 0.0
        %2680 = vmatpush2.msra.mxu0 0.0
        %2681 = vmatprep.subr.mxu0 0.0
        %2682 = vmatpush2.msra.mxu0 0.0
        %2683 = vmatprep.subr.mxu0 0.0
        %2684 = vmatpush2.msra.mxu0 0.0
        %2685 = vmatprep.subr.mxu0 0.0
        %2686 = vmatpush2.msra.mxu0 0.0
        %2687 = vmatprep.mubr.f32.mxu0 0.0
        %2688 = vmatmul.mubr.f32.gmra.mxu0 %v2167
        %v2689 = vpop.f32.mrf.mxu0
        %v2690 = vadd.f32 %v2149, %v2689
        %v2691 = vpop.f32.mrf.mxu0
        %v2692 = vadd.f32 %v2149, %v2691
        %2693 = vmatprep.mubr.f32.mxu0 0.0
        %2694 = vmatmul.mubr.f32.gmra.mxu0 %v2170
        %v2695 = vpop.f32.mrf.mxu0
        %v2696 = vadd.f32 %v2154, %v2695
        %v2697 = vpop.f32.mrf.mxu0
        %v2698 = vadd.f32 %v2154, %v2697
        %2699 = vmatprep.mubr.f32.mxu0 0.0
        %2700 = vmatmul.mubr.f32.gmra.mxu0 %v2173
        %v2701 = vpop.f32.mrf.mxu0
        %v2702 = vadd.f32 %v2159, %v2701
        %v2703 = vpop.f32.mrf.mxu0
        %v2704 = vadd.f32 %v2159, %v2703
        %2705 = vmatprep.mubr.f32.mxu0 0.0
        %2706 = vmatmul.mubr.f32.gmra.mxu0 %v2176
        %v2707 = vpop.f32.mrf.mxu0
        %v2708 = vadd.f32 %v2164, %v2707
        %v2709 = vpop.f32.mrf.mxu0
        %v2710 = vadd.f32 %v2164, %v2709
        %2711 = vdwg.mxu0
        %2712 = vmatprep.subr.mxu0 0.0
        %2713 = vmatpush1.msra.mxu0 0.0
        %2714 = vmatprep.subr.mxu0 0.0
        %2715 = vmatpush1.msra.mxu0 0.0
        %2716 = vmatprep.subr.mxu0 0.0
        %2717 = vmatpush1.msra.mxu0 0.0
        %2718 = vmatprep.subr.mxu0 0.0
        %2719 = vmatpush1.msra.mxu0 0.0
        %2720 = vmatprep.subr.mxu0 0.0
        %2721 = vmatpush1.msra.mxu0 0.0
        %2722 = vmatprep.subr.mxu0 0.0
        %2723 = vmatpush1.msra.mxu0 0.0
        %2724 = vmatprep.subr.mxu0 0.0
        %2725 = vmatpush1.msra.mxu0 0.0
        %2726 = vmatprep.subr.mxu0 0.0
        %2727 = vmatpush1.msra.mxu0 0.0
        %2728 = vmatprep.subr.mxu0 0.0
        %2729 = vmatpush1.msra.mxu0 0.0
        %2730 = vmatprep.subr.mxu0 0.0
        %2731 = vmatpush1.msra.mxu0 0.0
        %2732 = vmatprep.subr.mxu0 0.0
        %2733 = vmatpush1.msra.mxu0 0.0
        %2734 = vmatprep.subr.mxu0 0.0
        %2735 = vmatpush1.msra.mxu0 0.0
        %2736 = vmatprep.subr.mxu0 %v2133
        %2737 = vmatpush1.msra.mxu0 %v2132
        %2738 = vmatprep.subr.mxu0 %v2117
        %2739 = vmatpush1.msra.mxu0 %v2116
        %2740 = vmatprep.subr.mxu0 %v2101
        %2741 = vmatpush1.msra.mxu0 %v2100
        %2742 = vmatprep.subr.mxu0 %v2085
        %2743 = vmatpush1.msra.mxu0 %v2084
        %2744 = vmatprep.subr.mxu0 0.0
        %2745 = vmatpush2.msra.mxu0 0.0
        %2746 = vmatprep.subr.mxu0 0.0
        %2747 = vmatpush2.msra.mxu0 0.0
        %2748 = vmatprep.subr.mxu0 0.0
        %2749 = vmatpush2.msra.mxu0 0.0
        %2750 = vmatprep.subr.mxu0 0.0
        %2751 = vmatpush2.msra.mxu0 0.0
        %2752 = vmatprep.subr.mxu0 0.0
        %2753 = vmatpush2.msra.mxu0 0.0
        %2754 = vmatprep.subr.mxu0 0.0
        %2755 = vmatpush2.msra.mxu0 0.0
        %2756 = vmatprep.subr.mxu0 0.0
        %2757 = vmatpush2.msra.mxu0 0.0
        %2758 = vmatprep.subr.mxu0 0.0
        %2759 = vmatpush2.msra.mxu0 0.0
        %2760 = vmatprep.subr.mxu0 0.0
        %2761 = vmatpush2.msra.mxu0 0.0
        %2762 = vmatprep.subr.mxu0 0.0
        %2763 = vmatpush2.msra.mxu0 0.0
        %2764 = vmatprep.subr.mxu0 0.0
        %2765 = vmatpush2.msra.mxu0 0.0
        %2766 = vmatprep.subr.mxu0 0.0
        %2767 = vmatpush2.msra.mxu0 0.0
        %2768 = vmatprep.subr.mxu0 0.0
        %2769 = vmatpush2.msra.mxu0 0.0
        %2770 = vmatprep.subr.mxu0 0.0
        %2771 = vmatpush2.msra.mxu0 0.0
        %2772 = vmatprep.subr.mxu0 0.0
        %2773 = vmatpush2.msra.mxu0 0.0
        %2774 = vmatprep.subr.mxu0 0.0
        %2775 = vmatpush2.msra.mxu0 0.0
        %2776 = vmatprep.mubr.f32.mxu0 0.0
        %2777 = vmatmul.mubr.f32.gmra.mxu0 %v2167
        %v2778 = vpop.f32.mrf.mxu0
        %v2779 = vadd.f32 %v2149, %v2778
        %v2780 = vpop.f32.mrf.mxu0
        %v2781 = vadd.f32 %v2149, %v2780
        %2782 = vmatprep.mubr.f32.mxu0 0.0
        %2783 = vmatmul.mubr.f32.gmra.mxu0 %v2170
        %v2784 = vpop.f32.mrf.mxu0
        %v2785 = vadd.f32 %v2154, %v2784
        %v2786 = vpop.f32.mrf.mxu0
        %v2787 = vadd.f32 %v2154, %v2786
        %2788 = vmatprep.mubr.f32.mxu0 0.0
        %2789 = vmatmul.mubr.f32.gmra.mxu0 %v2173
        %v2790 = vpop.f32.mrf.mxu0
        %v2791 = vadd.f32 %v2159, %v2790
        %v2792 = vpop.f32.mrf.mxu0
        %v2793 = vadd.f32 %v2159, %v2792
        %2794 = vmatprep.mubr.f32.mxu0 0.0
        %2795 = vmatmul.mubr.f32.gmra.mxu0 %v2176
        %v2796 = vpop.f32.mrf.mxu0
        %v2797 = vadd.f32 %v2164, %v2796
        %v2798 = vpop.f32.mrf.mxu0
        %v2799 = vadd.f32 %v2164, %v2798
        %2800 = vdwg.mxu0
        %2801 = vmatprep.subr.mxu0 0.0
        %2802 = vmatpush1.msra.mxu0 0.0
        %2803 = vmatprep.subr.mxu0 0.0
        %2804 = vmatpush1.msra.mxu0 0.0
        %2805 = vmatprep.subr.mxu0 0.0
        %2806 = vmatpush1.msra.mxu0 0.0
        %2807 = vmatprep.subr.mxu0 0.0
        %2808 = vmatpush1.msra.mxu0 0.0
        %2809 = vmatprep.subr.mxu0 0.0
        %2810 = vmatpush1.msra.mxu0 0.0
        %2811 = vmatprep.subr.mxu0 0.0
        %2812 = vmatpush1.msra.mxu0 0.0
        %2813 = vmatprep.subr.mxu0 0.0
        %2814 = vmatpush1.msra.mxu0 0.0
        %2815 = vmatprep.subr.mxu0 0.0
        %2816 = vmatpush1.msra.mxu0 0.0
        %2817 = vmatprep.subr.mxu0 0.0
        %2818 = vmatpush1.msra.mxu0 0.0
        %2819 = vmatprep.subr.mxu0 0.0
        %2820 = vmatpush1.msra.mxu0 0.0
        %2821 = vmatprep.subr.mxu0 0.0
        %2822 = vmatpush1.msra.mxu0 0.0
        %2823 = vmatprep.subr.mxu0 0.0
        %2824 = vmatpush1.msra.mxu0 0.0
        %2825 = vmatprep.subr.mxu0 %v2135
        %2826 = vmatpush1.msra.mxu0 %v2134
        %2827 = vmatprep.subr.mxu0 %v2119
        %2828 = vmatpush1.msra.mxu0 %v2118
        %2829 = vmatprep.subr.mxu0 %v2103
        %2830 = vmatpush1.msra.mxu0 %v2102
        %2831 = vmatprep.subr.mxu0 %v2087
        %2832 = vmatpush1.msra.mxu0 %v2086
        %2833 = vmatprep.subr.mxu0 0.0
        %2834 = vmatpush2.msra.mxu0 0.0
        %2835 = vmatprep.subr.mxu0 0.0
        %2836 = vmatpush2.msra.mxu0 0.0
        %2837 = vmatprep.subr.mxu0 0.0
        %2838 = vmatpush2.msra.mxu0 0.0
        %2839 = vmatprep.subr.mxu0 0.0
        %2840 = vmatpush2.msra.mxu0 0.0
        %2841 = vmatprep.subr.mxu0 0.0
        %2842 = vmatpush2.msra.mxu0 0.0
        %2843 = vmatprep.subr.mxu0 0.0
        %2844 = vmatpush2.msra.mxu0 0.0
        %2845 = vmatprep.subr.mxu0 0.0
        %2846 = vmatpush2.msra.mxu0 0.0
        %2847 = vmatprep.subr.mxu0 0.0
        %2848 = vmatpush2.msra.mxu0 0.0
        %2849 = vmatprep.subr.mxu0 0.0
        %2850 = vmatpush2.msra.mxu0 0.0
        %2851 = vmatprep.subr.mxu0 0.0
        %2852 = vmatpush2.msra.mxu0 0.0
        %2853 = vmatprep.subr.mxu0 0.0
        %2854 = vmatpush2.msra.mxu0 0.0
        %2855 = vmatprep.subr.mxu0 0.0
        %2856 = vmatpush2.msra.mxu0 0.0
        %2857 = vmatprep.subr.mxu0 0.0
        %2858 = vmatpush2.msra.mxu0 0.0
        %2859 = vmatprep.subr.mxu0 0.0
        %2860 = vmatpush2.msra.mxu0 0.0
        %2861 = vmatprep.subr.mxu0 0.0
        %2862 = vmatpush2.msra.mxu0 0.0
        %2863 = vmatprep.subr.mxu0 0.0
        %2864 = vmatpush2.msra.mxu0 0.0
        %2865 = vmatprep.mubr.f32.mxu0 0.0
        %2866 = vmatmul.mubr.f32.gmra.mxu0 %v2167
        %v2867 = vpop.f32.mrf.mxu0
        %v2868 = vadd.f32 %v2149, %v2867
        %v2869 = vpop.f32.mrf.mxu0
        %v2870 = vadd.f32 %v2149, %v2869
        %2871 = vmatprep.mubr.f32.mxu0 0.0
        %2872 = vmatmul.mubr.f32.gmra.mxu0 %v2170
        %v2873 = vpop.f32.mrf.mxu0
        %v2874 = vadd.f32 %v2154, %v2873
        %v2875 = vpop.f32.mrf.mxu0
        %v2876 = vadd.f32 %v2154, %v2875
        %2877 = vmatprep.mubr.f32.mxu0 0.0
        %2878 = vmatmul.mubr.f32.gmra.mxu0 %v2173
        %v2879 = vpop.f32.mrf.mxu0
        %v2880 = vadd.f32 %v2159, %v2879
        %v2881 = vpop.f32.mrf.mxu0
        %v2882 = vadd.f32 %v2159, %v2881
        %2883 = vmatprep.mubr.f32.mxu0 0.0
        %2884 = vmatmul.mubr.f32.gmra.mxu0 %v2176
        %v2885 = vpop.f32.mrf.mxu0
        %v2886 = vadd.f32 %v2164, %v2885
        %v2887 = vpop.f32.mrf.mxu0
        %v2888 = vadd.f32 %v2164, %v2887
        %2889 = vdwg.mxu0
        %v2890 = vmul.f32 %v2245, 0.5
        %v2891 = vmul.f32 %v2247, 0.5
        %v2892 = vmul.f32 %v2334, 0.5
        %v2893 = vmul.f32 %v2336, 0.5
        %v2894 = vmul.f32 %v2423, 0.5
        %v2895 = vmul.f32 %v2425, 0.5
        %v2896 = vmul.f32 %v2512, 0.5
        %v2897 = vmul.f32 %v2514, 0.5
        %v2898 = vmul.f32 %v2601, 0.5
        %v2899 = vmul.f32 %v2603, 0.5
        %v2900 = vmul.f32 %v2690, 0.5
        %v2901 = vmul.f32 %v2692, 0.5
        %v2902 = vmul.f32 %v2779, 0.5
        %v2903 = vmul.f32 %v2781, 0.5
        %v2904 = vmul.f32 %v2868, 0.5
        %v2905 = vmul.f32 %v2870, 0.5
        %v2906 = vmul.f32 %v2251, 0.5
        %v2907 = vmul.f32 %v2253, 0.5
        %v2908 = vmul.f32 %v2340, 0.5
        %v2909 = vmul.f32 %v2342, 0.5
        %v2910 = vmul.f32 %v2429, 0.5
        %v2911 = vmul.f32 %v2431, 0.5
        %v2912 = vmul.f32 %v2518, 0.5
        %v2913 = vmul.f32 %v2520, 0.5
        %v2914 = vmul.f32 %v2607, 0.5
        %v2915 = vmul.f32 %v2609, 0.5
        %v2916 = vmul.f32 %v2696, 0.5
        %v2917 = vmul.f32 %v2698, 0.5
        %v2918 = vmul.f32 %v2785, 0.5
        %v2919 = vmul.f32 %v2787, 0.5
        %v2920 = vmul.f32 %v2874, 0.5
        %v2921 = vmul.f32 %v2876, 0.5
        %v2922 = vmul.f32 %v2257, 0.5
        %v2923 = vmul.f32 %v2259, 0.5
        %v2924 = vmul.f32 %v2346, 0.5
        %v2925 = vmul.f32 %v2348, 0.5
        %v2926 = vmul.f32 %v2435, 0.5
        %v2927 = vmul.f32 %v2437, 0.5
        %v2928 = vmul.f32 %v2524, 0.5
        %v2929 = vmul.f32 %v2526, 0.5
        %v2930 = vmul.f32 %v2613, 0.5
        %v2931 = vmul.f32 %v2615, 0.5
        %v2932 = vmul.f32 %v2702, 0.5
        %v2933 = vmul.f32 %v2704, 0.5
        %v2934 = vmul.f32 %v2791, 0.5
        %v2935 = vmul.f32 %v2793, 0.5
        %v2936 = vmul.f32 %v2880, 0.5
        %v2937 = vmul.f32 %v2882, 0.5
        %v2938 = vmul.f32 %v2263, 0.5
        %v2939 = vmul.f32 %v2265, 0.5
        %v2940 = vmul.f32 %v2352, 0.5
        %v2941 = vmul.f32 %v2354, 0.5
        %v2942 = vmul.f32 %v2441, 0.5
        %v2943 = vmul.f32 %v2443, 0.5
        %v2944 = vmul.f32 %v2530, 0.5
        %v2945 = vmul.f32 %v2532, 0.5
        %v2946 = vmul.f32 %v2619, 0.5
        %v2947 = vmul.f32 %v2621, 0.5
        %v2948 = vmul.f32 %v2708, 0.5
        %v2949 = vmul.f32 %v2710, 0.5
        %v2950 = vmul.f32 %v2797, 0.5
        %v2951 = vmul.f32 %v2799, 0.5
        %v2952 = vmul.f32 %v2886, 0.5
        %v2953 = vmul.f32 %v2888, 0.5
        %v2954 = vmul.f32 %v2245, 0.70710677
        %v2955 = vmul.f32 %v2247, 0.70710677
        %v2956 = vmul.f32 %v2334, 0.70710677
        %v2957 = vmul.f32 %v2336, 0.70710677
        %v2958 = vmul.f32 %v2423, 0.70710677
        %v2959 = vmul.f32 %v2425, 0.70710677
        %v2960 = vmul.f32 %v2512, 0.70710677
        %v2961 = vmul.f32 %v2514, 0.70710677
        %v2962 = vmul.f32 %v2601, 0.70710677
        %v2963 = vmul.f32 %v2603, 0.70710677
        %v2964 = vmul.f32 %v2690, 0.70710677
        %v2965 = vmul.f32 %v2692, 0.70710677
        %v2966 = vmul.f32 %v2779, 0.70710677
        %v2967 = vmul.f32 %v2781, 0.70710677
        %v2968 = vmul.f32 %v2868, 0.70710677
        %v2969 = vmul.f32 %v2870, 0.70710677
        %v2970 = vmul.f32 %v2251, 0.70710677
        %v2971 = vmul.f32 %v2253, 0.70710677
        %v2972 = vmul.f32 %v2340, 0.70710677
        %v2973 = vmul.f32 %v2342, 0.70710677
        %v2974 = vmul.f32 %v2429, 0.70710677
        %v2975 = vmul.f32 %v2431, 0.70710677
        %v2976 = vmul.f32 %v2518, 0.70710677
        %v2977 = vmul.f32 %v2520, 0.70710677
        %v2978 = vmul.f32 %v2607, 0.70710677
        %v2979 = vmul.f32 %v2609, 0.70710677
        %v2980 = vmul.f32 %v2696, 0.70710677
        %v2981 = vmul.f32 %v2698, 0.70710677
        %v2982 = vmul.f32 %v2785, 0.70710677
        %v2983 = vmul.f32 %v2787, 0.70710677
        %v2984 = vmul.f32 %v2874, 0.70710677
        %v2985 = vmul.f32 %v2876, 0.70710677
        %v2986 = vmul.f32 %v2257, 0.70710677
        %v2987 = vmul.f32 %v2259, 0.70710677
        %v2988 = vmul.f32 %v2346, 0.70710677
        %v2989 = vmul.f32 %v2348, 0.70710677
        %v2990 = vmul.f32 %v2435, 0.70710677
        %v2991 = vmul.f32 %v2437, 0.70710677
        %v2992 = vmul.f32 %v2524, 0.70710677
        %v2993 = vmul.f32 %v2526, 0.70710677
        %v2994 = vmul.f32 %v2613, 0.70710677
        %v2995 = vmul.f32 %v2615, 0.70710677
        %v2996 = vmul.f32 %v2702, 0.70710677
        %v2997 = vmul.f32 %v2704, 0.70710677
        %v2998 = vmul.f32 %v2791, 0.70710677
        %v2999 = vmul.f32 %v2793, 0.70710677
        %v3000 = vmul.f32 %v2880, 0.70710677
        %v3001 = vmul.f32 %v2882, 0.70710677
        %v3002 = vmul.f32 %v2263, 0.70710677
        %v3003 = vmul.f32 %v2265, 0.70710677
        %v3004 = vmul.f32 %v2352, 0.70710677
        %v3005 = vmul.f32 %v2354, 0.70710677
        %v3006 = vmul.f32 %v2441, 0.70710677
        %v3007 = vmul.f32 %v2443, 0.70710677
        %v3008 = vmul.f32 %v2530, 0.70710677
        %v3009 = vmul.f32 %v2532, 0.70710677
        %v3010 = vmul.f32 %v2619, 0.70710677
        %v3011 = vmul.f32 %v2621, 0.70710677
        %v3012 = vmul.f32 %v2708, 0.70710677
        %v3013 = vmul.f32 %v2710, 0.70710677
        %v3014 = vmul.f32 %v2797, 0.70710677
        %v3015 = vmul.f32 %v2799, 0.70710677
        %v3016 = vmul.f32 %v2886, 0.70710677
        %v3017 = vmul.f32 %v2888, 0.70710677
        %v3018 = verf.f32.pop %v2954
        %v3019 = verf.f32.pop %v2955
        %v3020 = verf.f32.pop %v2956
        %v3021 = verf.f32.pop %v2957
        %v3022 = verf.f32.pop %v2958
        %v3023 = verf.f32.pop %v2959
        %v3024 = verf.f32.pop %v2960
        %v3025 = verf.f32.pop %v2961
        %v3026 = verf.f32.pop %v2962
        %v3027 = verf.f32.pop %v2963
        %v3028 = verf.f32.pop %v2964
        %v3029 = verf.f32.pop %v2965
        %v3030 = verf.f32.pop %v2966
        %v3031 = verf.f32.pop %v2967
        %v3032 = verf.f32.pop %v2968
        %v3033 = verf.f32.pop %v2969
        %v3034 = verf.f32.pop %v2970
        %v3035 = verf.f32.pop %v2971
        %v3036 = verf.f32.pop %v2972
        %v3037 = verf.f32.pop %v2973
        %v3038 = verf.f32.pop %v2974
        %v3039 = verf.f32.pop %v2975
        %v3040 = verf.f32.pop %v2976
        %v3041 = verf.f32.pop %v2977
        %v3042 = verf.f32.pop %v2978
        %v3043 = verf.f32.pop %v2979
        %v3044 = verf.f32.pop %v2980
        %v3045 = verf.f32.pop %v2981
        %v3046 = verf.f32.pop %v2982
        %v3047 = verf.f32.pop %v2983
        %v3048 = verf.f32.pop %v2984
        %v3049 = verf.f32.pop %v2985
        %v3050 = verf.f32.pop %v2986
        %v3051 = verf.f32.pop %v2987
        %v3052 = verf.f32.pop %v2988
        %v3053 = verf.f32.pop %v2989
        %v3054 = verf.f32.pop %v2990
        %v3055 = verf.f32.pop %v2991
        %v3056 = verf.f32.pop %v2992
        %v3057 = verf.f32.pop %v2993
        %v3058 = verf.f32.pop %v2994
        %v3059 = verf.f32.pop %v2995
        %v3060 = verf.f32.pop %v2996
        %v3061 = verf.f32.pop %v2997
        %v3062 = verf.f32.pop %v2998
        %v3063 = verf.f32.pop %v2999
        %v3064 = verf.f32.pop %v3000
        %v3065 = verf.f32.pop %v3001
        %v3066 = verf.f32.pop %v3002
        %v3067 = verf.f32.pop %v3003
        %v3068 = verf.f32.pop %v3004
        %v3069 = verf.f32.pop %v3005
        %v3070 = verf.f32.pop %v3006
        %v3071 = verf.f32.pop %v3007
        %v3072 = verf.f32.pop %v3008
        %v3073 = verf.f32.pop %v3009
        %v3074 = verf.f32.pop %v3010
        %v3075 = verf.f32.pop %v3011
        %v3076 = verf.f32.pop %v3012
        %v3077 = verf.f32.pop %v3013
        %v3078 = verf.f32.pop %v3014
        %v3079 = verf.f32.pop %v3015
        %v3080 = verf.f32.pop %v3016
        %v3081 = verf.f32.pop %v3017
        %v3082 = vadd.f32 %v3018, 1.0
        %v3083 = vadd.f32 %v3019, 1.0
        %v3084 = vadd.f32 %v3020, 1.0
        %v3085 = vadd.f32 %v3021, 1.0
        %v3086 = vadd.f32 %v3022, 1.0
        %v3087 = vadd.f32 %v3023, 1.0
        %v3088 = vadd.f32 %v3024, 1.0
        %v3089 = vadd.f32 %v3025, 1.0
        %v3090 = vadd.f32 %v3026, 1.0
        %v3091 = vadd.f32 %v3027, 1.0
        %v3092 = vadd.f32 %v3028, 1.0
        %v3093 = vadd.f32 %v3029, 1.0
        %v3094 = vadd.f32 %v3030, 1.0
        %v3095 = vadd.f32 %v3031, 1.0
        %v3096 = vadd.f32 %v3032, 1.0
        %v3097 = vadd.f32 %v3033, 1.0
        %v3098 = vadd.f32 %v3034, 1.0
        %v3099 = vadd.f32 %v3035, 1.0
        %v3100 = vadd.f32 %v3036, 1.0
        %v3101 = vadd.f32 %v3037, 1.0
        %v3102 = vadd.f32 %v3038, 1.0
        %v3103 = vadd.f32 %v3039, 1.0
        %v3104 = vadd.f32 %v3040, 1.0
        %v3105 = vadd.f32 %v3041, 1.0
        %v3106 = vadd.f32 %v3042, 1.0
        %v3107 = vadd.f32 %v3043, 1.0
        %v3108 = vadd.f32 %v3044, 1.0
        %v3109 = vadd.f32 %v3045, 1.0
        %v3110 = vadd.f32 %v3046, 1.0
        %v3111 = vadd.f32 %v3047, 1.0
        %v3112 = vadd.f32 %v3048, 1.0
        %v3113 = vadd.f32 %v3049, 1.0
        %v3114 = vadd.f32 %v3050, 1.0
        %v3115 = vadd.f32 %v3051, 1.0
        %v3116 = vadd.f32 %v3052, 1.0
        %v3117 = vadd.f32 %v3053, 1.0
        %v3118 = vadd.f32 %v3054, 1.0
        %v3119 = vadd.f32 %v3055, 1.0
        %v3120 = vadd.f32 %v3056, 1.0
        %v3121 = vadd.f32 %v3057, 1.0
        %v3122 = vadd.f32 %v3058, 1.0
        %v3123 = vadd.f32 %v3059, 1.0
        %v3124 = vadd.f32 %v3060, 1.0
        %v3125 = vadd.f32 %v3061, 1.0
        %v3126 = vadd.f32 %v3062, 1.0
        %v3127 = vadd.f32 %v3063, 1.0
        %v3128 = vadd.f32 %v3064, 1.0
        %v3129 = vadd.f32 %v3065, 1.0
        %v3130 = vadd.f32 %v3066, 1.0
        %v3131 = vadd.f32 %v3067, 1.0
        %v3132 = vadd.f32 %v3068, 1.0
        %v3133 = vadd.f32 %v3069, 1.0
        %v3134 = vadd.f32 %v3070, 1.0
        %v3135 = vadd.f32 %v3071, 1.0
        %v3136 = vadd.f32 %v3072, 1.0
        %v3137 = vadd.f32 %v3073, 1.0
        %v3138 = vadd.f32 %v3074, 1.0
        %v3139 = vadd.f32 %v3075, 1.0
        %v3140 = vadd.f32 %v3076, 1.0
        %v3141 = vadd.f32 %v3077, 1.0
        %v3142 = vadd.f32 %v3078, 1.0
        %v3143 = vadd.f32 %v3079, 1.0
        %v3144 = vadd.f32 %v3080, 1.0
        %v3145 = vadd.f32 %v3081, 1.0
        %v3146 = vmul.f32 %v2890, %v3082
        %v3147 = vmul.f32 %v2891, %v3083
        %v3148 = vmul.f32 %v2892, %v3084
        %v3149 = vmul.f32 %v2893, %v3085
        %v3150 = vmul.f32 %v2894, %v3086
        %v3151 = vmul.f32 %v2895, %v3087
        %v3152 = vmul.f32 %v2896, %v3088
        %v3153 = vmul.f32 %v2897, %v3089
        %v3154 = vmul.f32 %v2898, %v3090
        %v3155 = vmul.f32 %v2899, %v3091
        %v3156 = vmul.f32 %v2900, %v3092
        %v3157 = vmul.f32 %v2901, %v3093
        %v3158 = vmul.f32 %v2902, %v3094
        %v3159 = vmul.f32 %v2903, %v3095
        %v3160 = vmul.f32 %v2904, %v3096
        %v3161 = vmul.f32 %v2905, %v3097
        %v3162 = vmul.f32 %v2906, %v3098
        %v3163 = vmul.f32 %v2907, %v3099
        %v3164 = vmul.f32 %v2908, %v3100
        %v3165 = vmul.f32 %v2909, %v3101
        %v3166 = vmul.f32 %v2910, %v3102
        %v3167 = vmul.f32 %v2911, %v3103
        %v3168 = vmul.f32 %v2912, %v3104
        %v3169 = vmul.f32 %v2913, %v3105
        %v3170 = vmul.f32 %v2914, %v3106
        %v3171 = vmul.f32 %v2915, %v3107
        %v3172 = vmul.f32 %v2916, %v3108
        %v3173 = vmul.f32 %v2917, %v3109
        %v3174 = vmul.f32 %v2918, %v3110
        %v3175 = vmul.f32 %v2919, %v3111
        %v3176 = vmul.f32 %v2920, %v3112
        %v3177 = vmul.f32 %v2921, %v3113
        %v3178 = vmul.f32 %v2922, %v3114
        %v3179 = vmul.f32 %v2923, %v3115
        %v3180 = vmul.f32 %v2924, %v3116
        %v3181 = vmul.f32 %v2925, %v3117
        %v3182 = vmul.f32 %v2926, %v3118
        %v3183 = vmul.f32 %v2927, %v3119
        %v3184 = vmul.f32 %v2928, %v3120
        %v3185 = vmul.f32 %v2929, %v3121
        %v3186 = vmul.f32 %v2930, %v3122
        %v3187 = vmul.f32 %v2931, %v3123
        %v3188 = vmul.f32 %v2932, %v3124
        %v3189 = vmul.f32 %v2933, %v3125
        %v3190 = vmul.f32 %v2934, %v3126
        %v3191 = vmul.f32 %v2935, %v3127
        %v3192 = vmul.f32 %v2936, %v3128
        %v3193 = vmul.f32 %v2937, %v3129
        %v3194 = vmul.f32 %v2938, %v3130
        %v3195 = vmul.f32 %v2939, %v3131
        %v3196 = vmul.f32 %v2940, %v3132
        %v3197 = vmul.f32 %v2941, %v3133
        %v3198 = vmul.f32 %v2942, %v3134
        %v3199 = vmul.f32 %v2943, %v3135
        %v3200 = vmul.f32 %v2944, %v3136
        %v3201 = vmul.f32 %v2945, %v3137
        %v3202 = vmul.f32 %v2946, %v3138
        %v3203 = vmul.f32 %v2947, %v3139
        %v3204 = vmul.f32 %v2948, %v3140
        %v3205 = vmul.f32 %v2949, %v3141
        %v3206 = vmul.f32 %v2950, %v3142
        %v3207 = vmul.f32 %v2951, %v3143
        %v3208 = vmul.f32 %v2952, %v3144
        %v3209 = vmul.f32 %v2953, %v3145
        %s3210 = scalar_lea.vmem [#allocation2], 96
        %v3211 = vld [vmem:[%s3210] sm:$0xff]
        %s3212 = scalar_lea.vmem %s2, 96
        %v3213 = vld [vmem:[%s3212] sm:$0xff]
        %3215 = vset.pattern.permute.xlu0 0
        %3216 = vperm.xlu0 %3215, %v3213
        %v3217 = vpop.permute.xlu0 %3216
        %v3220 = vsel %vm1091, %v3211, 0
        %3222 = vmatprep.subr.mxu0 0.0
        %3223 = vmatpush1.msra.mxu0 0.0
        %3224 = vmatprep.subr.mxu0 0.0
        %3225 = vmatpush1.msra.mxu0 0.0
        %3226 = vmatprep.subr.mxu0 0.0
        %3227 = vmatpush1.msra.mxu0 0.0
        %3228 = vmatprep.subr.mxu0 0.0
        %3229 = vmatpush1.msra.mxu0 0.0
        %3230 = vmatprep.subr.mxu0 0.0
        %3231 = vmatpush1.msra.mxu0 0.0
        %3232 = vmatprep.subr.mxu0 0.0
        %3233 = vmatpush1.msra.mxu0 0.0
        %3234 = vmatprep.subr.mxu0 0.0
        %3235 = vmatpush1.msra.mxu0 0.0
        %3236 = vmatprep.subr.mxu0 0.0
        %3237 = vmatpush1.msra.mxu0 0.0
        %3238 = vmatprep.subr.mxu0 0.0
        %3239 = vmatpush1.msra.mxu0 0.0
        %3240 = vmatprep.subr.mxu0 0.0
        %3241 = vmatpush1.msra.mxu0 0.0
        %3242 = vmatprep.subr.mxu0 0.0
        %3243 = vmatpush1.msra.mxu0 0.0
        %3244 = vmatprep.subr.mxu0 0.0
        %3245 = vmatpush1.msra.mxu0 0.0
        %3246 = vmatprep.subr.mxu0 %v3195
        %3247 = vmatpush1.msra.mxu0 %v3194
        %3248 = vmatprep.subr.mxu0 %v3179
        %3249 = vmatpush1.msra.mxu0 %v3178
        %3250 = vmatprep.subr.mxu0 %v3163
        %3251 = vmatpush1.msra.mxu0 %v3162
        %3252 = vmatprep.subr.mxu0 %v3147
        %3253 = vmatpush1.msra.mxu0 %v3146
        %3254 = vmatprep.subr.mxu0 0.0
        %3255 = vmatpush2.msra.mxu0 0.0
        %3256 = vmatprep.subr.mxu0 0.0
        %3257 = vmatpush2.msra.mxu0 0.0
        %3258 = vmatprep.subr.mxu0 0.0
        %3259 = vmatpush2.msra.mxu0 0.0
        %3260 = vmatprep.subr.mxu0 0.0
        %3261 = vmatpush2.msra.mxu0 0.0
        %3262 = vmatprep.subr.mxu0 0.0
        %3263 = vmatpush2.msra.mxu0 0.0
        %3264 = vmatprep.subr.mxu0 0.0
        %3265 = vmatpush2.msra.mxu0 0.0
        %3266 = vmatprep.subr.mxu0 0.0
        %3267 = vmatpush2.msra.mxu0 0.0
        %3268 = vmatprep.subr.mxu0 0.0
        %3269 = vmatpush2.msra.mxu0 0.0
        %3270 = vmatprep.subr.mxu0 0.0
        %3271 = vmatpush2.msra.mxu0 0.0
        %3272 = vmatprep.subr.mxu0 0.0
        %3273 = vmatpush2.msra.mxu0 0.0
        %3274 = vmatprep.subr.mxu0 0.0
        %3275 = vmatpush2.msra.mxu0 0.0
        %3276 = vmatprep.subr.mxu0 0.0
        %3277 = vmatpush2.msra.mxu0 0.0
        %3278 = vmatprep.subr.mxu0 0.0
        %3279 = vmatpush2.msra.mxu0 0.0
        %3280 = vmatprep.subr.mxu0 0.0
        %3281 = vmatpush2.msra.mxu0 0.0
        %3282 = vmatprep.subr.mxu0 0.0
        %3283 = vmatpush2.msra.mxu0 0.0
        %3284 = vmatprep.subr.mxu0 0.0
        %3285 = vmatpush2.msra.mxu0 0.0
        %3286 = vmatprep.mubr.f32.mxu0 0.0
        %3287 = vmatmul.mubr.f32.gmra.mxu0 %v3220
        %v3288 = vpop.f32.mrf.mxu0
        %v3289 = vadd.f32 %v3217, %v3288
        %v3290 = vpop.f32.mrf.mxu0
        %v3291 = vadd.f32 %v3217, %v3290
        %3292 = vdwg.mxu0
        %3293 = vmatprep.subr.mxu0 0.0
        %3294 = vmatpush1.msra.mxu0 0.0
        %3295 = vmatprep.subr.mxu0 0.0
        %3296 = vmatpush1.msra.mxu0 0.0
        %3297 = vmatprep.subr.mxu0 0.0
        %3298 = vmatpush1.msra.mxu0 0.0
        %3299 = vmatprep.subr.mxu0 0.0
        %3300 = vmatpush1.msra.mxu0 0.0
        %3301 = vmatprep.subr.mxu0 0.0
        %3302 = vmatpush1.msra.mxu0 0.0
        %3303 = vmatprep.subr.mxu0 0.0
        %3304 = vmatpush1.msra.mxu0 0.0
        %3305 = vmatprep.subr.mxu0 0.0
        %3306 = vmatpush1.msra.mxu0 0.0
        %3307 = vmatprep.subr.mxu0 0.0
        %3308 = vmatpush1.msra.mxu0 0.0
        %3309 = vmatprep.subr.mxu0 0.0
        %3310 = vmatpush1.msra.mxu0 0.0
        %3311 = vmatprep.subr.mxu0 0.0
        %3312 = vmatpush1.msra.mxu0 0.0
        %3313 = vmatprep.subr.mxu0 0.0
        %3314 = vmatpush1.msra.mxu0 0.0
        %3315 = vmatprep.subr.mxu0 0.0
        %3316 = vmatpush1.msra.mxu0 0.0
        %3317 = vmatprep.subr.mxu0 %v3197
        %3318 = vmatpush1.msra.mxu0 %v3196
        %3319 = vmatprep.subr.mxu0 %v3181
        %3320 = vmatpush1.msra.mxu0 %v3180
        %3321 = vmatprep.subr.mxu0 %v3165
        %3322 = vmatpush1.msra.mxu0 %v3164
        %3323 = vmatprep.subr.mxu0 %v3149
        %3324 = vmatpush1.msra.mxu0 %v3148
        %3325 = vmatprep.subr.mxu0 0.0
        %3326 = vmatpush2.msra.mxu0 0.0
        %3327 = vmatprep.subr.mxu0 0.0
        %3328 = vmatpush2.msra.mxu0 0.0
        %3329 = vmatprep.subr.mxu0 0.0
        %3330 = vmatpush2.msra.mxu0 0.0
        %3331 = vmatprep.subr.mxu0 0.0
        %3332 = vmatpush2.msra.mxu0 0.0
        %3333 = vmatprep.subr.mxu0 0.0
        %3334 = vmatpush2.msra.mxu0 0.0
        %3335 = vmatprep.subr.mxu0 0.0
        %3336 = vmatpush2.msra.mxu0 0.0
        %3337 = vmatprep.subr.mxu0 0.0
        %3338 = vmatpush2.msra.mxu0 0.0
        %3339 = vmatprep.subr.mxu0 0.0
        %3340 = vmatpush2.msra.mxu0 0.0
        %3341 = vmatprep.subr.mxu0 0.0
        %3342 = vmatpush2.msra.mxu0 0.0
        %3343 = vmatprep.subr.mxu0 0.0
        %3344 = vmatpush2.msra.mxu0 0.0
        %3345 = vmatprep.subr.mxu0 0.0
        %3346 = vmatpush2.msra.mxu0 0.0
        %3347 = vmatprep.subr.mxu0 0.0
        %3348 = vmatpush2.msra.mxu0 0.0
        %3349 = vmatprep.subr.mxu0 0.0
        %3350 = vmatpush2.msra.mxu0 0.0
        %3351 = vmatprep.subr.mxu0 0.0
        %3352 = vmatpush2.msra.mxu0 0.0
        %3353 = vmatprep.subr.mxu0 0.0
        %3354 = vmatpush2.msra.mxu0 0.0
        %3355 = vmatprep.subr.mxu0 0.0
        %3356 = vmatpush2.msra.mxu0 0.0
        %3357 = vmatprep.mubr.f32.mxu0 0.0
        %3358 = vmatmul.mubr.f32.gmra.mxu0 %v3220
        %v3359 = vpop.f32.mrf.mxu0
        %v3360 = vadd.f32 %v3217, %v3359
        %v3361 = vpop.f32.mrf.mxu0
        %v3362 = vadd.f32 %v3217, %v3361
        %3363 = vdwg.mxu0
        %3364 = vmatprep.subr.mxu0 0.0
        %3365 = vmatpush1.msra.mxu0 0.0
        %3366 = vmatprep.subr.mxu0 0.0
        %3367 = vmatpush1.msra.mxu0 0.0
        %3368 = vmatprep.subr.mxu0 0.0
        %3369 = vmatpush1.msra.mxu0 0.0
        %3370 = vmatprep.subr.mxu0 0.0
        %3371 = vmatpush1.msra.mxu0 0.0
        %3372 = vmatprep.subr.mxu0 0.0
        %3373 = vmatpush1.msra.mxu0 0.0
        %3374 = vmatprep.subr.mxu0 0.0
        %3375 = vmatpush1.msra.mxu0 0.0
        %3376 = vmatprep.subr.mxu0 0.0
        %3377 = vmatpush1.msra.mxu0 0.0
        %3378 = vmatprep.subr.mxu0 0.0
        %3379 = vmatpush1.msra.mxu0 0.0
        %3380 = vmatprep.subr.mxu0 0.0
        %3381 = vmatpush1.msra.mxu0 0.0
        %3382 = vmatprep.subr.mxu0 0.0
        %3383 = vmatpush1.msra.mxu0 0.0
        %3384 = vmatprep.subr.mxu0 0.0
        %3385 = vmatpush1.msra.mxu0 0.0
        %3386 = vmatprep.subr.mxu0 0.0
        %3387 = vmatpush1.msra.mxu0 0.0
        %3388 = vmatprep.subr.mxu0 %v3199
        %3389 = vmatpush1.msra.mxu0 %v3198
        %3390 = vmatprep.subr.mxu0 %v3183
        %3391 = vmatpush1.msra.mxu0 %v3182
        %3392 = vmatprep.subr.mxu0 %v3167
        %3393 = vmatpush1.msra.mxu0 %v3166
        %3394 = vmatprep.subr.mxu0 %v3151
        %3395 = vmatpush1.msra.mxu0 %v3150
        %3396 = vmatprep.subr.mxu0 0.0
        %3397 = vmatpush2.msra.mxu0 0.0
        %3398 = vmatprep.subr.mxu0 0.0
        %3399 = vmatpush2.msra.mxu0 0.0
        %3400 = vmatprep.subr.mxu0 0.0
        %3401 = vmatpush2.msra.mxu0 0.0
        %3402 = vmatprep.subr.mxu0 0.0
        %3403 = vmatpush2.msra.mxu0 0.0
        %3404 = vmatprep.subr.mxu0 0.0
        %3405 = vmatpush2.msra.mxu0 0.0
        %3406 = vmatprep.subr.mxu0 0.0
        %3407 = vmatpush2.msra.mxu0 0.0
        %3408 = vmatprep.subr.mxu0 0.0
        %3409 = vmatpush2.msra.mxu0 0.0
        %3410 = vmatprep.subr.mxu0 0.0
        %3411 = vmatpush2.msra.mxu0 0.0
        %3412 = vmatprep.subr.mxu0 0.0
        %3413 = vmatpush2.msra.mxu0 0.0
        %3414 = vmatprep.subr.mxu0 0.0
        %3415 = vmatpush2.msra.mxu0 0.0
        %3416 = vmatprep.subr.mxu0 0.0
        %3417 = vmatpush2.msra.mxu0 0.0
        %3418 = vmatprep.subr.mxu0 0.0
        %3419 = vmatpush2.msra.mxu0 0.0
        %3420 = vmatprep.subr.mxu0 0.0
        %3421 = vmatpush2.msra.mxu0 0.0
        %3422 = vmatprep.subr.mxu0 0.0
        %3423 = vmatpush2.msra.mxu0 0.0
        %3424 = vmatprep.subr.mxu0 0.0
        %3425 = vmatpush2.msra.mxu0 0.0
        %3426 = vmatprep.subr.mxu0 0.0
        %3427 = vmatpush2.msra.mxu0 0.0
        %3428 = vmatprep.mubr.f32.mxu0 0.0
        %3429 = vmatmul.mubr.f32.gmra.mxu0 %v3220
        %v3430 = vpop.f32.mrf.mxu0
        %v3431 = vadd.f32 %v3217, %v3430
        %v3432 = vpop.f32.mrf.mxu0
        %v3433 = vadd.f32 %v3217, %v3432
        %3434 = vdwg.mxu0
        %3435 = vmatprep.subr.mxu0 0.0
        %3436 = vmatpush1.msra.mxu0 0.0
        %3437 = vmatprep.subr.mxu0 0.0
        %3438 = vmatpush1.msra.mxu0 0.0
        %3439 = vmatprep.subr.mxu0 0.0
        %3440 = vmatpush1.msra.mxu0 0.0
        %3441 = vmatprep.subr.mxu0 0.0
        %3442 = vmatpush1.msra.mxu0 0.0
        %3443 = vmatprep.subr.mxu0 0.0
        %3444 = vmatpush1.msra.mxu0 0.0
        %3445 = vmatprep.subr.mxu0 0.0
        %3446 = vmatpush1.msra.mxu0 0.0
        %3447 = vmatprep.subr.mxu0 0.0
        %3448 = vmatpush1.msra.mxu0 0.0
        %3449 = vmatprep.subr.mxu0 0.0
        %3450 = vmatpush1.msra.mxu0 0.0
        %3451 = vmatprep.subr.mxu0 0.0
        %3452 = vmatpush1.msra.mxu0 0.0
        %3453 = vmatprep.subr.mxu0 0.0
        %3454 = vmatpush1.msra.mxu0 0.0
        %3455 = vmatprep.subr.mxu0 0.0
        %3456 = vmatpush1.msra.mxu0 0.0
        %3457 = vmatprep.subr.mxu0 0.0
        %3458 = vmatpush1.msra.mxu0 0.0
        %3459 = vmatprep.subr.mxu0 %v3201
        %3460 = vmatpush1.msra.mxu0 %v3200
        %3461 = vmatprep.subr.mxu0 %v3185
        %3462 = vmatpush1.msra.mxu0 %v3184
        %3463 = vmatprep.subr.mxu0 %v3169
        %3464 = vmatpush1.msra.mxu0 %v3168
        %3465 = vmatprep.subr.mxu0 %v3153
        %3466 = vmatpush1.msra.mxu0 %v3152
        %3467 = vmatprep.subr.mxu0 0.0
        %3468 = vmatpush2.msra.mxu0 0.0
        %3469 = vmatprep.subr.mxu0 0.0
        %3470 = vmatpush2.msra.mxu0 0.0
        %3471 = vmatprep.subr.mxu0 0.0
        %3472 = vmatpush2.msra.mxu0 0.0
        %3473 = vmatprep.subr.mxu0 0.0
        %3474 = vmatpush2.msra.mxu0 0.0
        %3475 = vmatprep.subr.mxu0 0.0
        %3476 = vmatpush2.msra.mxu0 0.0
        %3477 = vmatprep.subr.mxu0 0.0
        %3478 = vmatpush2.msra.mxu0 0.0
        %3479 = vmatprep.subr.mxu0 0.0
        %3480 = vmatpush2.msra.mxu0 0.0
        %3481 = vmatprep.subr.mxu0 0.0
        %3482 = vmatpush2.msra.mxu0 0.0
        %3483 = vmatprep.subr.mxu0 0.0
        %3484 = vmatpush2.msra.mxu0 0.0
        %3485 = vmatprep.subr.mxu0 0.0
        %3486 = vmatpush2.msra.mxu0 0.0
        %3487 = vmatprep.subr.mxu0 0.0
        %3488 = vmatpush2.msra.mxu0 0.0
        %3489 = vmatprep.subr.mxu0 0.0
        %3490 = vmatpush2.msra.mxu0 0.0
        %3491 = vmatprep.subr.mxu0 0.0
        %3492 = vmatpush2.msra.mxu0 0.0
        %3493 = vmatprep.subr.mxu0 0.0
        %3494 = vmatpush2.msra.mxu0 0.0
        %3495 = vmatprep.subr.mxu0 0.0
        %3496 = vmatpush2.msra.mxu0 0.0
        %3497 = vmatprep.subr.mxu0 0.0
        %3498 = vmatpush2.msra.mxu0 0.0
        %3499 = vmatprep.mubr.f32.mxu0 0.0
        %3500 = vmatmul.mubr.f32.gmra.mxu0 %v3220
        %v3501 = vpop.f32.mrf.mxu0
        %v3502 = vadd.f32 %v3217, %v3501
        %v3503 = vpop.f32.mrf.mxu0
        %v3504 = vadd.f32 %v3217, %v3503
        %3505 = vdwg.mxu0
        %3506 = vmatprep.subr.mxu0 0.0
        %3507 = vmatpush1.msra.mxu0 0.0
        %3508 = vmatprep.subr.mxu0 0.0
        %3509 = vmatpush1.msra.mxu0 0.0
        %3510 = vmatprep.subr.mxu0 0.0
        %3511 = vmatpush1.msra.mxu0 0.0
        %3512 = vmatprep.subr.mxu0 0.0
        %3513 = vmatpush1.msra.mxu0 0.0
        %3514 = vmatprep.subr.mxu0 0.0
        %3515 = vmatpush1.msra.mxu0 0.0
        %3516 = vmatprep.subr.mxu0 0.0
        %3517 = vmatpush1.msra.mxu0 0.0
        %3518 = vmatprep.subr.mxu0 0.0
        %3519 = vmatpush1.msra.mxu0 0.0
        %3520 = vmatprep.subr.mxu0 0.0
        %3521 = vmatpush1.msra.mxu0 0.0
        %3522 = vmatprep.subr.mxu0 0.0
        %3523 = vmatpush1.msra.mxu0 0.0
        %3524 = vmatprep.subr.mxu0 0.0
        %3525 = vmatpush1.msra.mxu0 0.0
        %3526 = vmatprep.subr.mxu0 0.0
        %3527 = vmatpush1.msra.mxu0 0.0
        %3528 = vmatprep.subr.mxu0 0.0
        %3529 = vmatpush1.msra.mxu0 0.0
        %3530 = vmatprep.subr.mxu0 %v3203
        %3531 = vmatpush1.msra.mxu0 %v3202
        %3532 = vmatprep.subr.mxu0 %v3187
        %3533 = vmatpush1.msra.mxu0 %v3186
        %3534 = vmatprep.subr.mxu0 %v3171
        %3535 = vmatpush1.msra.mxu0 %v3170
        %3536 = vmatprep.subr.mxu0 %v3155
        %3537 = vmatpush1.msra.mxu0 %v3154
        %3538 = vmatprep.subr.mxu0 0.0
        %3539 = vmatpush2.msra.mxu0 0.0
        %3540 = vmatprep.subr.mxu0 0.0
        %3541 = vmatpush2.msra.mxu0 0.0
        %3542 = vmatprep.subr.mxu0 0.0
        %3543 = vmatpush2.msra.mxu0 0.0
        %3544 = vmatprep.subr.mxu0 0.0
        %3545 = vmatpush2.msra.mxu0 0.0
        %3546 = vmatprep.subr.mxu0 0.0
        %3547 = vmatpush2.msra.mxu0 0.0
        %3548 = vmatprep.subr.mxu0 0.0
        %3549 = vmatpush2.msra.mxu0 0.0
        %3550 = vmatprep.subr.mxu0 0.0
        %3551 = vmatpush2.msra.mxu0 0.0
        %3552 = vmatprep.subr.mxu0 0.0
        %3553 = vmatpush2.msra.mxu0 0.0
        %3554 = vmatprep.subr.mxu0 0.0
        %3555 = vmatpush2.msra.mxu0 0.0
        %3556 = vmatprep.subr.mxu0 0.0
        %3557 = vmatpush2.msra.mxu0 0.0
        %3558 = vmatprep.subr.mxu0 0.0
        %3559 = vmatpush2.msra.mxu0 0.0
        %3560 = vmatprep.subr.mxu0 0.0
        %3561 = vmatpush2.msra.mxu0 0.0
        %3562 = vmatprep.subr.mxu0 0.0
        %3563 = vmatpush2.msra.mxu0 0.0
        %3564 = vmatprep.subr.mxu0 0.0
        %3565 = vmatpush2.msra.mxu0 0.0
        %3566 = vmatprep.subr.mxu0 0.0
        %3567 = vmatpush2.msra.mxu0 0.0
        %3568 = vmatprep.subr.mxu0 0.0
        %3569 = vmatpush2.msra.mxu0 0.0
        %3570 = vmatprep.mubr.f32.mxu0 0.0
        %3571 = vmatmul.mubr.f32.gmra.mxu0 %v3220
        %v3572 = vpop.f32.mrf.mxu0
        %v3573 = vadd.f32 %v3217, %v3572
        %v3574 = vpop.f32.mrf.mxu0
        %v3575 = vadd.f32 %v3217, %v3574
        %3576 = vdwg.mxu0
        %3577 = vmatprep.subr.mxu0 0.0
        %3578 = vmatpush1.msra.mxu0 0.0
        %3579 = vmatprep.subr.mxu0 0.0
        %3580 = vmatpush1.msra.mxu0 0.0
        %3581 = vmatprep.subr.mxu0 0.0
        %3582 = vmatpush1.msra.mxu0 0.0
        %3583 = vmatprep.subr.mxu0 0.0
        %3584 = vmatpush1.msra.mxu0 0.0
        %3585 = vmatprep.subr.mxu0 0.0
        %3586 = vmatpush1.msra.mxu0 0.0
        %3587 = vmatprep.subr.mxu0 0.0
        %3588 = vmatpush1.msra.mxu0 0.0
        %3589 = vmatprep.subr.mxu0 0.0
        %3590 = vmatpush1.msra.mxu0 0.0
        %3591 = vmatprep.subr.mxu0 0.0
        %3592 = vmatpush1.msra.mxu0 0.0
        %3593 = vmatprep.subr.mxu0 0.0
        %3594 = vmatpush1.msra.mxu0 0.0
        %3595 = vmatprep.subr.mxu0 0.0
        %3596 = vmatpush1.msra.mxu0 0.0
        %3597 = vmatprep.subr.mxu0 0.0
        %3598 = vmatpush1.msra.mxu0 0.0
        %3599 = vmatprep.subr.mxu0 0.0
        %3600 = vmatpush1.msra.mxu0 0.0
        %3601 = vmatprep.subr.mxu0 %v3205
        %3602 = vmatpush1.msra.mxu0 %v3204
        %3603 = vmatprep.subr.mxu0 %v3189
        %3604 = vmatpush1.msra.mxu0 %v3188
        %3605 = vmatprep.subr.mxu0 %v3173
        %3606 = vmatpush1.msra.mxu0 %v3172
        %3607 = vmatprep.subr.mxu0 %v3157
        %3608 = vmatpush1.msra.mxu0 %v3156
        %3609 = vmatprep.subr.mxu0 0.0
        %3610 = vmatpush2.msra.mxu0 0.0
        %3611 = vmatprep.subr.mxu0 0.0
        %3612 = vmatpush2.msra.mxu0 0.0
        %3613 = vmatprep.subr.mxu0 0.0
        %3614 = vmatpush2.msra.mxu0 0.0
        %3615 = vmatprep.subr.mxu0 0.0
        %3616 = vmatpush2.msra.mxu0 0.0
        %3617 = vmatprep.subr.mxu0 0.0
        %3618 = vmatpush2.msra.mxu0 0.0
        %3619 = vmatprep.subr.mxu0 0.0
        %3620 = vmatpush2.msra.mxu0 0.0
        %3621 = vmatprep.subr.mxu0 0.0
        %3622 = vmatpush2.msra.mxu0 0.0
        %3623 = vmatprep.subr.mxu0 0.0
        %3624 = vmatpush2.msra.mxu0 0.0
        %3625 = vmatprep.subr.mxu0 0.0
        %3626 = vmatpush2.msra.mxu0 0.0
        %3627 = vmatprep.subr.mxu0 0.0
        %3628 = vmatpush2.msra.mxu0 0.0
        %3629 = vmatprep.subr.mxu0 0.0
        %3630 = vmatpush2.msra.mxu0 0.0
        %3631 = vmatprep.subr.mxu0 0.0
        %3632 = vmatpush2.msra.mxu0 0.0
        %3633 = vmatprep.subr.mxu0 0.0
        %3634 = vmatpush2.msra.mxu0 0.0
        %3635 = vmatprep.subr.mxu0 0.0
        %3636 = vmatpush2.msra.mxu0 0.0
        %3637 = vmatprep.subr.mxu0 0.0
        %3638 = vmatpush2.msra.mxu0 0.0
        %3639 = vmatprep.subr.mxu0 0.0
        %3640 = vmatpush2.msra.mxu0 0.0
        %3641 = vmatprep.mubr.f32.mxu0 0.0
        %3642 = vmatmul.mubr.f32.gmra.mxu0 %v3220
        %v3643 = vpop.f32.mrf.mxu0
        %v3644 = vadd.f32 %v3217, %v3643
        %v3645 = vpop.f32.mrf.mxu0
        %v3646 = vadd.f32 %v3217, %v3645
        %3647 = vdwg.mxu0
        %3648 = vmatprep.subr.mxu0 0.0
        %3649 = vmatpush1.msra.mxu0 0.0
        %3650 = vmatprep.subr.mxu0 0.0
        %3651 = vmatpush1.msra.mxu0 0.0
        %3652 = vmatprep.subr.mxu0 0.0
        %3653 = vmatpush1.msra.mxu0 0.0
        %3654 = vmatprep.subr.mxu0 0.0
        %3655 = vmatpush1.msra.mxu0 0.0
        %3656 = vmatprep.subr.mxu0 0.0
        %3657 = vmatpush1.msra.mxu0 0.0
        %3658 = vmatprep.subr.mxu0 0.0
        %3659 = vmatpush1.msra.mxu0 0.0
        %3660 = vmatprep.subr.mxu0 0.0
        %3661 = vmatpush1.msra.mxu0 0.0
        %3662 = vmatprep.subr.mxu0 0.0
        %3663 = vmatpush1.msra.mxu0 0.0
        %3664 = vmatprep.subr.mxu0 0.0
        %3665 = vmatpush1.msra.mxu0 0.0
        %3666 = vmatprep.subr.mxu0 0.0
        %3667 = vmatpush1.msra.mxu0 0.0
        %3668 = vmatprep.subr.mxu0 0.0
        %3669 = vmatpush1.msra.mxu0 0.0
        %3670 = vmatprep.subr.mxu0 0.0
        %3671 = vmatpush1.msra.mxu0 0.0
        %3672 = vmatprep.subr.mxu0 %v3207
        %3673 = vmatpush1.msra.mxu0 %v3206
        %3674 = vmatprep.subr.mxu0 %v3191
        %3675 = vmatpush1.msra.mxu0 %v3190
        %3676 = vmatprep.subr.mxu0 %v3175
        %3677 = vmatpush1.msra.mxu0 %v3174
        %3678 = vmatprep.subr.mxu0 %v3159
        %3679 = vmatpush1.msra.mxu0 %v3158
        %3680 = vmatprep.subr.mxu0 0.0
        %3681 = vmatpush2.msra.mxu0 0.0
        %3682 = vmatprep.subr.mxu0 0.0
        %3683 = vmatpush2.msra.mxu0 0.0
        %3684 = vmatprep.subr.mxu0 0.0
        %3685 = vmatpush2.msra.mxu0 0.0
        %3686 = vmatprep.subr.mxu0 0.0
        %3687 = vmatpush2.msra.mxu0 0.0
        %3688 = vmatprep.subr.mxu0 0.0
        %3689 = vmatpush2.msra.mxu0 0.0
        %3690 = vmatprep.subr.mxu0 0.0
        %3691 = vmatpush2.msra.mxu0 0.0
        %3692 = vmatprep.subr.mxu0 0.0
        %3693 = vmatpush2.msra.mxu0 0.0
        %3694 = vmatprep.subr.mxu0 0.0
        %3695 = vmatpush2.msra.mxu0 0.0
        %3696 = vmatprep.subr.mxu0 0.0
        %3697 = vmatpush2.msra.mxu0 0.0
        %3698 = vmatprep.subr.mxu0 0.0
        %3699 = vmatpush2.msra.mxu0 0.0
        %3700 = vmatprep.subr.mxu0 0.0
        %3701 = vmatpush2.msra.mxu0 0.0
        %3702 = vmatprep.subr.mxu0 0.0
        %3703 = vmatpush2.msra.mxu0 0.0
        %3704 = vmatprep.subr.mxu0 0.0
        %3705 = vmatpush2.msra.mxu0 0.0
        %3706 = vmatprep.subr.mxu0 0.0
        %3707 = vmatpush2.msra.mxu0 0.0
        %3708 = vmatprep.subr.mxu0 0.0
        %3709 = vmatpush2.msra.mxu0 0.0
        %3710 = vmatprep.subr.mxu0 0.0
        %3711 = vmatpush2.msra.mxu0 0.0
        %3712 = vmatprep.mubr.f32.mxu0 0.0
        %3713 = vmatmul.mubr.f32.gmra.mxu0 %v3220
        %v3714 = vpop.f32.mrf.mxu0
        %v3715 = vadd.f32 %v3217, %v3714
        %v3716 = vpop.f32.mrf.mxu0
        %v3717 = vadd.f32 %v3217, %v3716
        %3718 = vdwg.mxu0
        %3719 = vmatprep.subr.mxu0 0.0
        %3720 = vmatpush1.msra.mxu0 0.0
        %3721 = vmatprep.subr.mxu0 0.0
        %3722 = vmatpush1.msra.mxu0 0.0
        %3723 = vmatprep.subr.mxu0 0.0
        %3724 = vmatpush1.msra.mxu0 0.0
        %3725 = vmatprep.subr.mxu0 0.0
        %3726 = vmatpush1.msra.mxu0 0.0
        %3727 = vmatprep.subr.mxu0 0.0
        %3728 = vmatpush1.msra.mxu0 0.0
        %3729 = vmatprep.subr.mxu0 0.0
        %3730 = vmatpush1.msra.mxu0 0.0
        %3731 = vmatprep.subr.mxu0 0.0
        %3732 = vmatpush1.msra.mxu0 0.0
        %3733 = vmatprep.subr.mxu0 0.0
        %3734 = vmatpush1.msra.mxu0 0.0
        %3735 = vmatprep.subr.mxu0 0.0
        %3736 = vmatpush1.msra.mxu0 0.0
        %3737 = vmatprep.subr.mxu0 0.0
        %3738 = vmatpush1.msra.mxu0 0.0
        %3739 = vmatprep.subr.mxu0 0.0
        %3740 = vmatpush1.msra.mxu0 0.0
        %3741 = vmatprep.subr.mxu0 0.0
        %3742 = vmatpush1.msra.mxu0 0.0
        %3743 = vmatprep.subr.mxu0 %v3209
        %3744 = vmatpush1.msra.mxu0 %v3208
        %3745 = vmatprep.subr.mxu0 %v3193
        %3746 = vmatpush1.msra.mxu0 %v3192
        %3747 = vmatprep.subr.mxu0 %v3177
        %3748 = vmatpush1.msra.mxu0 %v3176
        %3749 = vmatprep.subr.mxu0 %v3161
        %3750 = vmatpush1.msra.mxu0 %v3160
        %3751 = vmatprep.subr.mxu0 0.0
        %3752 = vmatpush2.msra.mxu0 0.0
        %3753 = vmatprep.subr.mxu0 0.0
        %3754 = vmatpush2.msra.mxu0 0.0
        %3755 = vmatprep.subr.mxu0 0.0
        %3756 = vmatpush2.msra.mxu0 0.0
        %3757 = vmatprep.subr.mxu0 0.0
        %3758 = vmatpush2.msra.mxu0 0.0
        %3759 = vmatprep.subr.mxu0 0.0
        %3760 = vmatpush2.msra.mxu0 0.0
        %3761 = vmatprep.subr.mxu0 0.0
        %3762 = vmatpush2.msra.mxu0 0.0
        %3763 = vmatprep.subr.mxu0 0.0
        %3764 = vmatpush2.msra.mxu0 0.0
        %3765 = vmatprep.subr.mxu0 0.0
        %3766 = vmatpush2.msra.mxu0 0.0
        %3767 = vmatprep.subr.mxu0 0.0
        %3768 = vmatpush2.msra.mxu0 0.0
        %3769 = vmatprep.subr.mxu0 0.0
        %3770 = vmatpush2.msra.mxu0 0.0
        %3771 = vmatprep.subr.mxu0 0.0
        %3772 = vmatpush2.msra.mxu0 0.0
        %3773 = vmatprep.subr.mxu0 0.0
        %3774 = vmatpush2.msra.mxu0 0.0
        %3775 = vmatprep.subr.mxu0 0.0
        %3776 = vmatpush2.msra.mxu0 0.0
        %3777 = vmatprep.subr.mxu0 0.0
        %3778 = vmatpush2.msra.mxu0 0.0
        %3779 = vmatprep.subr.mxu0 0.0
        %3780 = vmatpush2.msra.mxu0 0.0
        %3781 = vmatprep.subr.mxu0 0.0
        %3782 = vmatpush2.msra.mxu0 0.0
        %3783 = vmatprep.mubr.f32.mxu0 0.0
        %3784 = vmatmul.mubr.f32.gmra.mxu0 %v3220
        %v3785 = vpop.f32.mrf.mxu0
        %v3786 = vadd.f32 %v3217, %v3785
        %v3787 = vpop.f32.mrf.mxu0
        %v3788 = vadd.f32 %v3217, %v3787
        %3789 = vdwg.mxu0
        %v3798 = vadd.f32 %v3289, %v187
        %v3799 = vadd.f32 %v3291, %v231
        %v3800 = vadd.f32 %v3360, %v188
        %v3801 = vadd.f32 %v3362, %v232
        %v3802 = vadd.f32 %v3431, %v189
        %v3803 = vadd.f32 %v3433, %v233
        %v3804 = vadd.f32 %v3502, %v190
        %v3805 = vadd.f32 %v3504, %v234
        %v3806 = vadd.f32 %v3573, %v191
        %v3807 = vadd.f32 %v3575, %v235
        %v3808 = vadd.f32 %v3644, %v192
        %v3809 = vadd.f32 %v3646, %v236
        %v3810 = vadd.f32 %v3715, %v193
        %v3811 = vadd.f32 %v3717, %v237
        %v3812 = vadd.f32 %v3786, %v194
        %v3813 = vadd.f32 %v3788, %v238
        %v3830 = vcombine.low %v3798, %v3799
        %v3831 = vcombine.low %v3800, %v3801
        %v3832 = vcombine.low %v3802, %v3803
        %v3833 = vcombine.low %v3804, %v3805
        %v3834 = vcombine.low %v3806, %v3807
        %v3835 = vcombine.low %v3808, %v3809
        %v3836 = vcombine.low %v3810, %v3811
        %v3837 = vcombine.low %v3812, %v3813
        %3846 = vst [vmem:[%s179] sm:$0x77] %v3830
        %3847 = vst [vmem:[%s179 + $0x8] sm:$0x77] %v3831
        %3848 = vst [vmem:[%s179 + $0x10] sm:$0x77] %v3832
        %3849 = vst [vmem:[%s179 + $0x18] sm:$0x77] %v3833
        %3850 = vst [vmem:[%s179 + $0x20] sm:$0x77] %v3834
        %3851 = vst [vmem:[%s179 + $0x28] sm:$0x77] %v3835
        %3852 = vst [vmem:[%s179 + $0x30] sm:$0x77] %v3836
        %3853 = vst [vmem:[%s179 + $0x38] sm:$0x77] %v3837
        %s3854 = sand.u32 %s94, 1
        %s3855 = scalar_lea.sflag [#allocation4], %s3854
        %s3856 = sand.u32 %s94, 1
        %s3857 = smul.addr %s3856, 64
        %s3858 = scalar_lea.vmem [#allocation5], %s3857
        // Predicated region
        $region37: #{tpu_custom_call.1} parent=31 // pred_check
          %p3859 = pneg %p104
        $region38: #{tpu_custom_call.1} parent=31 // pred_check_branch
          %3861 = sbr.rel (%p3859) target = $region40
        $region39: #{tpu_custom_call.1} parent=31 // pred_region
          %s3862 = smul.u32 16, %s18
          %s3864 = ssub.s32 1024, 1024
          %3865 = vsyncadd %s3855, %s3864
          %s3866 = smul.addr %s3862, 64
          %s3867 = scalar_lea.hbm %s3, %s3866
          %s3869 = sshll.u32 %s3858, 4
          %s3870 = int_to_ptr.vmem [resolvable:$true] %s3869
          %3872 = dma.vmem_to_hbm [thread:$0]  %s3870, 1024, %s3867, %s3855
        $region40: #{tpu_custom_call.1} parent=31 // pred_fallthru
          _
      $region32: #{tpu_custom_call.1} parent=5 // pred_fallthru
        _
      %p3873 = scmp.le.s32.totalorder 2, %s13
      // Predicated region
      $region41: #{tpu_custom_call.1} parent=5 // pred_check
        %p3874 = pneg %p3873
      $region42: #{tpu_custom_call.1} parent=5 // pred_check_branch
        %3876 = sbr.rel (%p3874) target = $region44
      $region43: #{tpu_custom_call.1} parent=5 // pred_region
        %s3877 = ssub.s32 %s13, 2
        // Predicated region
        $region45: #{tpu_custom_call.1} parent=43 // pred_check
          %p3878 = pneg %p110
        $region46: #{tpu_custom_call.1} parent=43 // pred_check_branch
          %3880 = sbr.rel (%p3878) target = $region48
        $region47: #{tpu_custom_call.1} parent=43 // pred_region
          %s3881 = sand.u32 %s95, 1
          %s3882 = scalar_lea.sflag [#allocation4], %s3881
          %s3883 = sand.u32 %s95, 1
          %s3884 = smul.addr %s3883, 64
          %s3885 = scalar_lea.vmem [#allocation5], %s3884
          %3886 = dma.done %s3882, 1024
        $region48: #{tpu_custom_call.1} parent=43 // pred_fallthru
          _
      $region44: #{tpu_custom_call.1} parent=5 // pred_fallthru
        _
    $region6: #{tpu_custom_call.1} parent=1 // loop_footer
      %s17 = sadd.s32 1, %s13
    $region7: #{tpu_custom_call.1} parent=1 // loop_footer_branch
      %12 = sbr.rel target = $region3
    $region8: #{tpu_custom_call.1} parent=1 // loop_exit
      _
    %3887 = vsyncpa [#allocation3], 1
    %s3888 = scalar_lea.sflag [#allocation3], 1
    %3889 = vsyncpa %s3888, 1
    %3890 = vsyncpa [#allocation4], 1
    %s3891 = scalar_lea.sflag [#allocation4], 1
    %3892 = vsyncpa %s3891, 1

</llo_original>
